<compile_context>
chip_gen: v7x
topology: tpu7x:2x2x1
jax: 0.10.0
libtpu: 0.0.40
codegen_flags: <defaults>
</compile_context>

<pallas_src>
import numpy as np
import jax
import jax.numpy as jnp
from jax import lax
from jax.experimental import pallas as pl
from jax.experimental.pallas import tpu as pltpu

_EPS = 1e-5          # BatchNorm eps
_NEG_SLOPE = 0.01    # LeakyReLU slope
_GATES = ("update", "reset", "rs")


def _round_up(x, m):
    return ((x + m - 1) // m) * m


# --------------------------------------------------------------------------- #
# Fused single-timestep kernel factory                                         #
# --------------------------------------------------------------------------- #
def _make_fused_step_kernel(*, B, C, H, W, VP, n_taps=27):
    HW = H * W
    deltas = [(kd - 1) * HW + (kh - 1) * W + (kw - 1)
              for kd in range(3) for kh in range(3) for kw in range(3)]
    assert len(deltas) == n_taps

    def _shift(x, delta):
        # out[:, v] = x[:, v + delta] (zeros shifted in at either end); delta is static.
        if delta == 0:
            return x
        rows = x.shape[0]
        pad = jnp.zeros((rows, abs(delta)), dtype=x.dtype)
        if delta > 0:
            return jnp.concatenate([x[:, delta:], pad], axis=1)
        return jnp.concatenate([pad, x[:, :VP + delta]], axis=1)

    def _sigmoid(t):
        # exp on the EUP + approximate EUP reciprocal keeps the VALU slots free.
        return pl.reciprocal(1.0 + jnp.exp(-t), approx=True)

    def kernel(time_ref, x_ref, w7_ref, b7_ref, wfc_ref, s1_ref, cst_ref,
               wur_ref, ws_ref, h_ref, mask_ref, gru_ref, gate_ref, pre_sc):
        del time_ref  # per-timestep tables were already row-selected by the index_maps

        # fc7 = Linear(x); rect7 = LeakyReLU(fc7); fused 3-gate matmul + folded-BN affine.
        fc7 = jnp.dot(x_ref[...], w7_ref[...],
                      preferred_element_type=jnp.float32) + b7_ref[...]
        rect7 = jnp.where(fc7 >= 0.0, fc7, _NEG_SLOPE * fc7)
        pre = jnp.dot(rect7.astype(jnp.bfloat16), wfc_ref[...],
                      preferred_element_type=jnp.float32)
        pre = pre * s1_ref[...] + cst_ref[...]      # (B, 3*C*VP); padding lanes stay 0.

        # Relayout (B, 3*C*VP) -> channel-major (B, 3*C, VP) through VMEM scratch.
        # Every slice / store is a full, 128-aligned lane row.
        for b in range(B):
            for gc in range(3 * C):
                pre_sc[b, gc:gc + 1, :] = pre[b:b + 1, gc * VP:(gc + 1) * VP]

        w_ur = wur_ref[...]                                   # (2*C, 27*C) f32, s2 folded
        w_s = ws_ref[...]                                     # (C,   27*C) f32, s2 folded
        m = [mask_ref[t:t + 1, :] for t in range(n_taps)]     # (1, VP) validity masks

        def _patches(src):                                    # (C, VP) -> (27*C, VP)
            return jnp.concatenate(
                [m[t] * _shift(src, deltas[t]) for t in range(n_taps)], axis=0)

        for b in range(B):
            hb = h_ref[b]                                     # (C, VP), zero-padded lanes
            conv_ur = jnp.dot(w_ur, _patches(hb),
                              preferred_element_type=jnp.float32)        # (2*C, VP)
            pre_b = pre_sc[b]                                 # (3*C, VP)
            u_g = _sigmoid(pre_b[0:C, :] + conv_ur[0:C, :])
            r_g = _sigmoid(pre_b[C:2 * C, :] + conv_ur[C:2 * C, :])
            rs_b = r_g * hb
            conv_s = jnp.dot(w_s, _patches(rs_b),
                             preferred_element_type=jnp.float32)         # (C, VP)
            tanh_s = jnp.tanh(pre_b[2 * C:3 * C, :] + conv_s)
            gru_ref[b] = u_g * hb + (1.0 - u_g) * tanh_s
            gate_ref[b] = u_g

    return kernel


# --------------------------------------------------------------------------- #
# Parameter init (PyTorch-equivalent raw params, eval-mode BN running stats)   #
# --------------------------------------------------------------------------- #
def init_params(key, input_channels, n_fc_filters, h_shape, conv3d_filter_shape, n_steps=4):
    P = int(input_channels * 5 * 5)
    F = n_fc_filters[0]
    _, C, D, H, W = h_shape
    Cout, Cin, KD, KH, KW = conv3d_filter_shape
    V = D * H * W

    keys = list(jax.random.split(key, 64))
    it = iter(keys)

    def rnd(shape, scale=0.05):
        return scale * jax.random.normal(next(it), shape, dtype=jnp.float32)

    params = {"w_fc7": rnd((P, F)), "b_fc7": rnd((F,))}
    for g in _GATES:
        params[g] = {
            "w_fc": rnd((F, C * V)),                        # Linear(..., bias=False)
            "w_conv": rnd((Cout, Cin, KD, KH, KW)),         # Conv3d(..., bias=False)
            "bn1_gamma": 1.0 + rnd((n_steps, C), 0.1),      # per-timestep BN (fc branch)
            "bn1_beta": rnd((n_steps, C), 0.1),
            "bn1_mean": rnd((n_steps, C), 0.2),
            "bn1_var": 1.0 + jnp.abs(rnd((n_steps, C), 0.3)),
            "bn2_gamma": 1.0 + rnd((n_steps, C), 0.1),      # per-timestep BN (conv branch)
            "bn2_beta": rnd((n_steps, C), 0.1),
            "bn2_mean": rnd((n_steps, C), 0.2),
            "bn2_var": 1.0 + jnp.abs(rnd((n_steps, C), 0.3)),
            "bias": jnp.full((C,), 0.1, dtype=jnp.float32),
        }
    return params


# --------------------------------------------------------------------------- #
# One-time prepare: pad / concat / bf16-cast weights, fold eval-mode BN        #
# --------------------------------------------------------------------------- #
def prepare_params(params, h_shape):
    _, C, D, H, W = h_shape
    V = D * H * W
    VP = _round_up(V, 128)
    P, F = params["w_fc7"].shape
    PP = _round_up(P, 128)
    CV = params["update"]["w_fc"].shape[1]
    assert CV == C * V
    n_steps = params["update"]["bn1_gamma"].shape[0]

    # fc7 weight: zero-pad K up to 128 multiple, cast to bf16.
    w7p = jnp.zeros((PP, F), jnp.float32).at[:P, :].set(params["w_fc7"]).astype(jnp.bfloat16)
    b7 = params["b_fc7"][None, :].astype(jnp.float32)

    # Fused 3-gate fc weight, voxel axis padded per channel to a 128-lane boundary.
    wfc = jnp.stack([params[g]["w_fc"].reshape(F, C, V) for g in _GATES], axis=1)  # (F,3,C,V)
    wfc = jnp.pad(wfc, ((0, 0), (0, 0), (0, 0), (0, VP - V)))
    wfc = wfc.reshape(F, 3 * C * VP).astype(jnp.bfloat16)

    def _fold_bn(gp):
        s1 = gp["bn1_gamma"] / jnp.sqrt(gp["bn1_var"] + _EPS)       # (n_steps, C)
        s2 = gp["bn2_gamma"] / jnp.sqrt(gp["bn2_var"] + _EPS)
        cst = (gp["bn1_beta"] - gp["bn1_mean"] * s1
               + gp["bn2_beta"] - gp["bn2_mean"] * s2
               + gp["bias"][None, :])
        return s1, s2, cst

    folds = [_fold_bn(params[g]) for g in _GATES]
    s1_t = jnp.stack([f[0] for f in folds], axis=1)                 # (n_steps, 3, C)
    cst_t = jnp.stack([f[2] for f in folds], axis=1)
    s1_all = jnp.broadcast_to(s1_t[..., None], (n_steps, 3, C, VP)
                              ).reshape(n_steps, 1, 3 * C * VP).astype(jnp.float32)
    cst_all = jnp.pad(jnp.broadcast_to(cst_t[..., None], (n_steps, 3, C, V)),
                      ((0, 0), (0, 0), (0, 0), (0, VP - V))
                      ).reshape(n_steps, 1, 3 * C * VP).astype(jnp.float32)

    # Conv weights -> (Cout, 27*Cin), tap-major / Cin-minor to match in-kernel patch rows;
    # per-timestep conv-branch BN scale s2 folded in.
    def _conv2mat(w):
        Cout, Cin, KD, KH, KW = w.shape
        assert (KD, KH, KW) == (3, 3, 3), "kernel assumes 3x3x3 'same' conv"
        return jnp.transpose(w, (0, 2, 3, 4, 1)).reshape(Cout, KD * KH * KW * Cin)

    wu = _conv2mat(params["update"]["w_conv"])
    wr = _conv2mat(params["reset"]["w_conv"])
    ws = _conv2mat(params["rs"]["w_conv"])
    s2_u, s2_r, s2_s = (f[1] for f in folds)
    wur_all = jnp.concatenate([s2_u[:, :, None] * wu[None], s2_r[:, :, None] * wr[None]],
                              axis=1).astype(jnp.float32)            # (n_steps, 2C, 27*C)
    ws_all = (s2_s[:, :, None] * ws[None]).astype(jnp.float32)        # (n_steps, C, 27*C)

    # Per-tap validity masks on the padded voxel axis (zero in padding lanes).
    masks_np = np.zeros((27, VP), np.float32)
    v = np.arange(V)
    dd, hh, ww = v // (H * W), (v // W) % H, v % W
    t = 0
    for kd in range(3):
        for kh in range(3):
            for kw in range(3):
                ok = ((dd + kd - 1 >= 0) & (dd + kd - 1 < D) &
                      (hh + kh - 1 >= 0) & (hh + kh - 1 < H) &
                      (ww + kw - 1 >= 0) & (ww + kw - 1 < W))
                masks_np[t, :V] = ok.astype(np.float32)
                t += 1

    return {"w7": w7p, "b7": b7, "wfc": wfc, "s1": s1_all, "cst": cst_all,
            "wur": wur_all, "ws": ws_all, "masks": jnp.asarray(masks_np)}


def _conv3d_same(x, w):
    return lax.conv_general_dilated(
        x, w, window_strides=(1, 1, 1),
        padding=[(1, 1), (1, 1), (1, 1)],
        dimension_numbers=("NCDHW", "OIDHW", "NCDHW"))


# --------------------------------------------------------------------------- #
# Forward (jit-able): one fused Pallas call per timestep                       #
# --------------------------------------------------------------------------- #
def recurrent_layer_forward(prep, x, h, u, time):
    """One GRU timestep; returns (gru_out, update_gate), both shaped like h (NCDHW)."""
    del u  # `u` is an argument of the reference forward() but unused by it
    B = x.shape[0]
    _, C, D, Hs, Ws = h.shape
    V = D * Hs * Ws

    w7, b7, wfc = prep["w7"], prep["b7"], prep["wfc"]
    s1_all, cst_all = prep["s1"], prep["cst"]
    wur_all, ws_all, masks = prep["wur"], prep["ws"], prep["masks"]

    PP, F = w7.shape
    NT, VP = masks.shape
    CVP3 = s1_all.shape[-1]

    x2 = x.reshape(B, -1).astype(jnp.float32)
    x2p = jnp.pad(x2, ((0, 0), (0, PP - x2.shape[1]))).astype(jnp.bfloat16)
    h_cm = jnp.pad(h.astype(jnp.float32).reshape(B, C, V),
                   ((0, 0), (0, 0), (0, VP - V)))
    time_arr = jnp.reshape(jnp.asarray(time, dtype=jnp.int32), (1,))

    kernel = _make_fused_step_kernel(B=B, C=C, H=Hs, W=Ws, VP=VP, n_taps=NT)

    grid_spec = pltpu.PrefetchScalarGridSpec(
        num_scalar_prefetch=1,
        grid=(1,),
        in_specs=[
            pl.BlockSpec((B, PP), lambda i, t: (0, 0)),                          # x (bf16, padded)
            pl.BlockSpec((PP, F), lambda i, t: (0, 0)),                          # fc7 weight
            pl.BlockSpec((1, F), lambda i, t: (0, 0)),                           # fc7 bias
            pl.BlockSpec((F, CVP3), lambda i, t: (0, 0)),                        # fused gate fc weight
            pl.BlockSpec((None, 1, CVP3), lambda i, t: (t[0], 0, 0)),            # s1[time]
            pl.BlockSpec((None, 1, CVP3), lambda i, t: (t[0], 0, 0)),            # cst[time]
            pl.BlockSpec((None,) + wur_all.shape[1:], lambda i, t: (t[0], 0, 0)),  # conv W (u,r)[time]
            pl.BlockSpec((None,) + ws_all.shape[1:], lambda i, t: (t[0], 0, 0)),   # conv W (rs)[time]
            pl.BlockSpec((B, C, VP), lambda i, t: (0, 0, 0)),                    # h (channel-major)
            pl.BlockSpec((NT, VP), lambda i, t: (0, 0)),                         # tap masks
        ],
        out_specs=(
            pl.BlockSpec((B, C, VP), lambda i, t: (0, 0, 0)),
            pl.BlockSpec((B, C, VP), lambda i, t: (0, 0, 0)),
        ),
        scratch_shapes=[pltpu.VMEM((B, 3 * C, VP), jnp.float32)],
    )

    gru_cm, gate_cm = pl.pallas_call(
        kernel,
        out_shape=(jax.ShapeDtypeStruct((B, C, VP), jnp.float32),
                   jax.ShapeDtypeStruct((B, C, VP), jnp.float32)),
        grid_spec=grid_spec,
        compiler_params=pltpu.CompilerParams(
            dimension_semantics=("arbitrary",),
            vmem_limit_bytes=32 * 1024 * 1024),
    )(time_arr, x2p, w7, b7, wfc, s1_all, cst_all, wur_all, ws_all, h_cm, masks)

    gru = gru_cm[:, :, :V].reshape(h.shape)
    gate = gate_cm[:, :, :V].reshape(h.shape)
    return gru, gate


# --------------------------------------------------------------------------- #
# Pure-JAX f32 reference (un-folded BN with running stats, real conv3d)        #
# --------------------------------------------------------------------------- #
def reference_forward(params, x, h, u, time):
    del u
    B = x.shape[0]
    _, C, D, Hs, Ws = h.shape

    fc7 = x.reshape(B, -1) @ params["w_fc7"] + params["b_fc7"]
    rect7 = jnp.where(fc7 >= 0.0, fc7, _NEG_SLOPE * fc7)

    def bn(y, gamma, beta, mean, var):
        s = gamma / jnp.sqrt(var + _EPS)
        sh = beta - mean * s
        return y * s[None, :, None, None, None] + sh[None, :, None, None, None]

    def gate(gp, conv_in):
        fc = (rect7 @ gp["w_fc"]).reshape(B, C, D, Hs, Ws)
        conv = _conv3d_same(conv_in, gp["w_conv"])
        return (bn(fc, gp["bn1_gamma"][time], gp["bn1_beta"][time],
                   gp["bn1_mean"][time], gp["bn1_var"][time])
                + bn(conv, gp["bn2_gamma"][time], gp["bn2_beta"][time],
                     gp["bn2_mean"][time], gp["bn2_var"][time])
                + gp["bias"][None, :, None, None, None])

    t_u = gate(params["update"], h)
    t_r = gate(params["reset"], h)
    ug = jax.nn.sigmoid(t_u)
    rg = jax.nn.sigmoid(t_r)
    rs = rg * h
    t_rs = gate(params["rs"], rs)
    gru = ug * h + (1.0 - ug) * jnp.tanh(t_rs)
    return gru, ug


if __name__ == "__main__":
    key = jax.random.PRNGKey(0)
    B, input_channels = 2, 4
    n_fc_filters = [32]
    h_shape = (B, 8, 4, 4, 4)                  # (batch, C, D, H, W) hidden voxel grid
    conv3d_filter_shape = (8, 8, 3, 3, 3)      # (Cout, Cin, kD, kH, kW)

    kp, kx, kh, ku = jax.random.split(key, 4)
    params = init_params(kp, input_channels, n_fc_filters, h_shape, conv3d_filter_shape)
    prep = prepare_params(params, h_shape)     # one-time fold / pad / concat / bf16 cast

    x = jax.random.normal(kx, (B, input_channels, 5, 5), dtype=jnp.float32)
    h = jax.random.normal(kh, h_shape, dtype=jnp.float32)
    u = jax.random.normal(ku, h_shape, dtype=jnp.float32)   # unused by forward()
    time = 1

    fwd = jax.jit(recurrent_layer_forward)
    gru_out, update_gate = fwd(prep, x, h, u, time)
    gru_out = jax.block_until_ready(gru_out)
    update_gate = jax.block_until_ready(update_gate)

    ref_gru, ref_gate = reference_forward(params, x, h, u, time)
    # tolerance covers bf16 weight quantization + the approximate EUP reciprocal in the sigmoid
    np.testing.assert_allclose(np.asarray(gru_out), np.asarray(ref_gru), rtol=2e-2, atol=2e-2)
    np.testing.assert_allclose(np.asarray(update_gate), np.asarray(ref_gate), rtol=2e-2, atol=2e-2)

    print("KERNEL_OK")
</pallas_src>

<mosaic_0001>
module attributes {stable_mosaic.version = 11 : i64} {
  func.func @kernel(%arg0: i32, %arg1: memref<1xi32, #tpu.memory_space<smem>>, %arg2: memref<2x128xbf16, #tpu.memory_space<vmem>>, %arg3: memref<128x32xbf16, #tpu.memory_space<vmem>>, %arg4: memref<1x32xf32, #tpu.memory_space<vmem>>, %arg5: memref<32x3072xbf16, #tpu.memory_space<vmem>>, %arg6: memref<1x1x3072xf32, #tpu.memory_space<vmem>>, %arg7: memref<1x1x3072xf32, #tpu.memory_space<vmem>>, %arg8: memref<1x16x216xf32, #tpu.memory_space<vmem>>, %arg9: memref<1x8x216xf32, #tpu.memory_space<vmem>>, %arg10: memref<2x8x128xf32, #tpu.memory_space<vmem>>, %arg11: memref<27x128xf32, #tpu.memory_space<vmem>>, %arg12: memref<2x8x128xf32, #tpu.memory_space<vmem>>, %arg13: memref<2x8x128xf32, #tpu.memory_space<vmem>>, %arg14: memref<2x24x128xf32, #tpu.memory_space<vmem>>) attributes {dimension_semantics = [#tpu.dimension_semantics<arbitrary>], iteration_bounds = array<i64: 1>, scalar_prefetch = 1 : i64, scratch_operands = 1 : i64, tpu.core_type = #tpu.core_type<tc>, window_params = [{pipeline_mode = #tpu.pipeline_mode<synchronous>, transform_indices = @transform_0, window_bounds = array<i64: 2, 128>}, {pipeline_mode = #tpu.pipeline_mode<synchronous>, transform_indices = @transform_1, window_bounds = array<i64: 128, 32>}, {pipeline_mode = #tpu.pipeline_mode<synchronous>, transform_indices = @transform_2, window_bounds = array<i64: 1, 32>}, {pipeline_mode = #tpu.pipeline_mode<synchronous>, transform_indices = @transform_3, window_bounds = array<i64: 32, 3072>}, {transform_indices = @transform_4, window_bounds = array<i64: 1, 1, 3072>}, {transform_indices = @transform_5, window_bounds = array<i64: 1, 1, 3072>}, {transform_indices = @transform_6, window_bounds = array<i64: 1, 16, 216>}, {transform_indices = @transform_7, window_bounds = array<i64: 1, 8, 216>}, {pipeline_mode = #tpu.pipeline_mode<synchronous>, transform_indices = @transform_8, window_bounds = array<i64: 2, 8, 128>}, {pipeline_mode = #tpu.pipeline_mode<synchronous>, transform_indices = @transform_9, window_bounds = array<i64: 27, 128>}, {pipeline_mode = #tpu.pipeline_mode<synchronous>, transform_indices = @transform_10, window_bounds = array<i64: 2, 8, 128>}, {pipeline_mode = #tpu.pipeline_mode<synchronous>, transform_indices = @transform_11, window_bounds = array<i64: 2, 8, 128>}]} {
    %c0 = arith.constant 0 : index
    %c0_0 = arith.constant 0 : index
    %0 = vector.load %arg2[%c0, %c0_0] : memref<2x128xbf16, #tpu.memory_space<vmem>>, vector<2x128xbf16>
    %c0_1 = arith.constant 0 : index
    %c0_2 = arith.constant 0 : index
    %1 = vector.load %arg3[%c0_1, %c0_2] : memref<128x32xbf16, #tpu.memory_space<vmem>>, vector<128x32xbf16>
    %cst = arith.constant dense<0.000000e+00> : vector<2x32xf32>
    %2 = tpu.matmul %0, %1, %cst {dimension_numbers = #tpu.dot_dimension_numbers<[1], [0], [0], [1], [0, 0, 1, 1], [], []>} : vector<2x128xbf16>, vector<128x32xbf16>, vector<2x32xf32> -> vector<2x32xf32>
    %c0_3 = arith.constant 0 : index
    %c0_4 = arith.constant 0 : index
    %3 = vector.load %arg4[%c0_3, %c0_4] : memref<1x32xf32, #tpu.memory_space<vmem>>, vector<1x32xf32>
    %4 = vector.broadcast %3 : vector<1x32xf32> to vector<2x32xf32>
    %5 = arith.addf %2, %4 : vector<2x32xf32>
    %cst_5 = arith.constant 0.000000e+00 : f32
    %6 = vector.broadcast %cst_5 : f32 to vector<2x32xf32>
    %7 = arith.cmpf oge, %5, %6 : vector<2x32xf32>
    %cst_6 = arith.constant 0.00999999977 : f32
    %8 = vector.broadcast %cst_6 : f32 to vector<2x32xf32>
    %9 = arith.mulf %8, %5 : vector<2x32xf32>
    %10 = arith.select %7, %5, %9 : vector<2x32xi1>, vector<2x32xf32>
    %11 = arith.truncf %10 : vector<2x32xf32> to vector<2x32xbf16>
    %c0_7 = arith.constant 0 : index
    %c0_8 = arith.constant 0 : index
    %12 = vector.load %arg5[%c0_7, %c0_8] : memref<32x3072xbf16, #tpu.memory_space<vmem>>, vector<32x3072xbf16>
    %cst_9 = arith.constant dense<0.000000e+00> : vector<2x3072xf32>
    %13 = tpu.matmul %11, %12, %cst_9 {dimension_numbers = #tpu.dot_dimension_numbers<[1], [0], [0], [1], [0, 0, 1, 1], [], []>} : vector<2x32xbf16>, vector<32x3072xbf16>, vector<2x3072xf32> -> vector<2x3072xf32>
    %c0_10 = arith.constant 0 : index
    %c0_11 = arith.constant 0 : index
    %c0_12 = arith.constant 0 : index
    %14 = vector.load %arg6[%c0_10, %c0_11, %c0_12] : memref<1x1x3072xf32, #tpu.memory_space<vmem>>, vector<1x1x3072xf32>
    %15 = vector.shape_cast %14 : vector<1x1x3072xf32> to vector<1x3072xf32>
    %16 = vector.broadcast %15 : vector<1x3072xf32> to vector<2x3072xf32>
    %17 = arith.mulf %13, %16 : vector<2x3072xf32>
    %c0_13 = arith.constant 0 : index
    %c0_14 = arith.constant 0 : index
    %c0_15 = arith.constant 0 : index
    %18 = vector.load %arg7[%c0_13, %c0_14, %c0_15] : memref<1x1x3072xf32, #tpu.memory_space<vmem>>, vector<1x1x3072xf32>
    %19 = vector.shape_cast %18 : vector<1x1x3072xf32> to vector<1x3072xf32>
    %20 = vector.broadcast %19 : vector<1x3072xf32> to vector<2x3072xf32>
    %21 = arith.addf %17, %20 : vector<2x3072xf32>
    %22 = vector.extract_strided_slice %21 {offsets = [0, 0], sizes = [1, 128], strides = [1, 1]} : vector<2x3072xf32> to vector<1x128xf32>
    %c0_16 = arith.constant 0 : index
    %c0_17 = arith.constant 0 : index
    %c0_18 = arith.constant 0 : index
    %23 = vector.load %arg14[%c0_16, %c0_17, %c0_18] : memref<2x24x128xf32, #tpu.memory_space<vmem>>, vector<1x1x128xf32>
    %24 = vector.shape_cast %23 : vector<1x1x128xf32> to vector<1x128xf32>
    %25 = vector.shape_cast %22 : vector<1x128xf32> to vector<1x1x128xf32>
    tpu.vector_store %arg14[%c0_16, %c0_17, %c0_18], %25 {strides = array<i32>} : memref<2x24x128xf32, #tpu.memory_space<vmem>>, vector<1x1x128xf32>,
    %26 = vector.extract_strided_slice %21 {offsets = [0, 128], sizes = [1, 128], strides = [1, 1]} : vector<2x3072xf32> to vector<1x128xf32>
    %c0_19 = arith.constant 0 : index
    %c1 = arith.constant 1 : index
    %c0_20 = arith.constant 0 : index
    %27 = vector.load %arg14[%c0_19, %c1, %c0_20] : memref<2x24x128xf32, #tpu.memory_space<vmem>>, vector<1x1x128xf32>
    %28 = vector.shape_cast %27 : vector<1x1x128xf32> to vector<1x128xf32>
    %29 = vector.shape_cast %26 : vector<1x128xf32> to vector<1x1x128xf32>
    tpu.vector_store %arg14[%c0_19, %c1, %c0_20], %29 {strides = array<i32>} : memref<2x24x128xf32, #tpu.memory_space<vmem>>, vector<1x1x128xf32>,
    %30 = vector.extract_strided_slice %21 {offsets = [0, 256], sizes = [1, 128], strides = [1, 1]} : vector<2x3072xf32> to vector<1x128xf32>
    %c0_21 = arith.constant 0 : index
    %c2 = arith.constant 2 : index
    %c0_22 = arith.constant 0 : index
    %31 = vector.load %arg14[%c0_21, %c2, %c0_22] : memref<2x24x128xf32, #tpu.memory_space<vmem>>, vector<1x1x128xf32>
    %32 = vector.shape_cast %31 : vector<1x1x128xf32> to vector<1x128xf32>
    %33 = vector.shape_cast %30 : vector<1x128xf32> to vector<1x1x128xf32>
    tpu.vector_store %arg14[%c0_21, %c2, %c0_22], %33 {strides = array<i32>} : memref<2x24x128xf32, #tpu.memory_space<vmem>>, vector<1x1x128xf32>,
    %34 = vector.extract_strided_slice %21 {offsets = [0, 384], sizes = [1, 128], strides = [1, 1]} : vector<2x3072xf32> to vector<1x128xf32>
    %c0_23 = arith.constant 0 : index
    %c3 = arith.constant 3 : index
    %c0_24 = arith.constant 0 : index
    %35 = vector.load %arg14[%c0_23, %c3, %c0_24] : memref<2x24x128xf32, #tpu.memory_space<vmem>>, vector<1x1x128xf32>
    %36 = vector.shape_cast %35 : vector<1x1x128xf32> to vector<1x128xf32>
    %37 = vector.shape_cast %34 : vector<1x128xf32> to vector<1x1x128xf32>
    tpu.vector_store %arg14[%c0_23, %c3, %c0_24], %37 {strides = array<i32>} : memref<2x24x128xf32, #tpu.memory_space<vmem>>, vector<1x1x128xf32>,
    %38 = vector.extract_strided_slice %21 {offsets = [0, 512], sizes = [1, 128], strides = [1, 1]} : vector<2x3072xf32> to vector<1x128xf32>
    %c0_25 = arith.constant 0 : index
    %c4 = arith.constant 4 : index
    %c0_26 = arith.constant 0 : index
    %39 = vector.load %arg14[%c0_25, %c4, %c0_26] : memref<2x24x128xf32, #tpu.memory_space<vmem>>, vector<1x1x128xf32>
    %40 = vector.shape_cast %39 : vector<1x1x128xf32> to vector<1x128xf32>
    %41 = vector.shape_cast %38 : vector<1x128xf32> to vector<1x1x128xf32>
    tpu.vector_store %arg14[%c0_25, %c4, %c0_26], %41 {strides = array<i32>} : memref<2x24x128xf32, #tpu.memory_space<vmem>>, vector<1x1x128xf32>,
    %42 = vector.extract_strided_slice %21 {offsets = [0, 640], sizes = [1, 128], strides = [1, 1]} : vector<2x3072xf32> to vector<1x128xf32>
    %c0_27 = arith.constant 0 : index
    %c5 = arith.constant 5 : index
    %c0_28 = arith.constant 0 : index
    %43 = vector.load %arg14[%c0_27, %c5, %c0_28] : memref<2x24x128xf32, #tpu.memory_space<vmem>>, vector<1x1x128xf32>
    %44 = vector.shape_cast %43 : vector<1x1x128xf32> to vector<1x128xf32>
    %45 = vector.shape_cast %42 : vector<1x128xf32> to vector<1x1x128xf32>
    tpu.vector_store %arg14[%c0_27, %c5, %c0_28], %45 {strides = array<i32>} : memref<2x24x128xf32, #tpu.memory_space<vmem>>, vector<1x1x128xf32>,
    %46 = vector.extract_strided_slice %21 {offsets = [0, 768], sizes = [1, 128], strides = [1, 1]} : vector<2x3072xf32> to vector<1x128xf32>
    %c0_29 = arith.constant 0 : index
    %c6 = arith.constant 6 : index
    %c0_30 = arith.constant 0 : index
    %47 = vector.load %arg14[%c0_29, %c6, %c0_30] : memref<2x24x128xf32, #tpu.memory_space<vmem>>, vector<1x1x128xf32>
    %48 = vector.shape_cast %47 : vector<1x1x128xf32> to vector<1x128xf32>
    %49 = vector.shape_cast %46 : vector<1x128xf32> to vector<1x1x128xf32>
    tpu.vector_store %arg14[%c0_29, %c6, %c0_30], %49 {strides = array<i32>} : memref<2x24x128xf32, #tpu.memory_space<vmem>>, vector<1x1x128xf32>,
    %50 = vector.extract_strided_slice %21 {offsets = [0, 896], sizes = [1, 128], strides = [1, 1]} : vector<2x3072xf32> to vector<1x128xf32>
    %c0_31 = arith.constant 0 : index
    %c7 = arith.constant 7 : index
    %c0_32 = arith.constant 0 : index
    %51 = vector.load %arg14[%c0_31, %c7, %c0_32] : memref<2x24x128xf32, #tpu.memory_space<vmem>>, vector<1x1x128xf32>
    %52 = vector.shape_cast %51 : vector<1x1x128xf32> to vector<1x128xf32>
    %53 = vector.shape_cast %50 : vector<1x128xf32> to vector<1x1x128xf32>
    tpu.vector_store %arg14[%c0_31, %c7, %c0_32], %53 {strides = array<i32>} : memref<2x24x128xf32, #tpu.memory_space<vmem>>, vector<1x1x128xf32>,
    %54 = vector.extract_strided_slice %21 {offsets = [0, 1024], sizes = [1, 128], strides = [1, 1]} : vector<2x3072xf32> to vector<1x128xf32>
    %c0_33 = arith.constant 0 : index
    %c8 = arith.constant 8 : index
    %c0_34 = arith.constant 0 : index
    %55 = vector.load %arg14[%c0_33, %c8, %c0_34] : memref<2x24x128xf32, #tpu.memory_space<vmem>>, vector<1x1x128xf32>
    %56 = vector.shape_cast %55 : vector<1x1x128xf32> to vector<1x128xf32>
    %57 = vector.shape_cast %54 : vector<1x128xf32> to vector<1x1x128xf32>
    tpu.vector_store %arg14[%c0_33, %c8, %c0_34], %57 {strides = array<i32>} : memref<2x24x128xf32, #tpu.memory_space<vmem>>, vector<1x1x128xf32>,
    %58 = vector.extract_strided_slice %21 {offsets = [0, 1152], sizes = [1, 128], strides = [1, 1]} : vector<2x3072xf32> to vector<1x128xf32>
    %c0_35 = arith.constant 0 : index
    %c9 = arith.constant 9 : index
    %c0_36 = arith.constant 0 : index
    %59 = vector.load %arg14[%c0_35, %c9, %c0_36] : memref<2x24x128xf32, #tpu.memory_space<vmem>>, vector<1x1x128xf32>
    %60 = vector.shape_cast %59 : vector<1x1x128xf32> to vector<1x128xf32>
    %61 = vector.shape_cast %58 : vector<1x128xf32> to vector<1x1x128xf32>
    tpu.vector_store %arg14[%c0_35, %c9, %c0_36], %61 {strides = array<i32>} : memref<2x24x128xf32, #tpu.memory_space<vmem>>, vector<1x1x128xf32>,
    %62 = vector.extract_strided_slice %21 {offsets = [0, 1280], sizes = [1, 128], strides = [1, 1]} : vector<2x3072xf32> to vector<1x128xf32>
    %c0_37 = arith.constant 0 : index
    %c10 = arith.constant 10 : index
    %c0_38 = arith.constant 0 : index
    %63 = vector.load %arg14[%c0_37, %c10, %c0_38] : memref<2x24x128xf32, #tpu.memory_space<vmem>>, vector<1x1x128xf32>
    %64 = vector.shape_cast %63 : vector<1x1x128xf32> to vector<1x128xf32>
    %65 = vector.shape_cast %62 : vector<1x128xf32> to vector<1x1x128xf32>
    tpu.vector_store %arg14[%c0_37, %c10, %c0_38], %65 {strides = array<i32>} : memref<2x24x128xf32, #tpu.memory_space<vmem>>, vector<1x1x128xf32>,
    %66 = vector.extract_strided_slice %21 {offsets = [0, 1408], sizes = [1, 128], strides = [1, 1]} : vector<2x3072xf32> to vector<1x128xf32>
    %c0_39 = arith.constant 0 : index
    %c11 = arith.constant 11 : index
    %c0_40 = arith.constant 0 : index
    %67 = vector.load %arg14[%c0_39, %c11, %c0_40] : memref<2x24x128xf32, #tpu.memory_space<vmem>>, vector<1x1x128xf32>
    %68 = vector.shape_cast %67 : vector<1x1x128xf32> to vector<1x128xf32>
    %69 = vector.shape_cast %66 : vector<1x128xf32> to vector<1x1x128xf32>
    tpu.vector_store %arg14[%c0_39, %c11, %c0_40], %69 {strides = array<i32>} : memref<2x24x128xf32, #tpu.memory_space<vmem>>, vector<1x1x128xf32>,
    %70 = vector.extract_strided_slice %21 {offsets = [0, 1536], sizes = [1, 128], strides = [1, 1]} : vector<2x3072xf32> to vector<1x128xf32>
    %c0_41 = arith.constant 0 : index
    %c12 = arith.constant 12 : index
    %c0_42 = arith.constant 0 : index
    %71 = vector.load %arg14[%c0_41, %c12, %c0_42] : memref<2x24x128xf32, #tpu.memory_space<vmem>>, vector<1x1x128xf32>
    %72 = vector.shape_cast %71 : vector<1x1x128xf32> to vector<1x128xf32>
    %73 = vector.shape_cast %70 : vector<1x128xf32> to vector<1x1x128xf32>
    tpu.vector_store %arg14[%c0_41, %c12, %c0_42], %73 {strides = array<i32>} : memref<2x24x128xf32, #tpu.memory_space<vmem>>, vector<1x1x128xf32>,
    %74 = vector.extract_strided_slice %21 {offsets = [0, 1664], sizes = [1, 128], strides = [1, 1]} : vector<2x3072xf32> to vector<1x128xf32>
    %c0_43 = arith.constant 0 : index
    %c13 = arith.constant 13 : index
    %c0_44 = arith.constant 0 : index
    %75 = vector.load %arg14[%c0_43, %c13, %c0_44] : memref<2x24x128xf32, #tpu.memory_space<vmem>>, vector<1x1x128xf32>
    %76 = vector.shape_cast %75 : vector<1x1x128xf32> to vector<1x128xf32>
    %77 = vector.shape_cast %74 : vector<1x128xf32> to vector<1x1x128xf32>
    tpu.vector_store %arg14[%c0_43, %c13, %c0_44], %77 {strides = array<i32>} : memref<2x24x128xf32, #tpu.memory_space<vmem>>, vector<1x1x128xf32>,
    %78 = vector.extract_strided_slice %21 {offsets = [0, 1792], sizes = [1, 128], strides = [1, 1]} : vector<2x3072xf32> to vector<1x128xf32>
    %c0_45 = arith.constant 0 : index
    %c14 = arith.constant 14 : index
    %c0_46 = arith.constant 0 : index
    %79 = vector.load %arg14[%c0_45, %c14, %c0_46] : memref<2x24x128xf32, #tpu.memory_space<vmem>>, vector<1x1x128xf32>
    %80 = vector.shape_cast %79 : vector<1x1x128xf32> to vector<1x128xf32>
    %81 = vector.shape_cast %78 : vector<1x128xf32> to vector<1x1x128xf32>
    tpu.vector_store %arg14[%c0_45, %c14, %c0_46], %81 {strides = array<i32>} : memref<2x24x128xf32, #tpu.memory_space<vmem>>, vector<1x1x128xf32>,
    %82 = vector.extract_strided_slice %21 {offsets = [0, 1920], sizes = [1, 128], strides = [1, 1]} : vector<2x3072xf32> to vector<1x128xf32>
    %c0_47 = arith.constant 0 : index
    %c15 = arith.constant 15 : index
    %c0_48 = arith.constant 0 : index
    %83 = vector.load %arg14[%c0_47, %c15, %c0_48] : memref<2x24x128xf32, #tpu.memory_space<vmem>>, vector<1x1x128xf32>
    %84 = vector.shape_cast %83 : vector<1x1x128xf32> to vector<1x128xf32>
    %85 = vector.shape_cast %82 : vector<1x128xf32> to vector<1x1x128xf32>
    tpu.vector_store %arg14[%c0_47, %c15, %c0_48], %85 {strides = array<i32>} : memref<2x24x128xf32, #tpu.memory_space<vmem>>, vector<1x1x128xf32>,
    %86 = vector.extract_strided_slice %21 {offsets = [0, 2048], sizes = [1, 128], strides = [1, 1]} : vector<2x3072xf32> to vector<1x128xf32>
    %c0_49 = arith.constant 0 : index
    %c16 = arith.constant 16 : index
    %c0_50 = arith.constant 0 : index
    %87 = vector.load %arg14[%c0_49, %c16, %c0_50] : memref<2x24x128xf32, #tpu.memory_space<vmem>>, vector<1x1x128xf32>
    %88 = vector.shape_cast %87 : vector<1x1x128xf32> to vector<1x128xf32>
    %89 = vector.shape_cast %86 : vector<1x128xf32> to vector<1x1x128xf32>
    tpu.vector_store %arg14[%c0_49, %c16, %c0_50], %89 {strides = array<i32>} : memref<2x24x128xf32, #tpu.memory_space<vmem>>, vector<1x1x128xf32>,
    %90 = vector.extract_strided_slice %21 {offsets = [0, 2176], sizes = [1, 128], strides = [1, 1]} : vector<2x3072xf32> to vector<1x128xf32>
    %c0_51 = arith.constant 0 : index
    %c17 = arith.constant 17 : index
    %c0_52 = arith.constant 0 : index
    %91 = vector.load %arg14[%c0_51, %c17, %c0_52] : memref<2x24x128xf32, #tpu.memory_space<vmem>>, vector<1x1x128xf32>
    %92 = vector.shape_cast %91 : vector<1x1x128xf32> to vector<1x128xf32>
    %93 = vector.shape_cast %90 : vector<1x128xf32> to vector<1x1x128xf32>
    tpu.vector_store %arg14[%c0_51, %c17, %c0_52], %93 {strides = array<i32>} : memref<2x24x128xf32, #tpu.memory_space<vmem>>, vector<1x1x128xf32>,
    %94 = vector.extract_strided_slice %21 {offsets = [0, 2304], sizes = [1, 128], strides = [1, 1]} : vector<2x3072xf32> to vector<1x128xf32>
    %c0_53 = arith.constant 0 : index
    %c18 = arith.constant 18 : index
    %c0_54 = arith.constant 0 : index
    %95 = vector.load %arg14[%c0_53, %c18, %c0_54] : memref<2x24x128xf32, #tpu.memory_space<vmem>>, vector<1x1x128xf32>
    %96 = vector.shape_cast %95 : vector<1x1x128xf32> to vector<1x128xf32>
    %97 = vector.shape_cast %94 : vector<1x128xf32> to vector<1x1x128xf32>
    tpu.vector_store %arg14[%c0_53, %c18, %c0_54], %97 {strides = array<i32>} : memref<2x24x128xf32, #tpu.memory_space<vmem>>, vector<1x1x128xf32>,
    %98 = vector.extract_strided_slice %21 {offsets = [0, 2432], sizes = [1, 128], strides = [1, 1]} : vector<2x3072xf32> to vector<1x128xf32>
    %c0_55 = arith.constant 0 : index
    %c19 = arith.constant 19 : index
    %c0_56 = arith.constant 0 : index
    %99 = vector.load %arg14[%c0_55, %c19, %c0_56] : memref<2x24x128xf32, #tpu.memory_space<vmem>>, vector<1x1x128xf32>
    %100 = vector.shape_cast %99 : vector<1x1x128xf32> to vector<1x128xf32>
    %101 = vector.shape_cast %98 : vector<1x128xf32> to vector<1x1x128xf32>
    tpu.vector_store %arg14[%c0_55, %c19, %c0_56], %101 {strides = array<i32>} : memref<2x24x128xf32, #tpu.memory_space<vmem>>, vector<1x1x128xf32>,
    %102 = vector.extract_strided_slice %21 {offsets = [0, 2560], sizes = [1, 128], strides = [1, 1]} : vector<2x3072xf32> to vector<1x128xf32>
    %c0_57 = arith.constant 0 : index
    %c20 = arith.constant 20 : index
    %c0_58 = arith.constant 0 : index
    %103 = vector.load %arg14[%c0_57, %c20, %c0_58] : memref<2x24x128xf32, #tpu.memory_space<vmem>>, vector<1x1x128xf32>
    %104 = vector.shape_cast %103 : vector<1x1x128xf32> to vector<1x128xf32>
    %105 = vector.shape_cast %102 : vector<1x128xf32> to vector<1x1x128xf32>
    tpu.vector_store %arg14[%c0_57, %c20, %c0_58], %105 {strides = array<i32>} : memref<2x24x128xf32, #tpu.memory_space<vmem>>, vector<1x1x128xf32>,
    %106 = vector.extract_strided_slice %21 {offsets = [0, 2688], sizes = [1, 128], strides = [1, 1]} : vector<2x3072xf32> to vector<1x128xf32>
    %c0_59 = arith.constant 0 : index
    %c21 = arith.constant 21 : index
    %c0_60 = arith.constant 0 : index
    %107 = vector.load %arg14[%c0_59, %c21, %c0_60] : memref<2x24x128xf32, #tpu.memory_space<vmem>>, vector<1x1x128xf32>
    %108 = vector.shape_cast %107 : vector<1x1x128xf32> to vector<1x128xf32>
    %109 = vector.shape_cast %106 : vector<1x128xf32> to vector<1x1x128xf32>
    tpu.vector_store %arg14[%c0_59, %c21, %c0_60], %109 {strides = array<i32>} : memref<2x24x128xf32, #tpu.memory_space<vmem>>, vector<1x1x128xf32>,
    %110 = vector.extract_strided_slice %21 {offsets = [0, 2816], sizes = [1, 128], strides = [1, 1]} : vector<2x3072xf32> to vector<1x128xf32>
    %c0_61 = arith.constant 0 : index
    %c22 = arith.constant 22 : index
    %c0_62 = arith.constant 0 : index
    %111 = vector.load %arg14[%c0_61, %c22, %c0_62] : memref<2x24x128xf32, #tpu.memory_space<vmem>>, vector<1x1x128xf32>
    %112 = vector.shape_cast %111 : vector<1x1x128xf32> to vector<1x128xf32>
    %113 = vector.shape_cast %110 : vector<1x128xf32> to vector<1x1x128xf32>
    tpu.vector_store %arg14[%c0_61, %c22, %c0_62], %113 {strides = array<i32>} : memref<2x24x128xf32, #tpu.memory_space<vmem>>, vector<1x1x128xf32>,
    %114 = vector.extract_strided_slice %21 {offsets = [0, 2944], sizes = [1, 128], strides = [1, 1]} : vector<2x3072xf32> to vector<1x128xf32>
    %c0_63 = arith.constant 0 : index
    %c23 = arith.constant 23 : index
    %c0_64 = arith.constant 0 : index
    %115 = vector.load %arg14[%c0_63, %c23, %c0_64] : memref<2x24x128xf32, #tpu.memory_space<vmem>>, vector<1x1x128xf32>
    %116 = vector.shape_cast %115 : vector<1x1x128xf32> to vector<1x128xf32>
    %117 = vector.shape_cast %114 : vector<1x128xf32> to vector<1x1x128xf32>
    tpu.vector_store %arg14[%c0_63, %c23, %c0_64], %117 {strides = array<i32>} : memref<2x24x128xf32, #tpu.memory_space<vmem>>, vector<1x1x128xf32>,
    %118 = vector.extract_strided_slice %21 {offsets = [1, 0], sizes = [1, 128], strides = [1, 1]} : vector<2x3072xf32> to vector<1x128xf32>
    %c1_65 = arith.constant 1 : index
    %c0_66 = arith.constant 0 : index
    %c0_67 = arith.constant 0 : index
    %119 = vector.load %arg14[%c1_65, %c0_66, %c0_67] : memref<2x24x128xf32, #tpu.memory_space<vmem>>, vector<1x1x128xf32>
    %120 = vector.shape_cast %119 : vector<1x1x128xf32> to vector<1x128xf32>
    %121 = vector.shape_cast %118 : vector<1x128xf32> to vector<1x1x128xf32>
    tpu.vector_store %arg14[%c1_65, %c0_66, %c0_67], %121 {strides = array<i32>} : memref<2x24x128xf32, #tpu.memory_space<vmem>>, vector<1x1x128xf32>,
    %122 = vector.extract_strided_slice %21 {offsets = [1, 128], sizes = [1, 128], strides = [1, 1]} : vector<2x3072xf32> to vector<1x128xf32>
    %c1_68 = arith.constant 1 : index
    %c1_69 = arith.constant 1 : index
    %c0_70 = arith.constant 0 : index
    %123 = vector.load %arg14[%c1_68, %c1_69, %c0_70] : memref<2x24x128xf32, #tpu.memory_space<vmem>>, vector<1x1x128xf32>
    %124 = vector.shape_cast %123 : vector<1x1x128xf32> to vector<1x128xf32>
    %125 = vector.shape_cast %122 : vector<1x128xf32> to vector<1x1x128xf32>
    tpu.vector_store %arg14[%c1_68, %c1_69, %c0_70], %125 {strides = array<i32>} : memref<2x24x128xf32, #tpu.memory_space<vmem>>, vector<1x1x128xf32>,
    %126 = vector.extract_strided_slice %21 {offsets = [1, 256], sizes = [1, 128], strides = [1, 1]} : vector<2x3072xf32> to vector<1x128xf32>
    %c1_71 = arith.constant 1 : index
    %c2_72 = arith.constant 2 : index
    %c0_73 = arith.constant 0 : index
    %127 = vector.load %arg14[%c1_71, %c2_72, %c0_73] : memref<2x24x128xf32, #tpu.memory_space<vmem>>, vector<1x1x128xf32>
    %128 = vector.shape_cast %127 : vector<1x1x128xf32> to vector<1x128xf32>
    %129 = vector.shape_cast %126 : vector<1x128xf32> to vector<1x1x128xf32>
    tpu.vector_store %arg14[%c1_71, %c2_72, %c0_73], %129 {strides = array<i32>} : memref<2x24x128xf32, #tpu.memory_space<vmem>>, vector<1x1x128xf32>,
    %130 = vector.extract_strided_slice %21 {offsets = [1, 384], sizes = [1, 128], strides = [1, 1]} : vector<2x3072xf32> to vector<1x128xf32>
    %c1_74 = arith.constant 1 : index
    %c3_75 = arith.constant 3 : index
    %c0_76 = arith.constant 0 : index
    %131 = vector.load %arg14[%c1_74, %c3_75, %c0_76] : memref<2x24x128xf32, #tpu.memory_space<vmem>>, vector<1x1x128xf32>
    %132 = vector.shape_cast %131 : vector<1x1x128xf32> to vector<1x128xf32>
    %133 = vector.shape_cast %130 : vector<1x128xf32> to vector<1x1x128xf32>
    tpu.vector_store %arg14[%c1_74, %c3_75, %c0_76], %133 {strides = array<i32>} : memref<2x24x128xf32, #tpu.memory_space<vmem>>, vector<1x1x128xf32>,
    %134 = vector.extract_strided_slice %21 {offsets = [1, 512], sizes = [1, 128], strides = [1, 1]} : vector<2x3072xf32> to vector<1x128xf32>
    %c1_77 = arith.constant 1 : index
    %c4_78 = arith.constant 4 : index
    %c0_79 = arith.constant 0 : index
    %135 = vector.load %arg14[%c1_77, %c4_78, %c0_79] : memref<2x24x128xf32, #tpu.memory_space<vmem>>, vector<1x1x128xf32>
    %136 = vector.shape_cast %135 : vector<1x1x128xf32> to vector<1x128xf32>
    %137 = vector.shape_cast %134 : vector<1x128xf32> to vector<1x1x128xf32>
    tpu.vector_store %arg14[%c1_77, %c4_78, %c0_79], %137 {strides = array<i32>} : memref<2x24x128xf32, #tpu.memory_space<vmem>>, vector<1x1x128xf32>,
    %138 = vector.extract_strided_slice %21 {offsets = [1, 640], sizes = [1, 128], strides = [1, 1]} : vector<2x3072xf32> to vector<1x128xf32>
    %c1_80 = arith.constant 1 : index
    %c5_81 = arith.constant 5 : index
    %c0_82 = arith.constant 0 : index
    %139 = vector.load %arg14[%c1_80, %c5_81, %c0_82] : memref<2x24x128xf32, #tpu.memory_space<vmem>>, vector<1x1x128xf32>
    %140 = vector.shape_cast %139 : vector<1x1x128xf32> to vector<1x128xf32>
    %141 = vector.shape_cast %138 : vector<1x128xf32> to vector<1x1x128xf32>
    tpu.vector_store %arg14[%c1_80, %c5_81, %c0_82], %141 {strides = array<i32>} : memref<2x24x128xf32, #tpu.memory_space<vmem>>, vector<1x1x128xf32>,
    %142 = vector.extract_strided_slice %21 {offsets = [1, 768], sizes = [1, 128], strides = [1, 1]} : vector<2x3072xf32> to vector<1x128xf32>
    %c1_83 = arith.constant 1 : index
    %c6_84 = arith.constant 6 : index
    %c0_85 = arith.constant 0 : index
    %143 = vector.load %arg14[%c1_83, %c6_84, %c0_85] : memref<2x24x128xf32, #tpu.memory_space<vmem>>, vector<1x1x128xf32>
    %144 = vector.shape_cast %143 : vector<1x1x128xf32> to vector<1x128xf32>
    %145 = vector.shape_cast %142 : vector<1x128xf32> to vector<1x1x128xf32>
    tpu.vector_store %arg14[%c1_83, %c6_84, %c0_85], %145 {strides = array<i32>} : memref<2x24x128xf32, #tpu.memory_space<vmem>>, vector<1x1x128xf32>,
    %146 = vector.extract_strided_slice %21 {offsets = [1, 896], sizes = [1, 128], strides = [1, 1]} : vector<2x3072xf32> to vector<1x128xf32>
    %c1_86 = arith.constant 1 : index
    %c7_87 = arith.constant 7 : index
    %c0_88 = arith.constant 0 : index
    %147 = vector.load %arg14[%c1_86, %c7_87, %c0_88] : memref<2x24x128xf32, #tpu.memory_space<vmem>>, vector<1x1x128xf32>
    %148 = vector.shape_cast %147 : vector<1x1x128xf32> to vector<1x128xf32>
    %149 = vector.shape_cast %146 : vector<1x128xf32> to vector<1x1x128xf32>
    tpu.vector_store %arg14[%c1_86, %c7_87, %c0_88], %149 {strides = array<i32>} : memref<2x24x128xf32, #tpu.memory_space<vmem>>, vector<1x1x128xf32>,
    %150 = vector.extract_strided_slice %21 {offsets = [1, 1024], sizes = [1, 128], strides = [1, 1]} : vector<2x3072xf32> to vector<1x128xf32>
    %c1_89 = arith.constant 1 : index
    %c8_90 = arith.constant 8 : index
    %c0_91 = arith.constant 0 : index
    %151 = vector.load %arg14[%c1_89, %c8_90, %c0_91] : memref<2x24x128xf32, #tpu.memory_space<vmem>>, vector<1x1x128xf32>
    %152 = vector.shape_cast %151 : vector<1x1x128xf32> to vector<1x128xf32>
    %153 = vector.shape_cast %150 : vector<1x128xf32> to vector<1x1x128xf32>
    tpu.vector_store %arg14[%c1_89, %c8_90, %c0_91], %153 {strides = array<i32>} : memref<2x24x128xf32, #tpu.memory_space<vmem>>, vector<1x1x128xf32>,
    %154 = vector.extract_strided_slice %21 {offsets = [1, 1152], sizes = [1, 128], strides = [1, 1]} : vector<2x3072xf32> to vector<1x128xf32>
    %c1_92 = arith.constant 1 : index
    %c9_93 = arith.constant 9 : index
    %c0_94 = arith.constant 0 : index
    %155 = vector.load %arg14[%c1_92, %c9_93, %c0_94] : memref<2x24x128xf32, #tpu.memory_space<vmem>>, vector<1x1x128xf32>
    %156 = vector.shape_cast %155 : vector<1x1x128xf32> to vector<1x128xf32>
    %157 = vector.shape_cast %154 : vector<1x128xf32> to vector<1x1x128xf32>
    tpu.vector_store %arg14[%c1_92, %c9_93, %c0_94], %157 {strides = array<i32>} : memref<2x24x128xf32, #tpu.memory_space<vmem>>, vector<1x1x128xf32>,
    %158 = vector.extract_strided_slice %21 {offsets = [1, 1280], sizes = [1, 128], strides = [1, 1]} : vector<2x3072xf32> to vector<1x128xf32>
    %c1_95 = arith.constant 1 : index
    %c10_96 = arith.constant 10 : index
    %c0_97 = arith.constant 0 : index
    %159 = vector.load %arg14[%c1_95, %c10_96, %c0_97] : memref<2x24x128xf32, #tpu.memory_space<vmem>>, vector<1x1x128xf32>
    %160 = vector.shape_cast %159 : vector<1x1x128xf32> to vector<1x128xf32>
    %161 = vector.shape_cast %158 : vector<1x128xf32> to vector<1x1x128xf32>
    tpu.vector_store %arg14[%c1_95, %c10_96, %c0_97], %161 {strides = array<i32>} : memref<2x24x128xf32, #tpu.memory_space<vmem>>, vector<1x1x128xf32>,
    %162 = vector.extract_strided_slice %21 {offsets = [1, 1408], sizes = [1, 128], strides = [1, 1]} : vector<2x3072xf32> to vector<1x128xf32>
    %c1_98 = arith.constant 1 : index
    %c11_99 = arith.constant 11 : index
    %c0_100 = arith.constant 0 : index
    %163 = vector.load %arg14[%c1_98, %c11_99, %c0_100] : memref<2x24x128xf32, #tpu.memory_space<vmem>>, vector<1x1x128xf32>
    %164 = vector.shape_cast %163 : vector<1x1x128xf32> to vector<1x128xf32>
    %165 = vector.shape_cast %162 : vector<1x128xf32> to vector<1x1x128xf32>
    tpu.vector_store %arg14[%c1_98, %c11_99, %c0_100], %165 {strides = array<i32>} : memref<2x24x128xf32, #tpu.memory_space<vmem>>, vector<1x1x128xf32>,
    %166 = vector.extract_strided_slice %21 {offsets = [1, 1536], sizes = [1, 128], strides = [1, 1]} : vector<2x3072xf32> to vector<1x128xf32>
    %c1_101 = arith.constant 1 : index
    %c12_102 = arith.constant 12 : index
    %c0_103 = arith.constant 0 : index
    %167 = vector.load %arg14[%c1_101, %c12_102, %c0_103] : memref<2x24x128xf32, #tpu.memory_space<vmem>>, vector<1x1x128xf32>
    %168 = vector.shape_cast %167 : vector<1x1x128xf32> to vector<1x128xf32>
    %169 = vector.shape_cast %166 : vector<1x128xf32> to vector<1x1x128xf32>
    tpu.vector_store %arg14[%c1_101, %c12_102, %c0_103], %169 {strides = array<i32>} : memref<2x24x128xf32, #tpu.memory_space<vmem>>, vector<1x1x128xf32>,
    %170 = vector.extract_strided_slice %21 {offsets = [1, 1664], sizes = [1, 128], strides = [1, 1]} : vector<2x3072xf32> to vector<1x128xf32>
    %c1_104 = arith.constant 1 : index
    %c13_105 = arith.constant 13 : index
    %c0_106 = arith.constant 0 : index
    %171 = vector.load %arg14[%c1_104, %c13_105, %c0_106] : memref<2x24x128xf32, #tpu.memory_space<vmem>>, vector<1x1x128xf32>
    %172 = vector.shape_cast %171 : vector<1x1x128xf32> to vector<1x128xf32>
    %173 = vector.shape_cast %170 : vector<1x128xf32> to vector<1x1x128xf32>
    tpu.vector_store %arg14[%c1_104, %c13_105, %c0_106], %173 {strides = array<i32>} : memref<2x24x128xf32, #tpu.memory_space<vmem>>, vector<1x1x128xf32>,
    %174 = vector.extract_strided_slice %21 {offsets = [1, 1792], sizes = [1, 128], strides = [1, 1]} : vector<2x3072xf32> to vector<1x128xf32>
    %c1_107 = arith.constant 1 : index
    %c14_108 = arith.constant 14 : index
    %c0_109 = arith.constant 0 : index
    %175 = vector.load %arg14[%c1_107, %c14_108, %c0_109] : memref<2x24x128xf32, #tpu.memory_space<vmem>>, vector<1x1x128xf32>
    %176 = vector.shape_cast %175 : vector<1x1x128xf32> to vector<1x128xf32>
    %177 = vector.shape_cast %174 : vector<1x128xf32> to vector<1x1x128xf32>
    tpu.vector_store %arg14[%c1_107, %c14_108, %c0_109], %177 {strides = array<i32>} : memref<2x24x128xf32, #tpu.memory_space<vmem>>, vector<1x1x128xf32>,
    %178 = vector.extract_strided_slice %21 {offsets = [1, 1920], sizes = [1, 128], strides = [1, 1]} : vector<2x3072xf32> to vector<1x128xf32>
    %c1_110 = arith.constant 1 : index
    %c15_111 = arith.constant 15 : index
    %c0_112 = arith.constant 0 : index
    %179 = vector.load %arg14[%c1_110, %c15_111, %c0_112] : memref<2x24x128xf32, #tpu.memory_space<vmem>>, vector<1x1x128xf32>
    %180 = vector.shape_cast %179 : vector<1x1x128xf32> to vector<1x128xf32>
    %181 = vector.shape_cast %178 : vector<1x128xf32> to vector<1x1x128xf32>
    tpu.vector_store %arg14[%c1_110, %c15_111, %c0_112], %181 {strides = array<i32>} : memref<2x24x128xf32, #tpu.memory_space<vmem>>, vector<1x1x128xf32>,
    %182 = vector.extract_strided_slice %21 {offsets = [1, 2048], sizes = [1, 128], strides = [1, 1]} : vector<2x3072xf32> to vector<1x128xf32>
    %c1_113 = arith.constant 1 : index
    %c16_114 = arith.constant 16 : index
    %c0_115 = arith.constant 0 : index
    %183 = vector.load %arg14[%c1_113, %c16_114, %c0_115] : memref<2x24x128xf32, #tpu.memory_space<vmem>>, vector<1x1x128xf32>
    %184 = vector.shape_cast %183 : vector<1x1x128xf32> to vector<1x128xf32>
    %185 = vector.shape_cast %182 : vector<1x128xf32> to vector<1x1x128xf32>
    tpu.vector_store %arg14[%c1_113, %c16_114, %c0_115], %185 {strides = array<i32>} : memref<2x24x128xf32, #tpu.memory_space<vmem>>, vector<1x1x128xf32>,
    %186 = vector.extract_strided_slice %21 {offsets = [1, 2176], sizes = [1, 128], strides = [1, 1]} : vector<2x3072xf32> to vector<1x128xf32>
    %c1_116 = arith.constant 1 : index
    %c17_117 = arith.constant 17 : index
    %c0_118 = arith.constant 0 : index
    %187 = vector.load %arg14[%c1_116, %c17_117, %c0_118] : memref<2x24x128xf32, #tpu.memory_space<vmem>>, vector<1x1x128xf32>
    %188 = vector.shape_cast %187 : vector<1x1x128xf32> to vector<1x128xf32>
    %189 = vector.shape_cast %186 : vector<1x128xf32> to vector<1x1x128xf32>
    tpu.vector_store %arg14[%c1_116, %c17_117, %c0_118], %189 {strides = array<i32>} : memref<2x24x128xf32, #tpu.memory_space<vmem>>, vector<1x1x128xf32>,
    %190 = vector.extract_strided_slice %21 {offsets = [1, 2304], sizes = [1, 128], strides = [1, 1]} : vector<2x3072xf32> to vector<1x128xf32>
    %c1_119 = arith.constant 1 : index
    %c18_120 = arith.constant 18 : index
    %c0_121 = arith.constant 0 : index
    %191 = vector.load %arg14[%c1_119, %c18_120, %c0_121] : memref<2x24x128xf32, #tpu.memory_space<vmem>>, vector<1x1x128xf32>
    %192 = vector.shape_cast %191 : vector<1x1x128xf32> to vector<1x128xf32>
    %193 = vector.shape_cast %190 : vector<1x128xf32> to vector<1x1x128xf32>
    tpu.vector_store %arg14[%c1_119, %c18_120, %c0_121], %193 {strides = array<i32>} : memref<2x24x128xf32, #tpu.memory_space<vmem>>, vector<1x1x128xf32>,
    %194 = vector.extract_strided_slice %21 {offsets = [1, 2432], sizes = [1, 128], strides = [1, 1]} : vector<2x3072xf32> to vector<1x128xf32>
    %c1_122 = arith.constant 1 : index
    %c19_123 = arith.constant 19 : index
    %c0_124 = arith.constant 0 : index
    %195 = vector.load %arg14[%c1_122, %c19_123, %c0_124] : memref<2x24x128xf32, #tpu.memory_space<vmem>>, vector<1x1x128xf32>
    %196 = vector.shape_cast %195 : vector<1x1x128xf32> to vector<1x128xf32>
    %197 = vector.shape_cast %194 : vector<1x128xf32> to vector<1x1x128xf32>
    tpu.vector_store %arg14[%c1_122, %c19_123, %c0_124], %197 {strides = array<i32>} : memref<2x24x128xf32, #tpu.memory_space<vmem>>, vector<1x1x128xf32>,
    %198 = vector.extract_strided_slice %21 {offsets = [1, 2560], sizes = [1, 128], strides = [1, 1]} : vector<2x3072xf32> to vector<1x128xf32>
    %c1_125 = arith.constant 1 : index
    %c20_126 = arith.constant 20 : index
    %c0_127 = arith.constant 0 : index
    %199 = vector.load %arg14[%c1_125, %c20_126, %c0_127] : memref<2x24x128xf32, #tpu.memory_space<vmem>>, vector<1x1x128xf32>
    %200 = vector.shape_cast %199 : vector<1x1x128xf32> to vector<1x128xf32>
    %201 = vector.shape_cast %198 : vector<1x128xf32> to vector<1x1x128xf32>
    tpu.vector_store %arg14[%c1_125, %c20_126, %c0_127], %201 {strides = array<i32>} : memref<2x24x128xf32, #tpu.memory_space<vmem>>, vector<1x1x128xf32>,
    %202 = vector.extract_strided_slice %21 {offsets = [1, 2688], sizes = [1, 128], strides = [1, 1]} : vector<2x3072xf32> to vector<1x128xf32>
    %c1_128 = arith.constant 1 : index
    %c21_129 = arith.constant 21 : index
    %c0_130 = arith.constant 0 : index
    %203 = vector.load %arg14[%c1_128, %c21_129, %c0_130] : memref<2x24x128xf32, #tpu.memory_space<vmem>>, vector<1x1x128xf32>
    %204 = vector.shape_cast %203 : vector<1x1x128xf32> to vector<1x128xf32>
    %205 = vector.shape_cast %202 : vector<1x128xf32> to vector<1x1x128xf32>
    tpu.vector_store %arg14[%c1_128, %c21_129, %c0_130], %205 {strides = array<i32>} : memref<2x24x128xf32, #tpu.memory_space<vmem>>, vector<1x1x128xf32>,
    %206 = vector.extract_strided_slice %21 {offsets = [1, 2816], sizes = [1, 128], strides = [1, 1]} : vector<2x3072xf32> to vector<1x128xf32>
    %c1_131 = arith.constant 1 : index
    %c22_132 = arith.constant 22 : index
    %c0_133 = arith.constant 0 : index
    %207 = vector.load %arg14[%c1_131, %c22_132, %c0_133] : memref<2x24x128xf32, #tpu.memory_space<vmem>>, vector<1x1x128xf32>
    %208 = vector.shape_cast %207 : vector<1x1x128xf32> to vector<1x128xf32>
    %209 = vector.shape_cast %206 : vector<1x128xf32> to vector<1x1x128xf32>
    tpu.vector_store %arg14[%c1_131, %c22_132, %c0_133], %209 {strides = array<i32>} : memref<2x24x128xf32, #tpu.memory_space<vmem>>, vector<1x1x128xf32>,
    %210 = vector.extract_strided_slice %21 {offsets = [1, 2944], sizes = [1, 128], strides = [1, 1]} : vector<2x3072xf32> to vector<1x128xf32>
    %c1_134 = arith.constant 1 : index
    %c23_135 = arith.constant 23 : index
    %c0_136 = arith.constant 0 : index
    %211 = vector.load %arg14[%c1_134, %c23_135, %c0_136] : memref<2x24x128xf32, #tpu.memory_space<vmem>>, vector<1x1x128xf32>
    %212 = vector.shape_cast %211 : vector<1x1x128xf32> to vector<1x128xf32>
    %213 = vector.shape_cast %210 : vector<1x128xf32> to vector<1x1x128xf32>
    tpu.vector_store %arg14[%c1_134, %c23_135, %c0_136], %213 {strides = array<i32>} : memref<2x24x128xf32, #tpu.memory_space<vmem>>, vector<1x1x128xf32>,
    %c0_137 = arith.constant 0 : index
    %c0_138 = arith.constant 0 : index
    %c0_139 = arith.constant 0 : index
    %214 = vector.load %arg8[%c0_137, %c0_138, %c0_139] : memref<1x16x216xf32, #tpu.memory_space<vmem>>, vector<1x16x216xf32>
    %215 = vector.shape_cast %214 : vector<1x16x216xf32> to vector<16x216xf32>
    %c0_140 = arith.constant 0 : index
    %c0_141 = arith.constant 0 : index
    %c0_142 = arith.constant 0 : index
    %216 = vector.load %arg9[%c0_140, %c0_141, %c0_142] : memref<1x8x216xf32, #tpu.memory_space<vmem>>, vector<1x8x216xf32>
    %217 = vector.shape_cast %216 : vector<1x8x216xf32> to vector<8x216xf32>
    %c0_143 = arith.constant 0 : index
    %c0_144 = arith.constant 0 : index
    %218 = vector.load %arg11[%c0_143, %c0_144] : memref<27x128xf32, #tpu.memory_space<vmem>>, vector<1x128xf32>
    %c1_145 = arith.constant 1 : index
    %c0_146 = arith.constant 0 : index
    %219 = vector.load %arg11[%c1_145, %c0_146] : memref<27x128xf32, #tpu.memory_space<vmem>>, vector<1x128xf32>
    %c2_147 = arith.constant 2 : index
    %c0_148 = arith.constant 0 : index
    %220 = vector.load %arg11[%c2_147, %c0_148] : memref<27x128xf32, #tpu.memory_space<vmem>>, vector<1x128xf32>
    %c3_149 = arith.constant 3 : index
    %c0_150 = arith.constant 0 : index
    %221 = vector.load %arg11[%c3_149, %c0_150] : memref<27x128xf32, #tpu.memory_space<vmem>>, vector<1x128xf32>
    %c4_151 = arith.constant 4 : index
    %c0_152 = arith.constant 0 : index
    %222 = vector.load %arg11[%c4_151, %c0_152] : memref<27x128xf32, #tpu.memory_space<vmem>>, vector<1x128xf32>
    %c5_153 = arith.constant 5 : index
    %c0_154 = arith.constant 0 : index
    %223 = vector.load %arg11[%c5_153, %c0_154] : memref<27x128xf32, #tpu.memory_space<vmem>>, vector<1x128xf32>
    %c6_155 = arith.constant 6 : index
    %c0_156 = arith.constant 0 : index
    %224 = vector.load %arg11[%c6_155, %c0_156] : memref<27x128xf32, #tpu.memory_space<vmem>>, vector<1x128xf32>
    %c7_157 = arith.constant 7 : index
    %c0_158 = arith.constant 0 : index
    %225 = vector.load %arg11[%c7_157, %c0_158] : memref<27x128xf32, #tpu.memory_space<vmem>>, vector<1x128xf32>
    %c8_159 = arith.constant 8 : index
    %c0_160 = arith.constant 0 : index
    %226 = vector.load %arg11[%c8_159, %c0_160] : memref<27x128xf32, #tpu.memory_space<vmem>>, vector<1x128xf32>
    %c9_161 = arith.constant 9 : index
    %c0_162 = arith.constant 0 : index
    %227 = vector.load %arg11[%c9_161, %c0_162] : memref<27x128xf32, #tpu.memory_space<vmem>>, vector<1x128xf32>
    %c10_163 = arith.constant 10 : index
    %c0_164 = arith.constant 0 : index
    %228 = vector.load %arg11[%c10_163, %c0_164] : memref<27x128xf32, #tpu.memory_space<vmem>>, vector<1x128xf32>
    %c11_165 = arith.constant 11 : index
    %c0_166 = arith.constant 0 : index
    %229 = vector.load %arg11[%c11_165, %c0_166] : memref<27x128xf32, #tpu.memory_space<vmem>>, vector<1x128xf32>
    %c12_167 = arith.constant 12 : index
    %c0_168 = arith.constant 0 : index
    %230 = vector.load %arg11[%c12_167, %c0_168] : memref<27x128xf32, #tpu.memory_space<vmem>>, vector<1x128xf32>
    %c13_169 = arith.constant 13 : index
    %c0_170 = arith.constant 0 : index
    %231 = vector.load %arg11[%c13_169, %c0_170] : memref<27x128xf32, #tpu.memory_space<vmem>>, vector<1x128xf32>
    %c14_171 = arith.constant 14 : index
    %c0_172 = arith.constant 0 : index
    %232 = vector.load %arg11[%c14_171, %c0_172] : memref<27x128xf32, #tpu.memory_space<vmem>>, vector<1x128xf32>
    %c15_173 = arith.constant 15 : index
    %c0_174 = arith.constant 0 : index
    %233 = vector.load %arg11[%c15_173, %c0_174] : memref<27x128xf32, #tpu.memory_space<vmem>>, vector<1x128xf32>
    %c16_175 = arith.constant 16 : index
    %c0_176 = arith.constant 0 : index
    %234 = vector.load %arg11[%c16_175, %c0_176] : memref<27x128xf32, #tpu.memory_space<vmem>>, vector<1x128xf32>
    %c17_177 = arith.constant 17 : index
    %c0_178 = arith.constant 0 : index
    %235 = vector.load %arg11[%c17_177, %c0_178] : memref<27x128xf32, #tpu.memory_space<vmem>>, vector<1x128xf32>
    %c18_179 = arith.constant 18 : index
    %c0_180 = arith.constant 0 : index
    %236 = vector.load %arg11[%c18_179, %c0_180] : memref<27x128xf32, #tpu.memory_space<vmem>>, vector<1x128xf32>
    %c19_181 = arith.constant 19 : index
    %c0_182 = arith.constant 0 : index
    %237 = vector.load %arg11[%c19_181, %c0_182] : memref<27x128xf32, #tpu.memory_space<vmem>>, vector<1x128xf32>
    %c20_183 = arith.constant 20 : index
    %c0_184 = arith.constant 0 : index
    %238 = vector.load %arg11[%c20_183, %c0_184] : memref<27x128xf32, #tpu.memory_space<vmem>>, vector<1x128xf32>
    %c21_185 = arith.constant 21 : index
    %c0_186 = arith.constant 0 : index
    %239 = vector.load %arg11[%c21_185, %c0_186] : memref<27x128xf32, #tpu.memory_space<vmem>>, vector<1x128xf32>
    %c22_187 = arith.constant 22 : index
    %c0_188 = arith.constant 0 : index
    %240 = vector.load %arg11[%c22_187, %c0_188] : memref<27x128xf32, #tpu.memory_space<vmem>>, vector<1x128xf32>
    %c23_189 = arith.constant 23 : index
    %c0_190 = arith.constant 0 : index
    %241 = vector.load %arg11[%c23_189, %c0_190] : memref<27x128xf32, #tpu.memory_space<vmem>>, vector<1x128xf32>
    %c24 = arith.constant 24 : index
    %c0_191 = arith.constant 0 : index
    %242 = vector.load %arg11[%c24, %c0_191] : memref<27x128xf32, #tpu.memory_space<vmem>>, vector<1x128xf32>
    %c25 = arith.constant 25 : index
    %c0_192 = arith.constant 0 : index
    %243 = vector.load %arg11[%c25, %c0_192] : memref<27x128xf32, #tpu.memory_space<vmem>>, vector<1x128xf32>
    %c26 = arith.constant 26 : index
    %c0_193 = arith.constant 0 : index
    %244 = vector.load %arg11[%c26, %c0_193] : memref<27x128xf32, #tpu.memory_space<vmem>>, vector<1x128xf32>
    %c0_194 = arith.constant 0 : index
    %c0_195 = arith.constant 0 : index
    %c0_196 = arith.constant 0 : index
    %245 = vector.load %arg10[%c0_194, %c0_195, %c0_196] : memref<2x8x128xf32, #tpu.memory_space<vmem>>, vector<1x8x128xf32>
    %246 = vector.shape_cast %245 : vector<1x8x128xf32> to vector<8x128xf32>
    %cst_197 = arith.constant 0.000000e+00 : f32
    %247 = vector.broadcast %cst_197 : f32 to vector<8x21xf32>
    %248 = vector.extract_strided_slice %246 {offsets = [0, 0], sizes = [8, 107], strides = [1, 1]} : vector<8x128xf32> to vector<8x107xf32>
    %249 = tpu.concatenate %247, %248 in 1 : vector<8x21xf32>, vector<8x107xf32> -> vector<8x128xf32>
    %250 = vector.broadcast %218 : vector<1x128xf32> to vector<8x128xf32>
    %251 = arith.mulf %250, %249 : vector<8x128xf32>
    %cst_198 = arith.constant 0.000000e+00 : f32
    %252 = vector.broadcast %cst_198 : f32 to vector<8x20xf32>
    %253 = vector.extract_strided_slice %246 {offsets = [0, 0], sizes = [8, 108], strides = [1, 1]} : vector<8x128xf32> to vector<8x108xf32>
    %254 = tpu.concatenate %252, %253 in 1 : vector<8x20xf32>, vector<8x108xf32> -> vector<8x128xf32>
    %255 = vector.broadcast %219 : vector<1x128xf32> to vector<8x128xf32>
    %256 = arith.mulf %255, %254 : vector<8x128xf32>
    %cst_199 = arith.constant 0.000000e+00 : f32
    %257 = vector.broadcast %cst_199 : f32 to vector<8x19xf32>
    %258 = vector.extract_strided_slice %246 {offsets = [0, 0], sizes = [8, 109], strides = [1, 1]} : vector<8x128xf32> to vector<8x109xf32>
    %259 = tpu.concatenate %257, %258 in 1 : vector<8x19xf32>, vector<8x109xf32> -> vector<8x128xf32>
    %260 = vector.broadcast %220 : vector<1x128xf32> to vector<8x128xf32>
    %261 = arith.mulf %260, %259 : vector<8x128xf32>
    %cst_200 = arith.constant 0.000000e+00 : f32
    %262 = vector.broadcast %cst_200 : f32 to vector<8x17xf32>
    %263 = vector.extract_strided_slice %246 {offsets = [0, 0], sizes = [8, 111], strides = [1, 1]} : vector<8x128xf32> to vector<8x111xf32>
    %264 = tpu.concatenate %262, %263 in 1 : vector<8x17xf32>, vector<8x111xf32> -> vector<8x128xf32>
    %265 = vector.broadcast %221 : vector<1x128xf32> to vector<8x128xf32>
    %266 = arith.mulf %265, %264 : vector<8x128xf32>
    %cst_201 = arith.constant 0.000000e+00 : f32
    %267 = vector.broadcast %cst_201 : f32 to vector<8x16xf32>
    %268 = vector.extract_strided_slice %246 {offsets = [0, 0], sizes = [8, 112], strides = [1, 1]} : vector<8x128xf32> to vector<8x112xf32>
    %269 = tpu.concatenate %267, %268 in 1 : vector<8x16xf32>, vector<8x112xf32> -> vector<8x128xf32>
    %270 = vector.broadcast %222 : vector<1x128xf32> to vector<8x128xf32>
    %271 = arith.mulf %270, %269 : vector<8x128xf32>
    %cst_202 = arith.constant 0.000000e+00 : f32
    %272 = vector.broadcast %cst_202 : f32 to vector<8x15xf32>
    %273 = vector.extract_strided_slice %246 {offsets = [0, 0], sizes = [8, 113], strides = [1, 1]} : vector<8x128xf32> to vector<8x113xf32>
    %274 = tpu.concatenate %272, %273 in 1 : vector<8x15xf32>, vector<8x113xf32> -> vector<8x128xf32>
    %275 = vector.broadcast %223 : vector<1x128xf32> to vector<8x128xf32>
    %276 = arith.mulf %275, %274 : vector<8x128xf32>
    %cst_203 = arith.constant 0.000000e+00 : f32
    %277 = vector.broadcast %cst_203 : f32 to vector<8x13xf32>
    %278 = vector.extract_strided_slice %246 {offsets = [0, 0], sizes = [8, 115], strides = [1, 1]} : vector<8x128xf32> to vector<8x115xf32>
    %279 = tpu.concatenate %277, %278 in 1 : vector<8x13xf32>, vector<8x115xf32> -> vector<8x128xf32>
    %280 = vector.broadcast %224 : vector<1x128xf32> to vector<8x128xf32>
    %281 = arith.mulf %280, %279 : vector<8x128xf32>
    %cst_204 = arith.constant 0.000000e+00 : f32
    %282 = vector.broadcast %cst_204 : f32 to vector<8x12xf32>
    %283 = vector.extract_strided_slice %246 {offsets = [0, 0], sizes = [8, 116], strides = [1, 1]} : vector<8x128xf32> to vector<8x116xf32>
    %284 = tpu.concatenate %282, %283 in 1 : vector<8x12xf32>, vector<8x116xf32> -> vector<8x128xf32>
    %285 = vector.broadcast %225 : vector<1x128xf32> to vector<8x128xf32>
    %286 = arith.mulf %285, %284 : vector<8x128xf32>
    %cst_205 = arith.constant 0.000000e+00 : f32
    %287 = vector.broadcast %cst_205 : f32 to vector<8x11xf32>
    %288 = vector.extract_strided_slice %246 {offsets = [0, 0], sizes = [8, 117], strides = [1, 1]} : vector<8x128xf32> to vector<8x117xf32>
    %289 = tpu.concatenate %287, %288 in 1 : vector<8x11xf32>, vector<8x117xf32> -> vector<8x128xf32>
    %290 = vector.broadcast %226 : vector<1x128xf32> to vector<8x128xf32>
    %291 = arith.mulf %290, %289 : vector<8x128xf32>
    %cst_206 = arith.constant 0.000000e+00 : f32
    %292 = vector.broadcast %cst_206 : f32 to vector<8x5xf32>
    %293 = vector.extract_strided_slice %246 {offsets = [0, 0], sizes = [8, 123], strides = [1, 1]} : vector<8x128xf32> to vector<8x123xf32>
    %294 = tpu.concatenate %292, %293 in 1 : vector<8x5xf32>, vector<8x123xf32> -> vector<8x128xf32>
    %295 = vector.broadcast %227 : vector<1x128xf32> to vector<8x128xf32>
    %296 = arith.mulf %295, %294 : vector<8x128xf32>
    %cst_207 = arith.constant 0.000000e+00 : f32
    %297 = vector.broadcast %cst_207 : f32 to vector<8x4xf32>
    %298 = vector.extract_strided_slice %246 {offsets = [0, 0], sizes = [8, 124], strides = [1, 1]} : vector<8x128xf32> to vector<8x124xf32>
    %299 = tpu.concatenate %297, %298 in 1 : vector<8x4xf32>, vector<8x124xf32> -> vector<8x128xf32>
    %300 = vector.broadcast %228 : vector<1x128xf32> to vector<8x128xf32>
    %301 = arith.mulf %300, %299 : vector<8x128xf32>
    %cst_208 = arith.constant 0.000000e+00 : f32
    %302 = vector.broadcast %cst_208 : f32 to vector<8x3xf32>
    %303 = vector.extract_strided_slice %246 {offsets = [0, 0], sizes = [8, 125], strides = [1, 1]} : vector<8x128xf32> to vector<8x125xf32>
    %304 = tpu.concatenate %302, %303 in 1 : vector<8x3xf32>, vector<8x125xf32> -> vector<8x128xf32>
    %305 = vector.broadcast %229 : vector<1x128xf32> to vector<8x128xf32>
    %306 = arith.mulf %305, %304 : vector<8x128xf32>
    %cst_209 = arith.constant 0.000000e+00 : f32
    %307 = vector.broadcast %cst_209 : f32 to vector<8x1xf32>
    %308 = vector.extract_strided_slice %246 {offsets = [0, 0], sizes = [8, 127], strides = [1, 1]} : vector<8x128xf32> to vector<8x127xf32>
    %309 = tpu.concatenate %307, %308 in 1 : vector<8x1xf32>, vector<8x127xf32> -> vector<8x128xf32>
    %310 = vector.broadcast %230 : vector<1x128xf32> to vector<8x128xf32>
    %311 = arith.mulf %310, %309 : vector<8x128xf32>
    %312 = vector.broadcast %231 : vector<1x128xf32> to vector<8x128xf32>
    %313 = arith.mulf %312, %246 : vector<8x128xf32>
    %cst_210 = arith.constant 0.000000e+00 : f32
    %314 = vector.broadcast %cst_210 : f32 to vector<8x1xf32>
    %315 = vector.extract_strided_slice %246 {offsets = [0, 1], sizes = [8, 127], strides = [1, 1]} : vector<8x128xf32> to vector<8x127xf32>
    %316 = tpu.concatenate %315, %314 in 1 : vector<8x127xf32>, vector<8x1xf32> -> vector<8x128xf32>
    %317 = vector.broadcast %232 : vector<1x128xf32> to vector<8x128xf32>
    %318 = arith.mulf %317, %316 : vector<8x128xf32>
    %cst_211 = arith.constant 0.000000e+00 : f32
    %319 = vector.broadcast %cst_211 : f32 to vector<8x3xf32>
    %320 = vector.extract_strided_slice %246 {offsets = [0, 3], sizes = [8, 125], strides = [1, 1]} : vector<8x128xf32> to vector<8x125xf32>
    %321 = tpu.concatenate %320, %319 in 1 : vector<8x125xf32>, vector<8x3xf32> -> vector<8x128xf32>
    %322 = vector.broadcast %233 : vector<1x128xf32> to vector<8x128xf32>
    %323 = arith.mulf %322, %321 : vector<8x128xf32>
    %cst_212 = arith.constant 0.000000e+00 : f32
    %324 = vector.broadcast %cst_212 : f32 to vector<8x4xf32>
    %325 = vector.extract_strided_slice %246 {offsets = [0, 4], sizes = [8, 124], strides = [1, 1]} : vector<8x128xf32> to vector<8x124xf32>
    %326 = tpu.concatenate %325, %324 in 1 : vector<8x124xf32>, vector<8x4xf32> -> vector<8x128xf32>
    %327 = vector.broadcast %234 : vector<1x128xf32> to vector<8x128xf32>
    %328 = arith.mulf %327, %326 : vector<8x128xf32>
    %cst_213 = arith.constant 0.000000e+00 : f32
    %329 = vector.broadcast %cst_213 : f32 to vector<8x5xf32>
    %330 = vector.extract_strided_slice %246 {offsets = [0, 5], sizes = [8, 123], strides = [1, 1]} : vector<8x128xf32> to vector<8x123xf32>
    %331 = tpu.concatenate %330, %329 in 1 : vector<8x123xf32>, vector<8x5xf32> -> vector<8x128xf32>
    %332 = vector.broadcast %235 : vector<1x128xf32> to vector<8x128xf32>
    %333 = arith.mulf %332, %331 : vector<8x128xf32>
    %cst_214 = arith.constant 0.000000e+00 : f32
    %334 = vector.broadcast %cst_214 : f32 to vector<8x11xf32>
    %335 = vector.extract_strided_slice %246 {offsets = [0, 11], sizes = [8, 117], strides = [1, 1]} : vector<8x128xf32> to vector<8x117xf32>
    %336 = tpu.concatenate %335, %334 in 1 : vector<8x117xf32>, vector<8x11xf32> -> vector<8x128xf32>
    %337 = vector.broadcast %236 : vector<1x128xf32> to vector<8x128xf32>
    %338 = arith.mulf %337, %336 : vector<8x128xf32>
    %cst_215 = arith.constant 0.000000e+00 : f32
    %339 = vector.broadcast %cst_215 : f32 to vector<8x12xf32>
    %340 = vector.extract_strided_slice %246 {offsets = [0, 12], sizes = [8, 116], strides = [1, 1]} : vector<8x128xf32> to vector<8x116xf32>
    %341 = tpu.concatenate %340, %339 in 1 : vector<8x116xf32>, vector<8x12xf32> -> vector<8x128xf32>
    %342 = vector.broadcast %237 : vector<1x128xf32> to vector<8x128xf32>
    %343 = arith.mulf %342, %341 : vector<8x128xf32>
    %cst_216 = arith.constant 0.000000e+00 : f32
    %344 = vector.broadcast %cst_216 : f32 to vector<8x13xf32>
    %345 = vector.extract_strided_slice %246 {offsets = [0, 13], sizes = [8, 115], strides = [1, 1]} : vector<8x128xf32> to vector<8x115xf32>
    %346 = tpu.concatenate %345, %344 in 1 : vector<8x115xf32>, vector<8x13xf32> -> vector<8x128xf32>
    %347 = vector.broadcast %238 : vector<1x128xf32> to vector<8x128xf32>
    %348 = arith.mulf %347, %346 : vector<8x128xf32>
    %cst_217 = arith.constant 0.000000e+00 : f32
    %349 = vector.broadcast %cst_217 : f32 to vector<8x15xf32>
    %350 = vector.extract_strided_slice %246 {offsets = [0, 15], sizes = [8, 113], strides = [1, 1]} : vector<8x128xf32> to vector<8x113xf32>
    %351 = tpu.concatenate %350, %349 in 1 : vector<8x113xf32>, vector<8x15xf32> -> vector<8x128xf32>
    %352 = vector.broadcast %239 : vector<1x128xf32> to vector<8x128xf32>
    %353 = arith.mulf %352, %351 : vector<8x128xf32>
    %cst_218 = arith.constant 0.000000e+00 : f32
    %354 = vector.broadcast %cst_218 : f32 to vector<8x16xf32>
    %355 = vector.extract_strided_slice %246 {offsets = [0, 16], sizes = [8, 112], strides = [1, 1]} : vector<8x128xf32> to vector<8x112xf32>
    %356 = tpu.concatenate %355, %354 in 1 : vector<8x112xf32>, vector<8x16xf32> -> vector<8x128xf32>
    %357 = vector.broadcast %240 : vector<1x128xf32> to vector<8x128xf32>
    %358 = arith.mulf %357, %356 : vector<8x128xf32>
    %cst_219 = arith.constant 0.000000e+00 : f32
    %359 = vector.broadcast %cst_219 : f32 to vector<8x17xf32>
    %360 = vector.extract_strided_slice %246 {offsets = [0, 17], sizes = [8, 111], strides = [1, 1]} : vector<8x128xf32> to vector<8x111xf32>
    %361 = tpu.concatenate %360, %359 in 1 : vector<8x111xf32>, vector<8x17xf32> -> vector<8x128xf32>
    %362 = vector.broadcast %241 : vector<1x128xf32> to vector<8x128xf32>
    %363 = arith.mulf %362, %361 : vector<8x128xf32>
    %cst_220 = arith.constant 0.000000e+00 : f32
    %364 = vector.broadcast %cst_220 : f32 to vector<8x19xf32>
    %365 = vector.extract_strided_slice %246 {offsets = [0, 19], sizes = [8, 109], strides = [1, 1]} : vector<8x128xf32> to vector<8x109xf32>
    %366 = tpu.concatenate %365, %364 in 1 : vector<8x109xf32>, vector<8x19xf32> -> vector<8x128xf32>
    %367 = vector.broadcast %242 : vector<1x128xf32> to vector<8x128xf32>
    %368 = arith.mulf %367, %366 : vector<8x128xf32>
    %cst_221 = arith.constant 0.000000e+00 : f32
    %369 = vector.broadcast %cst_221 : f32 to vector<8x20xf32>
    %370 = vector.extract_strided_slice %246 {offsets = [0, 20], sizes = [8, 108], strides = [1, 1]} : vector<8x128xf32> to vector<8x108xf32>
    %371 = tpu.concatenate %370, %369 in 1 : vector<8x108xf32>, vector<8x20xf32> -> vector<8x128xf32>
    %372 = vector.broadcast %243 : vector<1x128xf32> to vector<8x128xf32>
    %373 = arith.mulf %372, %371 : vector<8x128xf32>
    %cst_222 = arith.constant 0.000000e+00 : f32
    %374 = vector.broadcast %cst_222 : f32 to vector<8x21xf32>
    %375 = vector.extract_strided_slice %246 {offsets = [0, 21], sizes = [8, 107], strides = [1, 1]} : vector<8x128xf32> to vector<8x107xf32>
    %376 = tpu.concatenate %375, %374 in 1 : vector<8x107xf32>, vector<8x21xf32> -> vector<8x128xf32>
    %377 = vector.broadcast %244 : vector<1x128xf32> to vector<8x128xf32>
    %378 = arith.mulf %377, %376 : vector<8x128xf32>
    %379 = tpu.concatenate %251, %256, %261, %266, %271, %276, %281, %286, %291, %296, %301, %306, %311, %313, %318, %323 in 0 : vector<8x128xf32>, vector<8x128xf32>, vector<8x128xf32>, vector<8x128xf32>, vector<8x128xf32>, vector<8x128xf32>, vector<8x128xf32>, vector<8x128xf32>, vector<8x128xf32>, vector<8x128xf32>, vector<8x128xf32>, vector<8x128xf32>, vector<8x128xf32>, vector<8x128xf32>, vector<8x128xf32>, vector<8x128xf32> -> vector<128x128xf32>
    %380 = tpu.concatenate %328, %333, %338, %343, %348, %353, %358, %363, %368, %373, %378 in 0 : vector<8x128xf32>, vector<8x128xf32>, vector<8x128xf32>, vector<8x128xf32>, vector<8x128xf32>, vector<8x128xf32>, vector<8x128xf32>, vector<8x128xf32>, vector<8x128xf32>, vector<8x128xf32>, vector<8x128xf32> -> vector<88x128xf32>
    %381 = tpu.concatenate %379, %380 in 0 : vector<128x128xf32>, vector<88x128xf32> -> vector<216x128xf32>
    %cst_223 = arith.constant dense<0.000000e+00> : vector<16x128xf32>
    %382 = tpu.matmul %215, %381, %cst_223 {dimension_numbers = #tpu.dot_dimension_numbers<[1], [0], [0], [1], [0, 0, 1, 1], [], []>} : vector<16x216xf32>, vector<216x128xf32>, vector<16x128xf32> -> vector<16x128xf32>
    %c0_224 = arith.constant 0 : index
    %c0_225 = arith.constant 0 : index
    %c0_226 = arith.constant 0 : index
    %383 = vector.load %arg14[%c0_224, %c0_225, %c0_226] : memref<2x24x128xf32, #tpu.memory_space<vmem>>, vector<1x24x128xf32>
    %384 = vector.shape_cast %383 : vector<1x24x128xf32> to vector<24x128xf32>
    %385 = vector.extract_strided_slice %384 {offsets = [0, 0], sizes = [8, 128], strides = [1, 1]} : vector<24x128xf32> to vector<8x128xf32>
    %386 = vector.extract_strided_slice %382 {offsets = [0, 0], sizes = [8, 128], strides = [1, 1]} : vector<16x128xf32> to vector<8x128xf32>
    %387 = arith.addf %385, %386 : vector<8x128xf32>
    %cst_227 = arith.constant 0.000000e+00 : f32
    %388 = vector.broadcast %cst_227 : f32 to vector<8x128xf32>
    %389 = arith.subf %388, %387 : vector<8x128xf32>
    %390 = math.exp %389 : vector<8x128xf32>
    %cst_228 = arith.constant 1.000000e+00 : f32
    %391 = vector.broadcast %cst_228 : f32 to vector<8x128xf32>
    %392 = arith.addf %391, %390 : vector<8x128xf32>
    %393 = tpu.reciprocal %392 {approx = true} : vector<8x128xf32> -> vector<8x128xf32>
    %394 = vector.extract_strided_slice %384 {offsets = [8, 0], sizes = [8, 128], strides = [1, 1]} : vector<24x128xf32> to vector<8x128xf32>
    %395 = vector.extract_strided_slice %382 {offsets = [8, 0], sizes = [8, 128], strides = [1, 1]} : vector<16x128xf32> to vector<8x128xf32>
    %396 = arith.addf %394, %395 : vector<8x128xf32>
    %cst_229 = arith.constant 0.000000e+00 : f32
    %397 = vector.broadcast %cst_229 : f32 to vector<8x128xf32>
    %398 = arith.subf %397, %396 : vector<8x128xf32>
    %399 = math.exp %398 : vector<8x128xf32>
    %cst_230 = arith.constant 1.000000e+00 : f32
    %400 = vector.broadcast %cst_230 : f32 to vector<8x128xf32>
    %401 = arith.addf %400, %399 : vector<8x128xf32>
    %402 = tpu.reciprocal %401 {approx = true} : vector<8x128xf32> -> vector<8x128xf32>
    %403 = arith.mulf %402, %246 : vector<8x128xf32>
    %cst_231 = arith.constant 0.000000e+00 : f32
    %404 = vector.broadcast %cst_231 : f32 to vector<8x21xf32>
    %405 = vector.extract_strided_slice %403 {offsets = [0, 0], sizes = [8, 107], strides = [1, 1]} : vector<8x128xf32> to vector<8x107xf32>
    %406 = tpu.concatenate %404, %405 in 1 : vector<8x21xf32>, vector<8x107xf32> -> vector<8x128xf32>
    %407 = vector.broadcast %218 : vector<1x128xf32> to vector<8x128xf32>
    %408 = arith.mulf %407, %406 : vector<8x128xf32>
    %cst_232 = arith.constant 0.000000e+00 : f32
    %409 = vector.broadcast %cst_232 : f32 to vector<8x20xf32>
    %410 = vector.extract_strided_slice %403 {offsets = [0, 0], sizes = [8, 108], strides = [1, 1]} : vector<8x128xf32> to vector<8x108xf32>
    %411 = tpu.concatenate %409, %410 in 1 : vector<8x20xf32>, vector<8x108xf32> -> vector<8x128xf32>
    %412 = vector.broadcast %219 : vector<1x128xf32> to vector<8x128xf32>
    %413 = arith.mulf %412, %411 : vector<8x128xf32>
    %cst_233 = arith.constant 0.000000e+00 : f32
    %414 = vector.broadcast %cst_233 : f32 to vector<8x19xf32>
    %415 = vector.extract_strided_slice %403 {offsets = [0, 0], sizes = [8, 109], strides = [1, 1]} : vector<8x128xf32> to vector<8x109xf32>
    %416 = tpu.concatenate %414, %415 in 1 : vector<8x19xf32>, vector<8x109xf32> -> vector<8x128xf32>
    %417 = vector.broadcast %220 : vector<1x128xf32> to vector<8x128xf32>
    %418 = arith.mulf %417, %416 : vector<8x128xf32>
    %cst_234 = arith.constant 0.000000e+00 : f32
    %419 = vector.broadcast %cst_234 : f32 to vector<8x17xf32>
    %420 = vector.extract_strided_slice %403 {offsets = [0, 0], sizes = [8, 111], strides = [1, 1]} : vector<8x128xf32> to vector<8x111xf32>
    %421 = tpu.concatenate %419, %420 in 1 : vector<8x17xf32>, vector<8x111xf32> -> vector<8x128xf32>
    %422 = vector.broadcast %221 : vector<1x128xf32> to vector<8x128xf32>
    %423 = arith.mulf %422, %421 : vector<8x128xf32>
    %cst_235 = arith.constant 0.000000e+00 : f32
    %424 = vector.broadcast %cst_235 : f32 to vector<8x16xf32>
    %425 = vector.extract_strided_slice %403 {offsets = [0, 0], sizes = [8, 112], strides = [1, 1]} : vector<8x128xf32> to vector<8x112xf32>
    %426 = tpu.concatenate %424, %425 in 1 : vector<8x16xf32>, vector<8x112xf32> -> vector<8x128xf32>
    %427 = vector.broadcast %222 : vector<1x128xf32> to vector<8x128xf32>
    %428 = arith.mulf %427, %426 : vector<8x128xf32>
    %cst_236 = arith.constant 0.000000e+00 : f32
    %429 = vector.broadcast %cst_236 : f32 to vector<8x15xf32>
    %430 = vector.extract_strided_slice %403 {offsets = [0, 0], sizes = [8, 113], strides = [1, 1]} : vector<8x128xf32> to vector<8x113xf32>
    %431 = tpu.concatenate %429, %430 in 1 : vector<8x15xf32>, vector<8x113xf32> -> vector<8x128xf32>
    %432 = vector.broadcast %223 : vector<1x128xf32> to vector<8x128xf32>
    %433 = arith.mulf %432, %431 : vector<8x128xf32>
    %cst_237 = arith.constant 0.000000e+00 : f32
    %434 = vector.broadcast %cst_237 : f32 to vector<8x13xf32>
    %435 = vector.extract_strided_slice %403 {offsets = [0, 0], sizes = [8, 115], strides = [1, 1]} : vector<8x128xf32> to vector<8x115xf32>
    %436 = tpu.concatenate %434, %435 in 1 : vector<8x13xf32>, vector<8x115xf32> -> vector<8x128xf32>
    %437 = vector.broadcast %224 : vector<1x128xf32> to vector<8x128xf32>
    %438 = arith.mulf %437, %436 : vector<8x128xf32>
    %cst_238 = arith.constant 0.000000e+00 : f32
    %439 = vector.broadcast %cst_238 : f32 to vector<8x12xf32>
    %440 = vector.extract_strided_slice %403 {offsets = [0, 0], sizes = [8, 116], strides = [1, 1]} : vector<8x128xf32> to vector<8x116xf32>
    %441 = tpu.concatenate %439, %440 in 1 : vector<8x12xf32>, vector<8x116xf32> -> vector<8x128xf32>
    %442 = vector.broadcast %225 : vector<1x128xf32> to vector<8x128xf32>
    %443 = arith.mulf %442, %441 : vector<8x128xf32>
    %cst_239 = arith.constant 0.000000e+00 : f32
    %444 = vector.broadcast %cst_239 : f32 to vector<8x11xf32>
    %445 = vector.extract_strided_slice %403 {offsets = [0, 0], sizes = [8, 117], strides = [1, 1]} : vector<8x128xf32> to vector<8x117xf32>
    %446 = tpu.concatenate %444, %445 in 1 : vector<8x11xf32>, vector<8x117xf32> -> vector<8x128xf32>
    %447 = vector.broadcast %226 : vector<1x128xf32> to vector<8x128xf32>
    %448 = arith.mulf %447, %446 : vector<8x128xf32>
    %cst_240 = arith.constant 0.000000e+00 : f32
    %449 = vector.broadcast %cst_240 : f32 to vector<8x5xf32>
    %450 = vector.extract_strided_slice %403 {offsets = [0, 0], sizes = [8, 123], strides = [1, 1]} : vector<8x128xf32> to vector<8x123xf32>
    %451 = tpu.concatenate %449, %450 in 1 : vector<8x5xf32>, vector<8x123xf32> -> vector<8x128xf32>
    %452 = vector.broadcast %227 : vector<1x128xf32> to vector<8x128xf32>
    %453 = arith.mulf %452, %451 : vector<8x128xf32>
    %cst_241 = arith.constant 0.000000e+00 : f32
    %454 = vector.broadcast %cst_241 : f32 to vector<8x4xf32>
    %455 = vector.extract_strided_slice %403 {offsets = [0, 0], sizes = [8, 124], strides = [1, 1]} : vector<8x128xf32> to vector<8x124xf32>
    %456 = tpu.concatenate %454, %455 in 1 : vector<8x4xf32>, vector<8x124xf32> -> vector<8x128xf32>
    %457 = vector.broadcast %228 : vector<1x128xf32> to vector<8x128xf32>
    %458 = arith.mulf %457, %456 : vector<8x128xf32>
    %cst_242 = arith.constant 0.000000e+00 : f32
    %459 = vector.broadcast %cst_242 : f32 to vector<8x3xf32>
    %460 = vector.extract_strided_slice %403 {offsets = [0, 0], sizes = [8, 125], strides = [1, 1]} : vector<8x128xf32> to vector<8x125xf32>
    %461 = tpu.concatenate %459, %460 in 1 : vector<8x3xf32>, vector<8x125xf32> -> vector<8x128xf32>
    %462 = vector.broadcast %229 : vector<1x128xf32> to vector<8x128xf32>
    %463 = arith.mulf %462, %461 : vector<8x128xf32>
    %cst_243 = arith.constant 0.000000e+00 : f32
    %464 = vector.broadcast %cst_243 : f32 to vector<8x1xf32>
    %465 = vector.extract_strided_slice %403 {offsets = [0, 0], sizes = [8, 127], strides = [1, 1]} : vector<8x128xf32> to vector<8x127xf32>
    %466 = tpu.concatenate %464, %465 in 1 : vector<8x1xf32>, vector<8x127xf32> -> vector<8x128xf32>
    %467 = vector.broadcast %230 : vector<1x128xf32> to vector<8x128xf32>
    %468 = arith.mulf %467, %466 : vector<8x128xf32>
    %469 = vector.broadcast %231 : vector<1x128xf32> to vector<8x128xf32>
    %470 = arith.mulf %469, %403 : vector<8x128xf32>
    %cst_244 = arith.constant 0.000000e+00 : f32
    %471 = vector.broadcast %cst_244 : f32 to vector<8x1xf32>
    %472 = vector.extract_strided_slice %403 {offsets = [0, 1], sizes = [8, 127], strides = [1, 1]} : vector<8x128xf32> to vector<8x127xf32>
    %473 = tpu.concatenate %472, %471 in 1 : vector<8x127xf32>, vector<8x1xf32> -> vector<8x128xf32>
    %474 = vector.broadcast %232 : vector<1x128xf32> to vector<8x128xf32>
    %475 = arith.mulf %474, %473 : vector<8x128xf32>
    %cst_245 = arith.constant 0.000000e+00 : f32
    %476 = vector.broadcast %cst_245 : f32 to vector<8x3xf32>
    %477 = vector.extract_strided_slice %403 {offsets = [0, 3], sizes = [8, 125], strides = [1, 1]} : vector<8x128xf32> to vector<8x125xf32>
    %478 = tpu.concatenate %477, %476 in 1 : vector<8x125xf32>, vector<8x3xf32> -> vector<8x128xf32>
    %479 = vector.broadcast %233 : vector<1x128xf32> to vector<8x128xf32>
    %480 = arith.mulf %479, %478 : vector<8x128xf32>
    %cst_246 = arith.constant 0.000000e+00 : f32
    %481 = vector.broadcast %cst_246 : f32 to vector<8x4xf32>
    %482 = vector.extract_strided_slice %403 {offsets = [0, 4], sizes = [8, 124], strides = [1, 1]} : vector<8x128xf32> to vector<8x124xf32>
    %483 = tpu.concatenate %482, %481 in 1 : vector<8x124xf32>, vector<8x4xf32> -> vector<8x128xf32>
    %484 = vector.broadcast %234 : vector<1x128xf32> to vector<8x128xf32>
    %485 = arith.mulf %484, %483 : vector<8x128xf32>
    %cst_247 = arith.constant 0.000000e+00 : f32
    %486 = vector.broadcast %cst_247 : f32 to vector<8x5xf32>
    %487 = vector.extract_strided_slice %403 {offsets = [0, 5], sizes = [8, 123], strides = [1, 1]} : vector<8x128xf32> to vector<8x123xf32>
    %488 = tpu.concatenate %487, %486 in 1 : vector<8x123xf32>, vector<8x5xf32> -> vector<8x128xf32>
    %489 = vector.broadcast %235 : vector<1x128xf32> to vector<8x128xf32>
    %490 = arith.mulf %489, %488 : vector<8x128xf32>
    %cst_248 = arith.constant 0.000000e+00 : f32
    %491 = vector.broadcast %cst_248 : f32 to vector<8x11xf32>
    %492 = vector.extract_strided_slice %403 {offsets = [0, 11], sizes = [8, 117], strides = [1, 1]} : vector<8x128xf32> to vector<8x117xf32>
    %493 = tpu.concatenate %492, %491 in 1 : vector<8x117xf32>, vector<8x11xf32> -> vector<8x128xf32>
    %494 = vector.broadcast %236 : vector<1x128xf32> to vector<8x128xf32>
    %495 = arith.mulf %494, %493 : vector<8x128xf32>
    %cst_249 = arith.constant 0.000000e+00 : f32
    %496 = vector.broadcast %cst_249 : f32 to vector<8x12xf32>
    %497 = vector.extract_strided_slice %403 {offsets = [0, 12], sizes = [8, 116], strides = [1, 1]} : vector<8x128xf32> to vector<8x116xf32>
    %498 = tpu.concatenate %497, %496 in 1 : vector<8x116xf32>, vector<8x12xf32> -> vector<8x128xf32>
    %499 = vector.broadcast %237 : vector<1x128xf32> to vector<8x128xf32>
    %500 = arith.mulf %499, %498 : vector<8x128xf32>
    %cst_250 = arith.constant 0.000000e+00 : f32
    %501 = vector.broadcast %cst_250 : f32 to vector<8x13xf32>
    %502 = vector.extract_strided_slice %403 {offsets = [0, 13], sizes = [8, 115], strides = [1, 1]} : vector<8x128xf32> to vector<8x115xf32>
    %503 = tpu.concatenate %502, %501 in 1 : vector<8x115xf32>, vector<8x13xf32> -> vector<8x128xf32>
    %504 = vector.broadcast %238 : vector<1x128xf32> to vector<8x128xf32>
    %505 = arith.mulf %504, %503 : vector<8x128xf32>
    %cst_251 = arith.constant 0.000000e+00 : f32
    %506 = vector.broadcast %cst_251 : f32 to vector<8x15xf32>
    %507 = vector.extract_strided_slice %403 {offsets = [0, 15], sizes = [8, 113], strides = [1, 1]} : vector<8x128xf32> to vector<8x113xf32>
    %508 = tpu.concatenate %507, %506 in 1 : vector<8x113xf32>, vector<8x15xf32> -> vector<8x128xf32>
    %509 = vector.broadcast %239 : vector<1x128xf32> to vector<8x128xf32>
    %510 = arith.mulf %509, %508 : vector<8x128xf32>
    %cst_252 = arith.constant 0.000000e+00 : f32
    %511 = vector.broadcast %cst_252 : f32 to vector<8x16xf32>
    %512 = vector.extract_strided_slice %403 {offsets = [0, 16], sizes = [8, 112], strides = [1, 1]} : vector<8x128xf32> to vector<8x112xf32>
    %513 = tpu.concatenate %512, %511 in 1 : vector<8x112xf32>, vector<8x16xf32> -> vector<8x128xf32>
    %514 = vector.broadcast %240 : vector<1x128xf32> to vector<8x128xf32>
    %515 = arith.mulf %514, %513 : vector<8x128xf32>
    %cst_253 = arith.constant 0.000000e+00 : f32
    %516 = vector.broadcast %cst_253 : f32 to vector<8x17xf32>
    %517 = vector.extract_strided_slice %403 {offsets = [0, 17], sizes = [8, 111], strides = [1, 1]} : vector<8x128xf32> to vector<8x111xf32>
    %518 = tpu.concatenate %517, %516 in 1 : vector<8x111xf32>, vector<8x17xf32> -> vector<8x128xf32>
    %519 = vector.broadcast %241 : vector<1x128xf32> to vector<8x128xf32>
    %520 = arith.mulf %519, %518 : vector<8x128xf32>
    %cst_254 = arith.constant 0.000000e+00 : f32
    %521 = vector.broadcast %cst_254 : f32 to vector<8x19xf32>
    %522 = vector.extract_strided_slice %403 {offsets = [0, 19], sizes = [8, 109], strides = [1, 1]} : vector<8x128xf32> to vector<8x109xf32>
    %523 = tpu.concatenate %522, %521 in 1 : vector<8x109xf32>, vector<8x19xf32> -> vector<8x128xf32>
    %524 = vector.broadcast %242 : vector<1x128xf32> to vector<8x128xf32>
    %525 = arith.mulf %524, %523 : vector<8x128xf32>
    %cst_255 = arith.constant 0.000000e+00 : f32
    %526 = vector.broadcast %cst_255 : f32 to vector<8x20xf32>
    %527 = vector.extract_strided_slice %403 {offsets = [0, 20], sizes = [8, 108], strides = [1, 1]} : vector<8x128xf32> to vector<8x108xf32>
    %528 = tpu.concatenate %527, %526 in 1 : vector<8x108xf32>, vector<8x20xf32> -> vector<8x128xf32>
    %529 = vector.broadcast %243 : vector<1x128xf32> to vector<8x128xf32>
    %530 = arith.mulf %529, %528 : vector<8x128xf32>
    %cst_256 = arith.constant 0.000000e+00 : f32
    %531 = vector.broadcast %cst_256 : f32 to vector<8x21xf32>
    %532 = vector.extract_strided_slice %403 {offsets = [0, 21], sizes = [8, 107], strides = [1, 1]} : vector<8x128xf32> to vector<8x107xf32>
    %533 = tpu.concatenate %532, %531 in 1 : vector<8x107xf32>, vector<8x21xf32> -> vector<8x128xf32>
    %534 = vector.broadcast %244 : vector<1x128xf32> to vector<8x128xf32>
    %535 = arith.mulf %534, %533 : vector<8x128xf32>
    %536 = tpu.concatenate %408, %413, %418, %423, %428, %433, %438, %443, %448, %453, %458, %463, %468, %470, %475, %480 in 0 : vector<8x128xf32>, vector<8x128xf32>, vector<8x128xf32>, vector<8x128xf32>, vector<8x128xf32>, vector<8x128xf32>, vector<8x128xf32>, vector<8x128xf32>, vector<8x128xf32>, vector<8x128xf32>, vector<8x128xf32>, vector<8x128xf32>, vector<8x128xf32>, vector<8x128xf32>, vector<8x128xf32>, vector<8x128xf32> -> vector<128x128xf32>
    %537 = tpu.concatenate %485, %490, %495, %500, %505, %510, %515, %520, %525, %530, %535 in 0 : vector<8x128xf32>, vector<8x128xf32>, vector<8x128xf32>, vector<8x128xf32>, vector<8x128xf32>, vector<8x128xf32>, vector<8x128xf32>, vector<8x128xf32>, vector<8x128xf32>, vector<8x128xf32>, vector<8x128xf32> -> vector<88x128xf32>
    %538 = tpu.concatenate %536, %537 in 0 : vector<128x128xf32>, vector<88x128xf32> -> vector<216x128xf32>
    %cst_257 = arith.constant dense<0.000000e+00> : vector<8x128xf32>
    %539 = tpu.matmul %217, %538, %cst_257 {dimension_numbers = #tpu.dot_dimension_numbers<[1], [0], [0], [1], [0, 0, 1, 1], [], []>} : vector<8x216xf32>, vector<216x128xf32>, vector<8x128xf32> -> vector<8x128xf32>
    %540 = vector.extract_strided_slice %384 {offsets = [16, 0], sizes = [8, 128], strides = [1, 1]} : vector<24x128xf32> to vector<8x128xf32>
    %541 = arith.addf %540, %539 : vector<8x128xf32>
    %542 = math.tanh %541 : vector<8x128xf32>
    %543 = arith.mulf %393, %246 : vector<8x128xf32>
    %cst_258 = arith.constant 1.000000e+00 : f32
    %544 = vector.broadcast %cst_258 : f32 to vector<8x128xf32>
    %545 = arith.subf %544, %393 : vector<8x128xf32>
    %546 = arith.mulf %545, %542 : vector<8x128xf32>
    %547 = arith.addf %543, %546 : vector<8x128xf32>
    %c0_259 = arith.constant 0 : index
    %c0_260 = arith.constant 0 : index
    %c0_261 = arith.constant 0 : index
    %548 = vector.load %arg12[%c0_259, %c0_260, %c0_261] : memref<2x8x128xf32, #tpu.memory_space<vmem>>, vector<1x8x128xf32>
    %549 = vector.shape_cast %548 : vector<1x8x128xf32> to vector<8x128xf32>
    %550 = vector.shape_cast %547 : vector<8x128xf32> to vector<1x8x128xf32>
    tpu.vector_store %arg12[%c0_259, %c0_260, %c0_261], %550 {strides = array<i32>} : memref<2x8x128xf32, #tpu.memory_space<vmem>>, vector<1x8x128xf32>,
    %c0_262 = arith.constant 0 : index
    %c0_263 = arith.constant 0 : index
    %c0_264 = arith.constant 0 : index
    %551 = vector.load %arg13[%c0_262, %c0_263, %c0_264] : memref<2x8x128xf32, #tpu.memory_space<vmem>>, vector<1x8x128xf32>
    %552 = vector.shape_cast %551 : vector<1x8x128xf32> to vector<8x128xf32>
    %553 = vector.shape_cast %393 : vector<8x128xf32> to vector<1x8x128xf32>
    tpu.vector_store %arg13[%c0_262, %c0_263, %c0_264], %553 {strides = array<i32>} : memref<2x8x128xf32, #tpu.memory_space<vmem>>, vector<1x8x128xf32>,
    %c1_265 = arith.constant 1 : index
    %c0_266 = arith.constant 0 : index
    %c0_267 = arith.constant 0 : index
    %554 = vector.load %arg10[%c1_265, %c0_266, %c0_267] : memref<2x8x128xf32, #tpu.memory_space<vmem>>, vector<1x8x128xf32>
    %555 = vector.shape_cast %554 : vector<1x8x128xf32> to vector<8x128xf32>
    %cst_268 = arith.constant 0.000000e+00 : f32
    %556 = vector.broadcast %cst_268 : f32 to vector<8x21xf32>
    %557 = vector.extract_strided_slice %555 {offsets = [0, 0], sizes = [8, 107], strides = [1, 1]} : vector<8x128xf32> to vector<8x107xf32>
    %558 = tpu.concatenate %556, %557 in 1 : vector<8x21xf32>, vector<8x107xf32> -> vector<8x128xf32>
    %559 = vector.broadcast %218 : vector<1x128xf32> to vector<8x128xf32>
    %560 = arith.mulf %559, %558 : vector<8x128xf32>
    %cst_269 = arith.constant 0.000000e+00 : f32
    %561 = vector.broadcast %cst_269 : f32 to vector<8x20xf32>
    %562 = vector.extract_strided_slice %555 {offsets = [0, 0], sizes = [8, 108], strides = [1, 1]} : vector<8x128xf32> to vector<8x108xf32>
    %563 = tpu.concatenate %561, %562 in 1 : vector<8x20xf32>, vector<8x108xf32> -> vector<8x128xf32>
    %564 = vector.broadcast %219 : vector<1x128xf32> to vector<8x128xf32>
    %565 = arith.mulf %564, %563 : vector<8x128xf32>
    %cst_270 = arith.constant 0.000000e+00 : f32
    %566 = vector.broadcast %cst_270 : f32 to vector<8x19xf32>
    %567 = vector.extract_strided_slice %555 {offsets = [0, 0], sizes = [8, 109], strides = [1, 1]} : vector<8x128xf32> to vector<8x109xf32>
    %568 = tpu.concatenate %566, %567 in 1 : vector<8x19xf32>, vector<8x109xf32> -> vector<8x128xf32>
    %569 = vector.broadcast %220 : vector<1x128xf32> to vector<8x128xf32>
    %570 = arith.mulf %569, %568 : vector<8x128xf32>
    %cst_271 = arith.constant 0.000000e+00 : f32
    %571 = vector.broadcast %cst_271 : f32 to vector<8x17xf32>
    %572 = vector.extract_strided_slice %555 {offsets = [0, 0], sizes = [8, 111], strides = [1, 1]} : vector<8x128xf32> to vector<8x111xf32>
    %573 = tpu.concatenate %571, %572 in 1 : vector<8x17xf32>, vector<8x111xf32> -> vector<8x128xf32>
    %574 = vector.broadcast %221 : vector<1x128xf32> to vector<8x128xf32>
    %575 = arith.mulf %574, %573 : vector<8x128xf32>
    %cst_272 = arith.constant 0.000000e+00 : f32
    %576 = vector.broadcast %cst_272 : f32 to vector<8x16xf32>
    %577 = vector.extract_strided_slice %555 {offsets = [0, 0], sizes = [8, 112], strides = [1, 1]} : vector<8x128xf32> to vector<8x112xf32>
    %578 = tpu.concatenate %576, %577 in 1 : vector<8x16xf32>, vector<8x112xf32> -> vector<8x128xf32>
    %579 = vector.broadcast %222 : vector<1x128xf32> to vector<8x128xf32>
    %580 = arith.mulf %579, %578 : vector<8x128xf32>
    %cst_273 = arith.constant 0.000000e+00 : f32
    %581 = vector.broadcast %cst_273 : f32 to vector<8x15xf32>
    %582 = vector.extract_strided_slice %555 {offsets = [0, 0], sizes = [8, 113], strides = [1, 1]} : vector<8x128xf32> to vector<8x113xf32>
    %583 = tpu.concatenate %581, %582 in 1 : vector<8x15xf32>, vector<8x113xf32> -> vector<8x128xf32>
    %584 = vector.broadcast %223 : vector<1x128xf32> to vector<8x128xf32>
    %585 = arith.mulf %584, %583 : vector<8x128xf32>
    %cst_274 = arith.constant 0.000000e+00 : f32
    %586 = vector.broadcast %cst_274 : f32 to vector<8x13xf32>
    %587 = vector.extract_strided_slice %555 {offsets = [0, 0], sizes = [8, 115], strides = [1, 1]} : vector<8x128xf32> to vector<8x115xf32>
    %588 = tpu.concatenate %586, %587 in 1 : vector<8x13xf32>, vector<8x115xf32> -> vector<8x128xf32>
    %589 = vector.broadcast %224 : vector<1x128xf32> to vector<8x128xf32>
    %590 = arith.mulf %589, %588 : vector<8x128xf32>
    %cst_275 = arith.constant 0.000000e+00 : f32
    %591 = vector.broadcast %cst_275 : f32 to vector<8x12xf32>
    %592 = vector.extract_strided_slice %555 {offsets = [0, 0], sizes = [8, 116], strides = [1, 1]} : vector<8x128xf32> to vector<8x116xf32>
    %593 = tpu.concatenate %591, %592 in 1 : vector<8x12xf32>, vector<8x116xf32> -> vector<8x128xf32>
    %594 = vector.broadcast %225 : vector<1x128xf32> to vector<8x128xf32>
    %595 = arith.mulf %594, %593 : vector<8x128xf32>
    %cst_276 = arith.constant 0.000000e+00 : f32
    %596 = vector.broadcast %cst_276 : f32 to vector<8x11xf32>
    %597 = vector.extract_strided_slice %555 {offsets = [0, 0], sizes = [8, 117], strides = [1, 1]} : vector<8x128xf32> to vector<8x117xf32>
    %598 = tpu.concatenate %596, %597 in 1 : vector<8x11xf32>, vector<8x117xf32> -> vector<8x128xf32>
    %599 = vector.broadcast %226 : vector<1x128xf32> to vector<8x128xf32>
    %600 = arith.mulf %599, %598 : vector<8x128xf32>
    %cst_277 = arith.constant 0.000000e+00 : f32
    %601 = vector.broadcast %cst_277 : f32 to vector<8x5xf32>
    %602 = vector.extract_strided_slice %555 {offsets = [0, 0], sizes = [8, 123], strides = [1, 1]} : vector<8x128xf32> to vector<8x123xf32>
    %603 = tpu.concatenate %601, %602 in 1 : vector<8x5xf32>, vector<8x123xf32> -> vector<8x128xf32>
    %604 = vector.broadcast %227 : vector<1x128xf32> to vector<8x128xf32>
    %605 = arith.mulf %604, %603 : vector<8x128xf32>
    %cst_278 = arith.constant 0.000000e+00 : f32
    %606 = vector.broadcast %cst_278 : f32 to vector<8x4xf32>
    %607 = vector.extract_strided_slice %555 {offsets = [0, 0], sizes = [8, 124], strides = [1, 1]} : vector<8x128xf32> to vector<8x124xf32>
    %608 = tpu.concatenate %606, %607 in 1 : vector<8x4xf32>, vector<8x124xf32> -> vector<8x128xf32>
    %609 = vector.broadcast %228 : vector<1x128xf32> to vector<8x128xf32>
    %610 = arith.mulf %609, %608 : vector<8x128xf32>
    %cst_279 = arith.constant 0.000000e+00 : f32
    %611 = vector.broadcast %cst_279 : f32 to vector<8x3xf32>
    %612 = vector.extract_strided_slice %555 {offsets = [0, 0], sizes = [8, 125], strides = [1, 1]} : vector<8x128xf32> to vector<8x125xf32>
    %613 = tpu.concatenate %611, %612 in 1 : vector<8x3xf32>, vector<8x125xf32> -> vector<8x128xf32>
    %614 = vector.broadcast %229 : vector<1x128xf32> to vector<8x128xf32>
    %615 = arith.mulf %614, %613 : vector<8x128xf32>
    %cst_280 = arith.constant 0.000000e+00 : f32
    %616 = vector.broadcast %cst_280 : f32 to vector<8x1xf32>
    %617 = vector.extract_strided_slice %555 {offsets = [0, 0], sizes = [8, 127], strides = [1, 1]} : vector<8x128xf32> to vector<8x127xf32>
    %618 = tpu.concatenate %616, %617 in 1 : vector<8x1xf32>, vector<8x127xf32> -> vector<8x128xf32>
    %619 = vector.broadcast %230 : vector<1x128xf32> to vector<8x128xf32>
    %620 = arith.mulf %619, %618 : vector<8x128xf32>
    %621 = vector.broadcast %231 : vector<1x128xf32> to vector<8x128xf32>
    %622 = arith.mulf %621, %555 : vector<8x128xf32>
    %cst_281 = arith.constant 0.000000e+00 : f32
    %623 = vector.broadcast %cst_281 : f32 to vector<8x1xf32>
    %624 = vector.extract_strided_slice %555 {offsets = [0, 1], sizes = [8, 127], strides = [1, 1]} : vector<8x128xf32> to vector<8x127xf32>
    %625 = tpu.concatenate %624, %623 in 1 : vector<8x127xf32>, vector<8x1xf32> -> vector<8x128xf32>
    %626 = vector.broadcast %232 : vector<1x128xf32> to vector<8x128xf32>
    %627 = arith.mulf %626, %625 : vector<8x128xf32>
    %cst_282 = arith.constant 0.000000e+00 : f32
    %628 = vector.broadcast %cst_282 : f32 to vector<8x3xf32>
    %629 = vector.extract_strided_slice %555 {offsets = [0, 3], sizes = [8, 125], strides = [1, 1]} : vector<8x128xf32> to vector<8x125xf32>
    %630 = tpu.concatenate %629, %628 in 1 : vector<8x125xf32>, vector<8x3xf32> -> vector<8x128xf32>
    %631 = vector.broadcast %233 : vector<1x128xf32> to vector<8x128xf32>
    %632 = arith.mulf %631, %630 : vector<8x128xf32>
    %cst_283 = arith.constant 0.000000e+00 : f32
    %633 = vector.broadcast %cst_283 : f32 to vector<8x4xf32>
    %634 = vector.extract_strided_slice %555 {offsets = [0, 4], sizes = [8, 124], strides = [1, 1]} : vector<8x128xf32> to vector<8x124xf32>
    %635 = tpu.concatenate %634, %633 in 1 : vector<8x124xf32>, vector<8x4xf32> -> vector<8x128xf32>
    %636 = vector.broadcast %234 : vector<1x128xf32> to vector<8x128xf32>
    %637 = arith.mulf %636, %635 : vector<8x128xf32>
    %cst_284 = arith.constant 0.000000e+00 : f32
    %638 = vector.broadcast %cst_284 : f32 to vector<8x5xf32>
    %639 = vector.extract_strided_slice %555 {offsets = [0, 5], sizes = [8, 123], strides = [1, 1]} : vector<8x128xf32> to vector<8x123xf32>
    %640 = tpu.concatenate %639, %638 in 1 : vector<8x123xf32>, vector<8x5xf32> -> vector<8x128xf32>
    %641 = vector.broadcast %235 : vector<1x128xf32> to vector<8x128xf32>
    %642 = arith.mulf %641, %640 : vector<8x128xf32>
    %cst_285 = arith.constant 0.000000e+00 : f32
    %643 = vector.broadcast %cst_285 : f32 to vector<8x11xf32>
    %644 = vector.extract_strided_slice %555 {offsets = [0, 11], sizes = [8, 117], strides = [1, 1]} : vector<8x128xf32> to vector<8x117xf32>
    %645 = tpu.concatenate %644, %643 in 1 : vector<8x117xf32>, vector<8x11xf32> -> vector<8x128xf32>
    %646 = vector.broadcast %236 : vector<1x128xf32> to vector<8x128xf32>
    %647 = arith.mulf %646, %645 : vector<8x128xf32>
    %cst_286 = arith.constant 0.000000e+00 : f32
    %648 = vector.broadcast %cst_286 : f32 to vector<8x12xf32>
    %649 = vector.extract_strided_slice %555 {offsets = [0, 12], sizes = [8, 116], strides = [1, 1]} : vector<8x128xf32> to vector<8x116xf32>
    %650 = tpu.concatenate %649, %648 in 1 : vector<8x116xf32>, vector<8x12xf32> -> vector<8x128xf32>
    %651 = vector.broadcast %237 : vector<1x128xf32> to vector<8x128xf32>
    %652 = arith.mulf %651, %650 : vector<8x128xf32>
    %cst_287 = arith.constant 0.000000e+00 : f32
    %653 = vector.broadcast %cst_287 : f32 to vector<8x13xf32>
    %654 = vector.extract_strided_slice %555 {offsets = [0, 13], sizes = [8, 115], strides = [1, 1]} : vector<8x128xf32> to vector<8x115xf32>
    %655 = tpu.concatenate %654, %653 in 1 : vector<8x115xf32>, vector<8x13xf32> -> vector<8x128xf32>
    %656 = vector.broadcast %238 : vector<1x128xf32> to vector<8x128xf32>
    %657 = arith.mulf %656, %655 : vector<8x128xf32>
    %cst_288 = arith.constant 0.000000e+00 : f32
    %658 = vector.broadcast %cst_288 : f32 to vector<8x15xf32>
    %659 = vector.extract_strided_slice %555 {offsets = [0, 15], sizes = [8, 113], strides = [1, 1]} : vector<8x128xf32> to vector<8x113xf32>
    %660 = tpu.concatenate %659, %658 in 1 : vector<8x113xf32>, vector<8x15xf32> -> vector<8x128xf32>
    %661 = vector.broadcast %239 : vector<1x128xf32> to vector<8x128xf32>
    %662 = arith.mulf %661, %660 : vector<8x128xf32>
    %cst_289 = arith.constant 0.000000e+00 : f32
    %663 = vector.broadcast %cst_289 : f32 to vector<8x16xf32>
    %664 = vector.extract_strided_slice %555 {offsets = [0, 16], sizes = [8, 112], strides = [1, 1]} : vector<8x128xf32> to vector<8x112xf32>
    %665 = tpu.concatenate %664, %663 in 1 : vector<8x112xf32>, vector<8x16xf32> -> vector<8x128xf32>
    %666 = vector.broadcast %240 : vector<1x128xf32> to vector<8x128xf32>
    %667 = arith.mulf %666, %665 : vector<8x128xf32>
    %cst_290 = arith.constant 0.000000e+00 : f32
    %668 = vector.broadcast %cst_290 : f32 to vector<8x17xf32>
    %669 = vector.extract_strided_slice %555 {offsets = [0, 17], sizes = [8, 111], strides = [1, 1]} : vector<8x128xf32> to vector<8x111xf32>
    %670 = tpu.concatenate %669, %668 in 1 : vector<8x111xf32>, vector<8x17xf32> -> vector<8x128xf32>
    %671 = vector.broadcast %241 : vector<1x128xf32> to vector<8x128xf32>
    %672 = arith.mulf %671, %670 : vector<8x128xf32>
    %cst_291 = arith.constant 0.000000e+00 : f32
    %673 = vector.broadcast %cst_291 : f32 to vector<8x19xf32>
    %674 = vector.extract_strided_slice %555 {offsets = [0, 19], sizes = [8, 109], strides = [1, 1]} : vector<8x128xf32> to vector<8x109xf32>
    %675 = tpu.concatenate %674, %673 in 1 : vector<8x109xf32>, vector<8x19xf32> -> vector<8x128xf32>
    %676 = vector.broadcast %242 : vector<1x128xf32> to vector<8x128xf32>
    %677 = arith.mulf %676, %675 : vector<8x128xf32>
    %cst_292 = arith.constant 0.000000e+00 : f32
    %678 = vector.broadcast %cst_292 : f32 to vector<8x20xf32>
    %679 = vector.extract_strided_slice %555 {offsets = [0, 20], sizes = [8, 108], strides = [1, 1]} : vector<8x128xf32> to vector<8x108xf32>
    %680 = tpu.concatenate %679, %678 in 1 : vector<8x108xf32>, vector<8x20xf32> -> vector<8x128xf32>
    %681 = vector.broadcast %243 : vector<1x128xf32> to vector<8x128xf32>
    %682 = arith.mulf %681, %680 : vector<8x128xf32>
    %cst_293 = arith.constant 0.000000e+00 : f32
    %683 = vector.broadcast %cst_293 : f32 to vector<8x21xf32>
    %684 = vector.extract_strided_slice %555 {offsets = [0, 21], sizes = [8, 107], strides = [1, 1]} : vector<8x128xf32> to vector<8x107xf32>
    %685 = tpu.concatenate %684, %683 in 1 : vector<8x107xf32>, vector<8x21xf32> -> vector<8x128xf32>
    %686 = vector.broadcast %244 : vector<1x128xf32> to vector<8x128xf32>
    %687 = arith.mulf %686, %685 : vector<8x128xf32>
    %688 = tpu.concatenate %560, %565, %570, %575, %580, %585, %590, %595, %600, %605, %610, %615, %620, %622, %627, %632 in 0 : vector<8x128xf32>, vector<8x128xf32>, vector<8x128xf32>, vector<8x128xf32>, vector<8x128xf32>, vector<8x128xf32>, vector<8x128xf32>, vector<8x128xf32>, vector<8x128xf32>, vector<8x128xf32>, vector<8x128xf32>, vector<8x128xf32>, vector<8x128xf32>, vector<8x128xf32>, vector<8x128xf32>, vector<8x128xf32> -> vector<128x128xf32>
    %689 = tpu.concatenate %637, %642, %647, %652, %657, %662, %667, %672, %677, %682, %687 in 0 : vector<8x128xf32>, vector<8x128xf32>, vector<8x128xf32>, vector<8x128xf32>, vector<8x128xf32>, vector<8x128xf32>, vector<8x128xf32>, vector<8x128xf32>, vector<8x128xf32>, vector<8x128xf32>, vector<8x128xf32> -> vector<88x128xf32>
    %690 = tpu.concatenate %688, %689 in 0 : vector<128x128xf32>, vector<88x128xf32> -> vector<216x128xf32>
    %cst_294 = arith.constant dense<0.000000e+00> : vector<16x128xf32>
    %691 = tpu.matmul %215, %690, %cst_294 {dimension_numbers = #tpu.dot_dimension_numbers<[1], [0], [0], [1], [0, 0, 1, 1], [], []>} : vector<16x216xf32>, vector<216x128xf32>, vector<16x128xf32> -> vector<16x128xf32>
    %c1_295 = arith.constant 1 : index
    %c0_296 = arith.constant 0 : index
    %c0_297 = arith.constant 0 : index
    %692 = vector.load %arg14[%c1_295, %c0_296, %c0_297] : memref<2x24x128xf32, #tpu.memory_space<vmem>>, vector<1x24x128xf32>
    %693 = vector.shape_cast %692 : vector<1x24x128xf32> to vector<24x128xf32>
    %694 = vector.extract_strided_slice %693 {offsets = [0, 0], sizes = [8, 128], strides = [1, 1]} : vector<24x128xf32> to vector<8x128xf32>
    %695 = vector.extract_strided_slice %691 {offsets = [0, 0], sizes = [8, 128], strides = [1, 1]} : vector<16x128xf32> to vector<8x128xf32>
    %696 = arith.addf %694, %695 : vector<8x128xf32>
    %cst_298 = arith.constant 0.000000e+00 : f32
    %697 = vector.broadcast %cst_298 : f32 to vector<8x128xf32>
    %698 = arith.subf %697, %696 : vector<8x128xf32>
    %699 = math.exp %698 : vector<8x128xf32>
    %cst_299 = arith.constant 1.000000e+00 : f32
    %700 = vector.broadcast %cst_299 : f32 to vector<8x128xf32>
    %701 = arith.addf %700, %699 : vector<8x128xf32>
    %702 = tpu.reciprocal %701 {approx = true} : vector<8x128xf32> -> vector<8x128xf32>
    %703 = vector.extract_strided_slice %693 {offsets = [8, 0], sizes = [8, 128], strides = [1, 1]} : vector<24x128xf32> to vector<8x128xf32>
    %704 = vector.extract_strided_slice %691 {offsets = [8, 0], sizes = [8, 128], strides = [1, 1]} : vector<16x128xf32> to vector<8x128xf32>
    %705 = arith.addf %703, %704 : vector<8x128xf32>
    %cst_300 = arith.constant 0.000000e+00 : f32
    %706 = vector.broadcast %cst_300 : f32 to vector<8x128xf32>
    %707 = arith.subf %706, %705 : vector<8x128xf32>
    %708 = math.exp %707 : vector<8x128xf32>
    %cst_301 = arith.constant 1.000000e+00 : f32
    %709 = vector.broadcast %cst_301 : f32 to vector<8x128xf32>
    %710 = arith.addf %709, %708 : vector<8x128xf32>
    %711 = tpu.reciprocal %710 {approx = true} : vector<8x128xf32> -> vector<8x128xf32>
    %712 = arith.mulf %711, %555 : vector<8x128xf32>
    %cst_302 = arith.constant 0.000000e+00 : f32
    %713 = vector.broadcast %cst_302 : f32 to vector<8x21xf32>
    %714 = vector.extract_strided_slice %712 {offsets = [0, 0], sizes = [8, 107], strides = [1, 1]} : vector<8x128xf32> to vector<8x107xf32>
    %715 = tpu.concatenate %713, %714 in 1 : vector<8x21xf32>, vector<8x107xf32> -> vector<8x128xf32>
    %716 = vector.broadcast %218 : vector<1x128xf32> to vector<8x128xf32>
    %717 = arith.mulf %716, %715 : vector<8x128xf32>
    %cst_303 = arith.constant 0.000000e+00 : f32
    %718 = vector.broadcast %cst_303 : f32 to vector<8x20xf32>
    %719 = vector.extract_strided_slice %712 {offsets = [0, 0], sizes = [8, 108], strides = [1, 1]} : vector<8x128xf32> to vector<8x108xf32>
    %720 = tpu.concatenate %718, %719 in 1 : vector<8x20xf32>, vector<8x108xf32> -> vector<8x128xf32>
    %721 = vector.broadcast %219 : vector<1x128xf32> to vector<8x128xf32>
    %722 = arith.mulf %721, %720 : vector<8x128xf32>
    %cst_304 = arith.constant 0.000000e+00 : f32
    %723 = vector.broadcast %cst_304 : f32 to vector<8x19xf32>
    %724 = vector.extract_strided_slice %712 {offsets = [0, 0], sizes = [8, 109], strides = [1, 1]} : vector<8x128xf32> to vector<8x109xf32>
    %725 = tpu.concatenate %723, %724 in 1 : vector<8x19xf32>, vector<8x109xf32> -> vector<8x128xf32>
    %726 = vector.broadcast %220 : vector<1x128xf32> to vector<8x128xf32>
    %727 = arith.mulf %726, %725 : vector<8x128xf32>
    %cst_305 = arith.constant 0.000000e+00 : f32
    %728 = vector.broadcast %cst_305 : f32 to vector<8x17xf32>
    %729 = vector.extract_strided_slice %712 {offsets = [0, 0], sizes = [8, 111], strides = [1, 1]} : vector<8x128xf32> to vector<8x111xf32>
    %730 = tpu.concatenate %728, %729 in 1 : vector<8x17xf32>, vector<8x111xf32> -> vector<8x128xf32>
    %731 = vector.broadcast %221 : vector<1x128xf32> to vector<8x128xf32>
    %732 = arith.mulf %731, %730 : vector<8x128xf32>
    %cst_306 = arith.constant 0.000000e+00 : f32
    %733 = vector.broadcast %cst_306 : f32 to vector<8x16xf32>
    %734 = vector.extract_strided_slice %712 {offsets = [0, 0], sizes = [8, 112], strides = [1, 1]} : vector<8x128xf32> to vector<8x112xf32>
    %735 = tpu.concatenate %733, %734 in 1 : vector<8x16xf32>, vector<8x112xf32> -> vector<8x128xf32>
    %736 = vector.broadcast %222 : vector<1x128xf32> to vector<8x128xf32>
    %737 = arith.mulf %736, %735 : vector<8x128xf32>
    %cst_307 = arith.constant 0.000000e+00 : f32
    %738 = vector.broadcast %cst_307 : f32 to vector<8x15xf32>
    %739 = vector.extract_strided_slice %712 {offsets = [0, 0], sizes = [8, 113], strides = [1, 1]} : vector<8x128xf32> to vector<8x113xf32>
    %740 = tpu.concatenate %738, %739 in 1 : vector<8x15xf32>, vector<8x113xf32> -> vector<8x128xf32>
    %741 = vector.broadcast %223 : vector<1x128xf32> to vector<8x128xf32>
    %742 = arith.mulf %741, %740 : vector<8x128xf32>
    %cst_308 = arith.constant 0.000000e+00 : f32
    %743 = vector.broadcast %cst_308 : f32 to vector<8x13xf32>
    %744 = vector.extract_strided_slice %712 {offsets = [0, 0], sizes = [8, 115], strides = [1, 1]} : vector<8x128xf32> to vector<8x115xf32>
    %745 = tpu.concatenate %743, %744 in 1 : vector<8x13xf32>, vector<8x115xf32> -> vector<8x128xf32>
    %746 = vector.broadcast %224 : vector<1x128xf32> to vector<8x128xf32>
    %747 = arith.mulf %746, %745 : vector<8x128xf32>
    %cst_309 = arith.constant 0.000000e+00 : f32
    %748 = vector.broadcast %cst_309 : f32 to vector<8x12xf32>
    %749 = vector.extract_strided_slice %712 {offsets = [0, 0], sizes = [8, 116], strides = [1, 1]} : vector<8x128xf32> to vector<8x116xf32>
    %750 = tpu.concatenate %748, %749 in 1 : vector<8x12xf32>, vector<8x116xf32> -> vector<8x128xf32>
    %751 = vector.broadcast %225 : vector<1x128xf32> to vector<8x128xf32>
    %752 = arith.mulf %751, %750 : vector<8x128xf32>
    %cst_310 = arith.constant 0.000000e+00 : f32
    %753 = vector.broadcast %cst_310 : f32 to vector<8x11xf32>
    %754 = vector.extract_strided_slice %712 {offsets = [0, 0], sizes = [8, 117], strides = [1, 1]} : vector<8x128xf32> to vector<8x117xf32>
    %755 = tpu.concatenate %753, %754 in 1 : vector<8x11xf32>, vector<8x117xf32> -> vector<8x128xf32>
    %756 = vector.broadcast %226 : vector<1x128xf32> to vector<8x128xf32>
    %757 = arith.mulf %756, %755 : vector<8x128xf32>
    %cst_311 = arith.constant 0.000000e+00 : f32
    %758 = vector.broadcast %cst_311 : f32 to vector<8x5xf32>
    %759 = vector.extract_strided_slice %712 {offsets = [0, 0], sizes = [8, 123], strides = [1, 1]} : vector<8x128xf32> to vector<8x123xf32>
    %760 = tpu.concatenate %758, %759 in 1 : vector<8x5xf32>, vector<8x123xf32> -> vector<8x128xf32>
    %761 = vector.broadcast %227 : vector<1x128xf32> to vector<8x128xf32>
    %762 = arith.mulf %761, %760 : vector<8x128xf32>
    %cst_312 = arith.constant 0.000000e+00 : f32
    %763 = vector.broadcast %cst_312 : f32 to vector<8x4xf32>
    %764 = vector.extract_strided_slice %712 {offsets = [0, 0], sizes = [8, 124], strides = [1, 1]} : vector<8x128xf32> to vector<8x124xf32>
    %765 = tpu.concatenate %763, %764 in 1 : vector<8x4xf32>, vector<8x124xf32> -> vector<8x128xf32>
    %766 = vector.broadcast %228 : vector<1x128xf32> to vector<8x128xf32>
    %767 = arith.mulf %766, %765 : vector<8x128xf32>
    %cst_313 = arith.constant 0.000000e+00 : f32
    %768 = vector.broadcast %cst_313 : f32 to vector<8x3xf32>
    %769 = vector.extract_strided_slice %712 {offsets = [0, 0], sizes = [8, 125], strides = [1, 1]} : vector<8x128xf32> to vector<8x125xf32>
    %770 = tpu.concatenate %768, %769 in 1 : vector<8x3xf32>, vector<8x125xf32> -> vector<8x128xf32>
    %771 = vector.broadcast %229 : vector<1x128xf32> to vector<8x128xf32>
    %772 = arith.mulf %771, %770 : vector<8x128xf32>
    %cst_314 = arith.constant 0.000000e+00 : f32
    %773 = vector.broadcast %cst_314 : f32 to vector<8x1xf32>
    %774 = vector.extract_strided_slice %712 {offsets = [0, 0], sizes = [8, 127], strides = [1, 1]} : vector<8x128xf32> to vector<8x127xf32>
    %775 = tpu.concatenate %773, %774 in 1 : vector<8x1xf32>, vector<8x127xf32> -> vector<8x128xf32>
    %776 = vector.broadcast %230 : vector<1x128xf32> to vector<8x128xf32>
    %777 = arith.mulf %776, %775 : vector<8x128xf32>
    %778 = vector.broadcast %231 : vector<1x128xf32> to vector<8x128xf32>
    %779 = arith.mulf %778, %712 : vector<8x128xf32>
    %cst_315 = arith.constant 0.000000e+00 : f32
    %780 = vector.broadcast %cst_315 : f32 to vector<8x1xf32>
    %781 = vector.extract_strided_slice %712 {offsets = [0, 1], sizes = [8, 127], strides = [1, 1]} : vector<8x128xf32> to vector<8x127xf32>
    %782 = tpu.concatenate %781, %780 in 1 : vector<8x127xf32>, vector<8x1xf32> -> vector<8x128xf32>
    %783 = vector.broadcast %232 : vector<1x128xf32> to vector<8x128xf32>
    %784 = arith.mulf %783, %782 : vector<8x128xf32>
    %cst_316 = arith.constant 0.000000e+00 : f32
    %785 = vector.broadcast %cst_316 : f32 to vector<8x3xf32>
    %786 = vector.extract_strided_slice %712 {offsets = [0, 3], sizes = [8, 125], strides = [1, 1]} : vector<8x128xf32> to vector<8x125xf32>
    %787 = tpu.concatenate %786, %785 in 1 : vector<8x125xf32>, vector<8x3xf32> -> vector<8x128xf32>
    %788 = vector.broadcast %233 : vector<1x128xf32> to vector<8x128xf32>
    %789 = arith.mulf %788, %787 : vector<8x128xf32>
    %cst_317 = arith.constant 0.000000e+00 : f32
    %790 = vector.broadcast %cst_317 : f32 to vector<8x4xf32>
    %791 = vector.extract_strided_slice %712 {offsets = [0, 4], sizes = [8, 124], strides = [1, 1]} : vector<8x128xf32> to vector<8x124xf32>
    %792 = tpu.concatenate %791, %790 in 1 : vector<8x124xf32>, vector<8x4xf32> -> vector<8x128xf32>
    %793 = vector.broadcast %234 : vector<1x128xf32> to vector<8x128xf32>
    %794 = arith.mulf %793, %792 : vector<8x128xf32>
    %cst_318 = arith.constant 0.000000e+00 : f32
    %795 = vector.broadcast %cst_318 : f32 to vector<8x5xf32>
    %796 = vector.extract_strided_slice %712 {offsets = [0, 5], sizes = [8, 123], strides = [1, 1]} : vector<8x128xf32> to vector<8x123xf32>
    %797 = tpu.concatenate %796, %795 in 1 : vector<8x123xf32>, vector<8x5xf32> -> vector<8x128xf32>
    %798 = vector.broadcast %235 : vector<1x128xf32> to vector<8x128xf32>
    %799 = arith.mulf %798, %797 : vector<8x128xf32>
    %cst_319 = arith.constant 0.000000e+00 : f32
    %800 = vector.broadcast %cst_319 : f32 to vector<8x11xf32>
    %801 = vector.extract_strided_slice %712 {offsets = [0, 11], sizes = [8, 117], strides = [1, 1]} : vector<8x128xf32> to vector<8x117xf32>
    %802 = tpu.concatenate %801, %800 in 1 : vector<8x117xf32>, vector<8x11xf32> -> vector<8x128xf32>
    %803 = vector.broadcast %236 : vector<1x128xf32> to vector<8x128xf32>
    %804 = arith.mulf %803, %802 : vector<8x128xf32>
    %cst_320 = arith.constant 0.000000e+00 : f32
    %805 = vector.broadcast %cst_320 : f32 to vector<8x12xf32>
    %806 = vector.extract_strided_slice %712 {offsets = [0, 12], sizes = [8, 116], strides = [1, 1]} : vector<8x128xf32> to vector<8x116xf32>
    %807 = tpu.concatenate %806, %805 in 1 : vector<8x116xf32>, vector<8x12xf32> -> vector<8x128xf32>
    %808 = vector.broadcast %237 : vector<1x128xf32> to vector<8x128xf32>
    %809 = arith.mulf %808, %807 : vector<8x128xf32>
    %cst_321 = arith.constant 0.000000e+00 : f32
    %810 = vector.broadcast %cst_321 : f32 to vector<8x13xf32>
    %811 = vector.extract_strided_slice %712 {offsets = [0, 13], sizes = [8, 115], strides = [1, 1]} : vector<8x128xf32> to vector<8x115xf32>
    %812 = tpu.concatenate %811, %810 in 1 : vector<8x115xf32>, vector<8x13xf32> -> vector<8x128xf32>
    %813 = vector.broadcast %238 : vector<1x128xf32> to vector<8x128xf32>
    %814 = arith.mulf %813, %812 : vector<8x128xf32>
    %cst_322 = arith.constant 0.000000e+00 : f32
    %815 = vector.broadcast %cst_322 : f32 to vector<8x15xf32>
    %816 = vector.extract_strided_slice %712 {offsets = [0, 15], sizes = [8, 113], strides = [1, 1]} : vector<8x128xf32> to vector<8x113xf32>
    %817 = tpu.concatenate %816, %815 in 1 : vector<8x113xf32>, vector<8x15xf32> -> vector<8x128xf32>
    %818 = vector.broadcast %239 : vector<1x128xf32> to vector<8x128xf32>
    %819 = arith.mulf %818, %817 : vector<8x128xf32>
    %cst_323 = arith.constant 0.000000e+00 : f32
    %820 = vector.broadcast %cst_323 : f32 to vector<8x16xf32>
    %821 = vector.extract_strided_slice %712 {offsets = [0, 16], sizes = [8, 112], strides = [1, 1]} : vector<8x128xf32> to vector<8x112xf32>
    %822 = tpu.concatenate %821, %820 in 1 : vector<8x112xf32>, vector<8x16xf32> -> vector<8x128xf32>
    %823 = vector.broadcast %240 : vector<1x128xf32> to vector<8x128xf32>
    %824 = arith.mulf %823, %822 : vector<8x128xf32>
    %cst_324 = arith.constant 0.000000e+00 : f32
    %825 = vector.broadcast %cst_324 : f32 to vector<8x17xf32>
    %826 = vector.extract_strided_slice %712 {offsets = [0, 17], sizes = [8, 111], strides = [1, 1]} : vector<8x128xf32> to vector<8x111xf32>
    %827 = tpu.concatenate %826, %825 in 1 : vector<8x111xf32>, vector<8x17xf32> -> vector<8x128xf32>
    %828 = vector.broadcast %241 : vector<1x128xf32> to vector<8x128xf32>
    %829 = arith.mulf %828, %827 : vector<8x128xf32>
    %cst_325 = arith.constant 0.000000e+00 : f32
    %830 = vector.broadcast %cst_325 : f32 to vector<8x19xf32>
    %831 = vector.extract_strided_slice %712 {offsets = [0, 19], sizes = [8, 109], strides = [1, 1]} : vector<8x128xf32> to vector<8x109xf32>
    %832 = tpu.concatenate %831, %830 in 1 : vector<8x109xf32>, vector<8x19xf32> -> vector<8x128xf32>
    %833 = vector.broadcast %242 : vector<1x128xf32> to vector<8x128xf32>
    %834 = arith.mulf %833, %832 : vector<8x128xf32>
    %cst_326 = arith.constant 0.000000e+00 : f32
    %835 = vector.broadcast %cst_326 : f32 to vector<8x20xf32>
    %836 = vector.extract_strided_slice %712 {offsets = [0, 20], sizes = [8, 108], strides = [1, 1]} : vector<8x128xf32> to vector<8x108xf32>
    %837 = tpu.concatenate %836, %835 in 1 : vector<8x108xf32>, vector<8x20xf32> -> vector<8x128xf32>
    %838 = vector.broadcast %243 : vector<1x128xf32> to vector<8x128xf32>
    %839 = arith.mulf %838, %837 : vector<8x128xf32>
    %cst_327 = arith.constant 0.000000e+00 : f32
    %840 = vector.broadcast %cst_327 : f32 to vector<8x21xf32>
    %841 = vector.extract_strided_slice %712 {offsets = [0, 21], sizes = [8, 107], strides = [1, 1]} : vector<8x128xf32> to vector<8x107xf32>
    %842 = tpu.concatenate %841, %840 in 1 : vector<8x107xf32>, vector<8x21xf32> -> vector<8x128xf32>
    %843 = vector.broadcast %244 : vector<1x128xf32> to vector<8x128xf32>
    %844 = arith.mulf %843, %842 : vector<8x128xf32>
    %845 = tpu.concatenate %717, %722, %727, %732, %737, %742, %747, %752, %757, %762, %767, %772, %777, %779, %784, %789 in 0 : vector<8x128xf32>, vector<8x128xf32>, vector<8x128xf32>, vector<8x128xf32>, vector<8x128xf32>, vector<8x128xf32>, vector<8x128xf32>, vector<8x128xf32>, vector<8x128xf32>, vector<8x128xf32>, vector<8x128xf32>, vector<8x128xf32>, vector<8x128xf32>, vector<8x128xf32>, vector<8x128xf32>, vector<8x128xf32> -> vector<128x128xf32>
    %846 = tpu.concatenate %794, %799, %804, %809, %814, %819, %824, %829, %834, %839, %844 in 0 : vector<8x128xf32>, vector<8x128xf32>, vector<8x128xf32>, vector<8x128xf32>, vector<8x128xf32>, vector<8x128xf32>, vector<8x128xf32>, vector<8x128xf32>, vector<8x128xf32>, vector<8x128xf32>, vector<8x128xf32> -> vector<88x128xf32>
    %847 = tpu.concatenate %845, %846 in 0 : vector<128x128xf32>, vector<88x128xf32> -> vector<216x128xf32>
    %cst_328 = arith.constant dense<0.000000e+00> : vector<8x128xf32>
    %848 = tpu.matmul %217, %847, %cst_328 {dimension_numbers = #tpu.dot_dimension_numbers<[1], [0], [0], [1], [0, 0, 1, 1], [], []>} : vector<8x216xf32>, vector<216x128xf32>, vector<8x128xf32> -> vector<8x128xf32>
    %849 = vector.extract_strided_slice %693 {offsets = [16, 0], sizes = [8, 128], strides = [1, 1]} : vector<24x128xf32> to vector<8x128xf32>
    %850 = arith.addf %849, %848 : vector<8x128xf32>
    %851 = math.tanh %850 : vector<8x128xf32>
    %852 = arith.mulf %702, %555 : vector<8x128xf32>
    %cst_329 = arith.constant 1.000000e+00 : f32
    %853 = vector.broadcast %cst_329 : f32 to vector<8x128xf32>
    %854 = arith.subf %853, %702 : vector<8x128xf32>
    %855 = arith.mulf %854, %851 : vector<8x128xf32>
    %856 = arith.addf %852, %855 : vector<8x128xf32>
    %c1_330 = arith.constant 1 : index
    %c0_331 = arith.constant 0 : index
    %c0_332 = arith.constant 0 : index
    %857 = vector.load %arg12[%c1_330, %c0_331, %c0_332] : memref<2x8x128xf32, #tpu.memory_space<vmem>>, vector<1x8x128xf32>
    %858 = vector.shape_cast %857 : vector<1x8x128xf32> to vector<8x128xf32>
    %859 = vector.shape_cast %856 : vector<8x128xf32> to vector<1x8x128xf32>
    tpu.vector_store %arg12[%c1_330, %c0_331, %c0_332], %859 {strides = array<i32>} : memref<2x8x128xf32, #tpu.memory_space<vmem>>, vector<1x8x128xf32>,
    %c1_333 = arith.constant 1 : index
    %c0_334 = arith.constant 0 : index
    %c0_335 = arith.constant 0 : index
    %860 = vector.load %arg13[%c1_333, %c0_334, %c0_335] : memref<2x8x128xf32, #tpu.memory_space<vmem>>, vector<1x8x128xf32>
    %861 = vector.shape_cast %860 : vector<1x8x128xf32> to vector<8x128xf32>
    %862 = vector.shape_cast %702 : vector<8x128xf32> to vector<1x8x128xf32>
    tpu.vector_store %arg13[%c1_333, %c0_334, %c0_335], %862 {strides = array<i32>} : memref<2x8x128xf32, #tpu.memory_space<vmem>>, vector<1x8x128xf32>,
    return
  }
  func.func @transform_0(%arg0: i32, %arg1: memref<1xi32, #tpu.memory_space<smem>>) -> (i32, i32) {
    %c0_i32 = arith.constant 0 : i32
    %c0_i32_0 = arith.constant 0 : i32
    %c0_i32_1 = arith.constant 0 : i32
    return %c0_i32, %c0_i32_0 : i32, i32
  }
  func.func @transform_1(%arg0: i32, %arg1: memref<1xi32, #tpu.memory_space<smem>>) -> (i32, i32) {
    %c0_i32 = arith.constant 0 : i32
    %c0_i32_0 = arith.constant 0 : i32
    %c0_i32_1 = arith.constant 0 : i32
    return %c0_i32, %c0_i32_0 : i32, i32
  }
  func.func @transform_2(%arg0: i32, %arg1: memref<1xi32, #tpu.memory_space<smem>>) -> (i32, i32) {
    %c0_i32 = arith.constant 0 : i32
    %c0_i32_0 = arith.constant 0 : i32
    %c0_i32_1 = arith.constant 0 : i32
    return %c0_i32, %c0_i32_0 : i32, i32
  }
  func.func @transform_3(%arg0: i32, %arg1: memref<1xi32, #tpu.memory_space<smem>>) -> (i32, i32) {
    %c0_i32 = arith.constant 0 : i32
    %c0_i32_0 = arith.constant 0 : i32
    %c0_i32_1 = arith.constant 0 : i32
    return %c0_i32, %c0_i32_0 : i32, i32
  }
  func.func @transform_4(%arg0: i32, %arg1: memref<1xi32, #tpu.memory_space<smem>>) -> (i32, i32, i32) {
    %c0 = arith.constant 0 : index
    %0 = memref.load %arg1[%c0] : memref<1xi32, #tpu.memory_space<smem>>
    %c0_i32 = arith.constant 0 : i32
    %c0_i32_0 = arith.constant 0 : i32
    %c0_i32_1 = arith.constant 0 : i32
    return %0, %c0_i32, %c0_i32_0 : i32, i32, i32
  }
  func.func @transform_5(%arg0: i32, %arg1: memref<1xi32, #tpu.memory_space<smem>>) -> (i32, i32, i32) {
    %c0 = arith.constant 0 : index
    %0 = memref.load %arg1[%c0] : memref<1xi32, #tpu.memory_space<smem>>
    %c0_i32 = arith.constant 0 : i32
    %c0_i32_0 = arith.constant 0 : i32
    %c0_i32_1 = arith.constant 0 : i32
    return %0, %c0_i32, %c0_i32_0 : i32, i32, i32
  }
  func.func @transform_6(%arg0: i32, %arg1: memref<1xi32, #tpu.memory_space<smem>>) -> (i32, i32, i32) {
    %c0 = arith.constant 0 : index
    %0 = memref.load %arg1[%c0] : memref<1xi32, #tpu.memory_space<smem>>
    %c0_i32 = arith.constant 0 : i32
    %c0_i32_0 = arith.constant 0 : i32
    %c0_i32_1 = arith.constant 0 : i32
    return %0, %c0_i32, %c0_i32_0 : i32, i32, i32
  }
  func.func @transform_7(%arg0: i32, %arg1: memref<1xi32, #tpu.memory_space<smem>>) -> (i32, i32, i32) {
    %c0 = arith.constant 0 : index
    %0 = memref.load %arg1[%c0] : memref<1xi32, #tpu.memory_space<smem>>
    %c0_i32 = arith.constant 0 : i32
    %c0_i32_0 = arith.constant 0 : i32
    %c0_i32_1 = arith.constant 0 : i32
    return %0, %c0_i32, %c0_i32_0 : i32, i32, i32
  }
  func.func @transform_8(%arg0: i32, %arg1: memref<1xi32, #tpu.memory_space<smem>>) -> (i32, i32, i32) {
    %c0_i32 = arith.constant 0 : i32
    %c0_i32_0 = arith.constant 0 : i32
    %c0_i32_1 = arith.constant 0 : i32
    %c0_i32_2 = arith.constant 0 : i32
    return %c0_i32, %c0_i32_0, %c0_i32_1 : i32, i32, i32
  }
  func.func @transform_9(%arg0: i32, %arg1: memref<1xi32, #tpu.memory_space<smem>>) -> (i32, i32) {
    %c0_i32 = arith.constant 0 : i32
    %c0_i32_0 = arith.constant 0 : i32
    %c0_i32_1 = arith.constant 0 : i32
    return %c0_i32, %c0_i32_0 : i32, i32
  }
  func.func @transform_10(%arg0: i32, %arg1: memref<1xi32, #tpu.memory_space<smem>>) -> (i32, i32, i32) {
    %c0_i32 = arith.constant 0 : i32
    %c0_i32_0 = arith.constant 0 : i32
    %c0_i32_1 = arith.constant 0 : i32
    %c0_i32_2 = arith.constant 0 : i32
    return %c0_i32, %c0_i32_0, %c0_i32_1 : i32, i32, i32
  }
  func.func @transform_11(%arg0: i32, %arg1: memref<1xi32, #tpu.memory_space<smem>>) -> (i32, i32, i32) {
    %c0_i32 = arith.constant 0 : i32
    %c0_i32_0 = arith.constant 0 : i32
    %c0_i32_1 = arith.constant 0 : i32
    %c0_i32_2 = arith.constant 0 : i32
    return %c0_i32, %c0_i32_0, %c0_i32_1 : i32, i32, i32
  }
}

</mosaic_0001>

<llo_original>
// kernel: recurrent_layer_forward.1
$region0: #{recurrent_layer_forward.1}
  #allocation0 [shape = 'u32[]', space=smem, size = 0x4, offset = 0x4, fixed_abs, tag = 'smem constant byte address 0x4 - core index']
  #allocation1 [shape = 'u32[144,128]{1,0:T(1,128)}', space=vmem, size = 0x12000, scoped, tag = 'internal scratch']
  #allocation2 [shape = 'f32[2,24,128]{2,1,0:T(8,128)}', space=vmem, size = 0x6000, scoped, tag = 'scratch operand']
  #allocation3 [shape = 's32[1]{0}', space=sflag, size = 0x4, scoped, tag = 'scoped memory for recurrent_layer_forward.1']
  #allocation4 [shape = 's32[1]{0:T(128)S(6)}', space=smem, size = 0x200, scoped, tag = 'prefetched SMEM operand 0']
  %s0 = inlined_call_operand.<no memory space> [shape: s32[1], index: 0, kind: input, shape index: {}]
  %s1 = inlined_call_operand.vmem [shape: bf16[2,128], index: 1, kind: input, shape index: {}]
  %s2 = inlined_call_operand.vmem [shape: bf16[128,32], index: 2, kind: input, shape index: {}]
  %s3 = inlined_call_operand.vmem [shape: f32[1,32], index: 3, kind: input, shape index: {}]
  %s4 = inlined_call_operand.vmem [shape: bf16[32,3072], index: 4, kind: input, shape index: {}]
  %s5 = inlined_call_operand.hbm [shape: f32[4,1,3072], index: 5, kind: input, shape index: {}]
  %s6 = inlined_call_operand.hbm [shape: f32[4,1,3072], index: 6, kind: input, shape index: {}]
  %s7 = inlined_call_operand.hbm [shape: f32[4,16,216], index: 7, kind: input, shape index: {}]
  %s8 = inlined_call_operand.hbm [shape: f32[4,8,216], index: 8, kind: input, shape index: {}]
  %s9 = inlined_call_operand.vmem [shape: f32[2,8,128], index: 9, kind: input, shape index: {}]
  %s10 = inlined_call_operand.hbm [shape: f32[27,128], index: 10, kind: input, shape index: {}]
  %s11 = inlined_call_operand.vmem [shape: f32[2,8,128], index: 11, kind: output, shape index: {0}]
  %s12 = inlined_call_operand.vmem [shape: f32[2,8,128], index: 12, kind: output, shape index: {1}]
  %13 = xla_tuple %s11, %s12
  %s14 = sld [smem:[#allocation0]]
  $region78: #{recurrent_layer_forward.1} parent=0
    _
  %s16 = ssub.s32 1, %s14
  %s17 = scalar_select 0, %s16, %s14
  %18 = sst [smem:[#allocation4]] %s0
  $region1: #{recurrent_layer_forward.1} parent=0
    #allocation5 [shape = 'u8[12288]{0}', space=vmem, size = 0x3000, scoped, tag = 'input window, operand 5, single buffered']
    #allocation6 [shape = 's32[1]{0}', space=sflag, size = 0x4, scoped, tag = 'scoped memory for recurrent_layer_forward.1']
    #allocation7 [shape = 'u8[12288]{0}', space=vmem, size = 0x3000, scoped, tag = 'input window, operand 6, single buffered']
    #allocation8 [shape = 's32[1]{0}', space=sflag, size = 0x4, scoped, tag = 'scoped memory for recurrent_layer_forward.1']
    #allocation9 [shape = 'u8[16384]{0}', space=vmem, size = 0x4000, scoped, tag = 'input window, operand 7, single buffered']
    #allocation10 [shape = 'u8[8192]{0}', space=vmem, size = 0x2000, scoped, tag = 'input window, operand 8, single buffered']
    #allocation11 [shape = 's32[1]{0}', space=sflag, size = 0x4, scoped, tag = 'scoped memory for recurrent_layer_forward.1']
    #allocation12 [shape = 'u8[16384]{0}', space=vmem, size = 0x4000, scoped, tag = 'input window, operand 10, single buffered']
    %19 = vsyncpa [#allocation6], 0
    %20 = vsyncpa [#allocation8], 0
    %21 = vsyncpa [#allocation11], 0
    // Predicated region
    $region2: #{recurrent_layer_forward.1} parent=1 // pred_check
      _
    $region3: #{recurrent_layer_forward.1} parent=1 // pred_check_branch
      %23 = sbr.rel (0) target = $region5
    $region4: #{recurrent_layer_forward.1} parent=1 // pred_region
      _
    $region5: #{recurrent_layer_forward.1} parent=1 // pred_fallthru
      _
    // Predicated region
    $region6: #{recurrent_layer_forward.1} parent=1 // pred_check
      _
    $region7: #{recurrent_layer_forward.1} parent=1 // pred_check_branch
      %25 = sbr.rel (0) target = $region9
    $region8: #{recurrent_layer_forward.1} parent=1 // pred_region
      _
    $region9: #{recurrent_layer_forward.1} parent=1 // pred_fallthru
      _
    // Predicated region
    $region10: #{recurrent_layer_forward.1} parent=1 // pred_check
      _
    $region11: #{recurrent_layer_forward.1} parent=1 // pred_check_branch
      %27 = sbr.rel (0) target = $region13
    $region12: #{recurrent_layer_forward.1} parent=1 // pred_region
      _
    $region13: #{recurrent_layer_forward.1} parent=1 // pred_fallthru
      _
    // Predicated region
    $region14: #{recurrent_layer_forward.1} parent=1 // pred_check
      _
    $region15: #{recurrent_layer_forward.1} parent=1 // pred_check_branch
      %29 = sbr.rel (0) target = $region17
    $region16: #{recurrent_layer_forward.1} parent=1 // pred_region
      _
    $region17: #{recurrent_layer_forward.1} parent=1 // pred_fallthru
      _
    // Predicated region
    $region18: #{recurrent_layer_forward.1} parent=1 // pred_check
      _
    $region19: #{recurrent_layer_forward.1} parent=1 // pred_check_branch
      %31 = sbr.rel (0) target = $region21
    $region20: #{recurrent_layer_forward.1} parent=1 // pred_region
      %s32 = sld [smem:[#allocation4]]
      %s34 = ssub.s32 384, 384
      %35 = vsyncadd [#allocation6], %s34
      %s36 = smul.addr %s32, 24
      %s37 = smul.addr %s36, 16
      %s38 = scalar_lea.hbm %s5, %s37
      %s40 = sshll.u32 [#allocation5], 4
      %s41 = int_to_ptr.vmem [resolvable:$true] %s40
      %43 = dma.hbm_to_vmem [thread:$0]  %s38, 384, %s41, [#allocation6]
    $region21: #{recurrent_layer_forward.1} parent=1 // pred_fallthru
      _
    // Predicated region
    $region22: #{recurrent_layer_forward.1} parent=1 // pred_check
      _
    $region23: #{recurrent_layer_forward.1} parent=1 // pred_check_branch
      %45 = sbr.rel (0) target = $region25
    $region24: #{recurrent_layer_forward.1} parent=1 // pred_region
      %s46 = sld [smem:[#allocation4]]
      %s48 = ssub.s32 384, 384
      %49 = vsyncadd [#allocation8], %s48
      %s50 = smul.addr %s46, 24
      %s51 = smul.addr %s50, 16
      %s52 = scalar_lea.hbm %s6, %s51
      %s54 = sshll.u32 [#allocation7], 4
      %s55 = int_to_ptr.vmem [resolvable:$true] %s54
      %57 = dma.hbm_to_vmem [thread:$0]  %s52, 384, %s55, [#allocation8]
    $region25: #{recurrent_layer_forward.1} parent=1 // pred_fallthru
      _
    // Predicated region
    $region26: #{recurrent_layer_forward.1} parent=1 // pred_check
      _
    $region27: #{recurrent_layer_forward.1} parent=1 // pred_check_branch
      %59 = sbr.rel (0) target = $region29
    $region28: #{recurrent_layer_forward.1} parent=1 // pred_region
      %s60 = sld [smem:[#allocation4]]
      %s62 = ssub.s32 512, 512
      %63 = vsyncadd [#allocation8], %s62
      %s64 = smul.addr %s60, 4
      %s65 = smul.addr %s64, 128
      %s66 = scalar_lea.hbm %s7, %s65
      %s67 = sshll.u32 [#allocation9], 4
      %s68 = int_to_ptr.vmem [resolvable:$true] %s67
      %73 = dma.hbm_to_vmem [thread:$0]  %s66, 512, %s68, [#allocation8], 256, 256, 16
    $region29: #{recurrent_layer_forward.1} parent=1 // pred_fallthru
      _
    // Predicated region
    $region30: #{recurrent_layer_forward.1} parent=1 // pred_check
      _
    $region31: #{recurrent_layer_forward.1} parent=1 // pred_check_branch
      %75 = sbr.rel (0) target = $region33
    $region32: #{recurrent_layer_forward.1} parent=1 // pred_region
      %s76 = sld [smem:[#allocation4]]
      %s78 = ssub.s32 256, 256
      %79 = vsyncadd [#allocation11], %s78
      %s80 = smul.addr %s76, 2
      %s81 = smul.addr %s80, 128
      %s82 = scalar_lea.hbm %s8, %s81
      %s84 = sshll.u32 [#allocation10], 4
      %s85 = int_to_ptr.vmem [resolvable:$true] %s84
      %87 = dma.hbm_to_vmem [thread:$0]  %s82, 256, %s85, [#allocation11]
    $region33: #{recurrent_layer_forward.1} parent=1 // pred_fallthru
      _
    // Predicated region
    $region34: #{recurrent_layer_forward.1} parent=1 // pred_check
      _
    $region35: #{recurrent_layer_forward.1} parent=1 // pred_check_branch
      %89 = sbr.rel (0) target = $region37
    $region36: #{recurrent_layer_forward.1} parent=1 // pred_region
      _
    $region37: #{recurrent_layer_forward.1} parent=1 // pred_fallthru
      _
    // Predicated region
    $region38: #{recurrent_layer_forward.1} parent=1 // pred_check
      _
    $region39: #{recurrent_layer_forward.1} parent=1 // pred_check_branch
      %91 = sbr.rel (0) target = $region41
    $region40: #{recurrent_layer_forward.1} parent=1 // pred_region
      %s93 = ssub.s32 512, 512
      %94 = vsyncadd [#allocation11], %s93
      %s95 = sshll.u32 [#allocation12], 4
      %s96 = int_to_ptr.vmem [resolvable:$true] %s95
      %101 = dma.hbm_to_vmem [thread:$0]  %s10, 512, %s96, [#allocation11], 128, 128, 8
    $region41: #{recurrent_layer_forward.1} parent=1 // pred_fallthru
      _
    // Predicated region
    $region42: #{recurrent_layer_forward.1} parent=1 // pred_check
      _
    $region43: #{recurrent_layer_forward.1} parent=1 // pred_check_branch
      %103 = sbr.rel (0) target = $region45
    $region44: #{recurrent_layer_forward.1} parent=1 // pred_region
      %104 = dma.done [#allocation6], 384
    $region45: #{recurrent_layer_forward.1} parent=1 // pred_fallthru
      _
    // Predicated region
    $region46: #{recurrent_layer_forward.1} parent=1 // pred_check
      _
    $region47: #{recurrent_layer_forward.1} parent=1 // pred_check_branch
      %106 = sbr.rel (0) target = $region49
    $region48: #{recurrent_layer_forward.1} parent=1 // pred_region
      %107 = dma.done [#allocation8], 384
    $region49: #{recurrent_layer_forward.1} parent=1 // pred_fallthru
      _
    // Predicated region
    $region50: #{recurrent_layer_forward.1} parent=1 // pred_check
      _
    $region51: #{recurrent_layer_forward.1} parent=1 // pred_check_branch
      %109 = sbr.rel (0) target = $region53
    $region52: #{recurrent_layer_forward.1} parent=1 // pred_region
      %110 = dma.done [#allocation8], 512
    $region53: #{recurrent_layer_forward.1} parent=1 // pred_fallthru
      _
    // Predicated region
    $region54: #{recurrent_layer_forward.1} parent=1 // pred_check
      _
    $region55: #{recurrent_layer_forward.1} parent=1 // pred_check_branch
      %112 = sbr.rel (0) target = $region57
    $region56: #{recurrent_layer_forward.1} parent=1 // pred_region
      %113 = dma.done [#allocation11], 256
    $region57: #{recurrent_layer_forward.1} parent=1 // pred_fallthru
      _
    // Predicated region
    $region58: #{recurrent_layer_forward.1} parent=1 // pred_check
      _
    $region59: #{recurrent_layer_forward.1} parent=1 // pred_check_branch
      %115 = sbr.rel (0) target = $region61
    $region60: #{recurrent_layer_forward.1} parent=1 // pred_region
      %116 = dma.done [#allocation11], 512
    $region61: #{recurrent_layer_forward.1} parent=1 // pred_fallthru
      _
    %s117 = sld [smem:[#allocation4]]
    %s118 = sld [smem:[#allocation4]]
    %s119 = sld [smem:[#allocation4]]
    %s120 = sld [smem:[#allocation4]]
    %v122 = vld [vmem:[%s1] sm:$0x1]
    %v123 = vld [vmem:[%s2] sm:$0xf]
    %v124 = vld [vmem:[%s2 + $0x4] sm:$0xf]
    %v125 = vld [vmem:[%s2 + $0x8] sm:$0xf]
    %v126 = vld [vmem:[%s2 + $0xc] sm:$0xf]
    %v127 = vld [vmem:[%s2 + $0x10] sm:$0xf]
    %v128 = vld [vmem:[%s2 + $0x14] sm:$0xf]
    %v129 = vld [vmem:[%s2 + $0x18] sm:$0xf]
    %v130 = vld [vmem:[%s2 + $0x1c] sm:$0xf]
    %v131 = vld [vmem:[%s2 + $0x20] sm:$0xf]
    %v132 = vld [vmem:[%s2 + $0x24] sm:$0xf]
    %v133 = vld [vmem:[%s2 + $0x28] sm:$0xf]
    %v134 = vld [vmem:[%s2 + $0x2c] sm:$0xf]
    %v135 = vld [vmem:[%s2 + $0x30] sm:$0xf]
    %v136 = vld [vmem:[%s2 + $0x34] sm:$0xf]
    %v137 = vld [vmem:[%s2 + $0x38] sm:$0xf]
    %v138 = vld [vmem:[%s2 + $0x3c] sm:$0xf]
    %v139 = vld [vmem:[%s3] sm:$0x1]
    %v141 = vlaneseq
    %v142 = vshrl.u32 %v141, 7
    %v143 = vsub.s32 0, %v142
    %v144 = vrot.slane %v139, %v143
    %v162 = vunpack.c.l.b16 %v123
    %v163 = vunpack.c.l.b16 %v124
    %v164 = vunpack.c.l.b16 %v125
    %v165 = vunpack.c.l.b16 %v126
    %v166 = vunpack.c.l.b16 %v127
    %v167 = vunpack.c.l.b16 %v128
    %v168 = vunpack.c.l.b16 %v129
    %v169 = vunpack.c.l.b16 %v130
    %v170 = vunpack.c.l.b16 %v131
    %v171 = vunpack.c.l.b16 %v132
    %v172 = vunpack.c.l.b16 %v133
    %v173 = vunpack.c.l.b16 %v134
    %v174 = vunpack.c.l.b16 %v135
    %v175 = vunpack.c.l.b16 %v136
    %v176 = vunpack.c.l.b16 %v137
    %v177 = vunpack.c.l.b16 %v138
    %v178 = vpack.c.b16 %v163, %v162
    %v179 = vpack.c.b16 %v165, %v164
    %v180 = vpack.c.b16 %v167, %v166
    %v181 = vpack.c.b16 %v169, %v168
    %v182 = vpack.c.b16 %v171, %v170
    %v183 = vpack.c.b16 %v173, %v172
    %v184 = vpack.c.b16 %v175, %v174
    %v185 = vpack.c.b16 %v177, %v176
    %194 = vmatprep.subr.bf16.mxu0 0
    %195 = vmatpush1.bf16.msra.mxu0 %v178
    %196 = vmatprep.subr.bf16.mxu0 0
    %197 = vmatpush1.bf16.msra.mxu0 %v179
    %198 = vmatprep.subr.bf16.mxu0 0
    %199 = vmatpush1.bf16.msra.mxu0 %v180
    %200 = vmatprep.subr.bf16.mxu0 0
    %201 = vmatpush1.bf16.msra.mxu0 %v181
    %202 = vmatprep.subr.bf16.mxu0 0
    %203 = vmatpush1.bf16.msra.mxu0 %v182
    %204 = vmatprep.subr.bf16.mxu0 0
    %205 = vmatpush1.bf16.msra.mxu0 %v183
    %206 = vmatprep.subr.bf16.mxu0 0
    %207 = vmatpush1.bf16.msra.mxu0 %v184
    %208 = vmatprep.subr.bf16.mxu0 0
    %209 = vmatpush1.bf16.msra.mxu0 %v185
    %210 = vmatprep.subr.bf16.mxu0 0
    %211 = vmatpush1.bf16.msra.mxu0 0
    %212 = vmatprep.subr.bf16.mxu0 0
    %213 = vmatpush1.bf16.msra.mxu0 0
    %214 = vmatprep.subr.bf16.mxu0 0
    %215 = vmatpush1.bf16.msra.mxu0 0
    %216 = vmatprep.subr.bf16.mxu0 0
    %217 = vmatpush1.bf16.msra.mxu0 0
    %218 = vmatprep.subr.bf16.mxu0 0
    %219 = vmatpush1.bf16.msra.mxu0 0
    %220 = vmatprep.subr.bf16.mxu0 0
    %221 = vmatpush1.bf16.msra.mxu0 0
    %222 = vmatprep.subr.bf16.mxu0 0
    %223 = vmatpush1.bf16.msra.mxu0 0
    %224 = vmatprep.subr.bf16.mxu0 0
    %225 = vmatpush1.bf16.msra.mxu0 0
    %226 = vmatprep.mubr.bf16.mxu0 0
    %227 = vmatmul.mubr.bf16.gmra.mrb[0].mxu0 %v122
    %v228 = vpop.f32.mrb[0].mxu0
    %v229 = vadd.f32 %v144, %v228
    %v230 = vpop.f32.mrb[0].mxu0
    %v231 = vpop.f32.mrb[0].mxu0
    %v232 = vpop.f32.mrb[0].mxu0
    %233 = vdwg.mxu0
    %vm234 = vcmp.ge.f32.partialorder %v229, 0.0
    %v235 = vmul.f32 %v229, 0.01
    %v236 = vsel %vm234, %v229, %v235
    %v237 = vpack.c.bf16 %v236, %v236
    %v238 = vld [vmem:[%s4] sm:$0xff]
    %v239 = vld [vmem:[%s4 + $0x8] sm:$0xff]
    %v240 = vld [vmem:[%s4 + $0x10] sm:$0xff]
    %v241 = vld [vmem:[%s4 + $0x18] sm:$0xff]
    %v242 = vld [vmem:[%s4 + $0x20] sm:$0xff]
    %v243 = vld [vmem:[%s4 + $0x28] sm:$0xff]
    %v244 = vld [vmem:[%s4 + $0x30] sm:$0xff]
    %v245 = vld [vmem:[%s4 + $0x38] sm:$0xff]
    %v246 = vld [vmem:[%s4 + $0x40] sm:$0xff]
    %v247 = vld [vmem:[%s4 + $0x48] sm:$0xff]
    %v248 = vld [vmem:[%s4 + $0x50] sm:$0xff]
    %v249 = vld [vmem:[%s4 + $0x58] sm:$0xff]
    %v250 = vld [vmem:[%s4 + $0x60] sm:$0xff]
    %v251 = vld [vmem:[%s4 + $0x68] sm:$0xff]
    %v252 = vld [vmem:[%s4 + $0x70] sm:$0xff]
    %v253 = vld [vmem:[%s4 + $0x78] sm:$0xff]
    %v254 = vld [vmem:[%s4 + $0x80] sm:$0xff]
    %v255 = vld [vmem:[%s4 + $0x88] sm:$0xff]
    %v256 = vld [vmem:[%s4 + $0x90] sm:$0xff]
    %v257 = vld [vmem:[%s4 + $0x98] sm:$0xff]
    %v258 = vld [vmem:[%s4 + $0xa0] sm:$0xff]
    %v259 = vld [vmem:[%s4 + $0xa8] sm:$0xff]
    %v260 = vld [vmem:[%s4 + $0xb0] sm:$0xff]
    %v261 = vld [vmem:[%s4 + $0xb8] sm:$0xff]
    %v262 = vld [vmem:[%s4 + $0xc0] sm:$0xff]
    %v263 = vld [vmem:[%s4 + $0xc8] sm:$0xff]
    %v264 = vld [vmem:[%s4 + $0xd0] sm:$0xff]
    %v265 = vld [vmem:[%s4 + $0xd8] sm:$0xff]
    %v266 = vld [vmem:[%s4 + $0xe0] sm:$0xff]
    %v267 = vld [vmem:[%s4 + $0xe8] sm:$0xff]
    %v268 = vld [vmem:[%s4 + $0xf0] sm:$0xff]
    %v269 = vld [vmem:[%s4 + $0xf8] sm:$0xff]
    %v270 = vld [vmem:[%s4 + $0x100] sm:$0xff]
    %v271 = vld [vmem:[%s4 + $0x108] sm:$0xff]
    %v272 = vld [vmem:[%s4 + $0x110] sm:$0xff]
    %v273 = vld [vmem:[%s4 + $0x118] sm:$0xff]
    %v274 = vld [vmem:[%s4 + $0x120] sm:$0xff]
    %v275 = vld [vmem:[%s4 + $0x128] sm:$0xff]
    %v276 = vld [vmem:[%s4 + $0x130] sm:$0xff]
    %v277 = vld [vmem:[%s4 + $0x138] sm:$0xff]
    %v278 = vld [vmem:[%s4 + $0x140] sm:$0xff]
    %v279 = vld [vmem:[%s4 + $0x148] sm:$0xff]
    %v280 = vld [vmem:[%s4 + $0x150] sm:$0xff]
    %v281 = vld [vmem:[%s4 + $0x158] sm:$0xff]
    %v282 = vld [vmem:[%s4 + $0x160] sm:$0xff]
    %v283 = vld [vmem:[%s4 + $0x168] sm:$0xff]
    %v284 = vld [vmem:[%s4 + $0x170] sm:$0xff]
    %v285 = vld [vmem:[%s4 + $0x178] sm:$0xff]
    %v334 = vunpack.c.l.b16 %v238
    %v335 = vunpack.c.h.b16 %v238
    %v336 = vunpack.c.l.b16 %v239
    %v337 = vunpack.c.h.b16 %v239
    %v338 = vunpack.c.l.b16 %v240
    %v339 = vunpack.c.h.b16 %v240
    %v340 = vunpack.c.l.b16 %v241
    %v341 = vunpack.c.h.b16 %v241
    %v342 = vunpack.c.l.b16 %v242
    %v343 = vunpack.c.h.b16 %v242
    %v344 = vunpack.c.l.b16 %v243
    %v345 = vunpack.c.h.b16 %v243
    %v346 = vunpack.c.l.b16 %v244
    %v347 = vunpack.c.h.b16 %v244
    %v348 = vunpack.c.l.b16 %v245
    %v349 = vunpack.c.h.b16 %v245
    %v350 = vunpack.c.l.b16 %v246
    %v351 = vunpack.c.h.b16 %v246
    %v352 = vunpack.c.l.b16 %v247
    %v353 = vunpack.c.h.b16 %v247
    %v354 = vunpack.c.l.b16 %v248
    %v355 = vunpack.c.h.b16 %v248
    %v356 = vunpack.c.l.b16 %v249
    %v357 = vunpack.c.h.b16 %v249
    %v358 = vunpack.c.l.b16 %v250
    %v359 = vunpack.c.h.b16 %v250
    %v360 = vunpack.c.l.b16 %v251
    %v361 = vunpack.c.h.b16 %v251
    %v362 = vunpack.c.l.b16 %v252
    %v363 = vunpack.c.h.b16 %v252
    %v364 = vunpack.c.l.b16 %v253
    %v365 = vunpack.c.h.b16 %v253
    %v366 = vunpack.c.l.b16 %v254
    %v367 = vunpack.c.h.b16 %v254
    %v368 = vunpack.c.l.b16 %v255
    %v369 = vunpack.c.h.b16 %v255
    %v370 = vunpack.c.l.b16 %v256
    %v371 = vunpack.c.h.b16 %v256
    %v372 = vunpack.c.l.b16 %v257
    %v373 = vunpack.c.h.b16 %v257
    %v374 = vunpack.c.l.b16 %v258
    %v375 = vunpack.c.h.b16 %v258
    %v376 = vunpack.c.l.b16 %v259
    %v377 = vunpack.c.h.b16 %v259
    %v378 = vunpack.c.l.b16 %v260
    %v379 = vunpack.c.h.b16 %v260
    %v380 = vunpack.c.l.b16 %v261
    %v381 = vunpack.c.h.b16 %v261
    %v382 = vunpack.c.l.b16 %v262
    %v383 = vunpack.c.h.b16 %v262
    %v384 = vunpack.c.l.b16 %v263
    %v385 = vunpack.c.h.b16 %v263
    %v386 = vunpack.c.l.b16 %v264
    %v387 = vunpack.c.h.b16 %v264
    %v388 = vunpack.c.l.b16 %v265
    %v389 = vunpack.c.h.b16 %v265
    %v390 = vunpack.c.l.b16 %v266
    %v391 = vunpack.c.h.b16 %v266
    %v392 = vunpack.c.l.b16 %v267
    %v393 = vunpack.c.h.b16 %v267
    %v394 = vunpack.c.l.b16 %v268
    %v395 = vunpack.c.h.b16 %v268
    %v396 = vunpack.c.l.b16 %v269
    %v397 = vunpack.c.h.b16 %v269
    %v398 = vunpack.c.l.b16 %v270
    %v399 = vunpack.c.h.b16 %v270
    %v400 = vunpack.c.l.b16 %v271
    %v401 = vunpack.c.h.b16 %v271
    %v402 = vunpack.c.l.b16 %v272
    %v403 = vunpack.c.h.b16 %v272
    %v404 = vunpack.c.l.b16 %v273
    %v405 = vunpack.c.h.b16 %v273
    %v406 = vunpack.c.l.b16 %v274
    %v407 = vunpack.c.h.b16 %v274
    %v408 = vunpack.c.l.b16 %v275
    %v409 = vunpack.c.h.b16 %v275
    %v410 = vunpack.c.l.b16 %v276
    %v411 = vunpack.c.h.b16 %v276
    %v412 = vunpack.c.l.b16 %v277
    %v413 = vunpack.c.h.b16 %v277
    %v414 = vunpack.c.l.b16 %v278
    %v415 = vunpack.c.h.b16 %v278
    %v416 = vunpack.c.l.b16 %v279
    %v417 = vunpack.c.h.b16 %v279
    %v418 = vunpack.c.l.b16 %v280
    %v419 = vunpack.c.h.b16 %v280
    %v420 = vunpack.c.l.b16 %v281
    %v421 = vunpack.c.h.b16 %v281
    %v422 = vunpack.c.l.b16 %v282
    %v423 = vunpack.c.h.b16 %v282
    %v424 = vunpack.c.l.b16 %v283
    %v425 = vunpack.c.h.b16 %v283
    %v426 = vunpack.c.l.b16 %v284
    %v427 = vunpack.c.h.b16 %v284
    %v428 = vunpack.c.l.b16 %v285
    %v429 = vunpack.c.h.b16 %v285
    %v430 = vpack.c.b16 %v358, %v334
    %v431 = vpack.c.b16 %v359, %v335
    %v432 = vpack.c.b16 %v360, %v336
    %v433 = vpack.c.b16 %v361, %v337
    %v434 = vpack.c.b16 %v362, %v338
    %v435 = vpack.c.b16 %v363, %v339
    %v436 = vpack.c.b16 %v364, %v340
    %v437 = vpack.c.b16 %v365, %v341
    %v438 = vpack.c.b16 %v366, %v342
    %v439 = vpack.c.b16 %v367, %v343
    %v440 = vpack.c.b16 %v368, %v344
    %v441 = vpack.c.b16 %v369, %v345
    %v442 = vpack.c.b16 %v370, %v346
    %v443 = vpack.c.b16 %v371, %v347
    %v444 = vpack.c.b16 %v372, %v348
    %v445 = vpack.c.b16 %v373, %v349
    %v446 = vpack.c.b16 %v374, %v350
    %v447 = vpack.c.b16 %v375, %v351
    %v448 = vpack.c.b16 %v376, %v352
    %v449 = vpack.c.b16 %v377, %v353
    %v450 = vpack.c.b16 %v378, %v354
    %v451 = vpack.c.b16 %v379, %v355
    %v452 = vpack.c.b16 %v380, %v356
    %v453 = vpack.c.b16 %v381, %v357
    %v454 = vpack.c.b16 %v406, %v382
    %v455 = vpack.c.b16 %v407, %v383
    %v456 = vpack.c.b16 %v408, %v384
    %v457 = vpack.c.b16 %v409, %v385
    %v458 = vpack.c.b16 %v410, %v386
    %v459 = vpack.c.b16 %v411, %v387
    %v460 = vpack.c.b16 %v412, %v388
    %v461 = vpack.c.b16 %v413, %v389
    %v462 = vpack.c.b16 %v414, %v390
    %v463 = vpack.c.b16 %v415, %v391
    %v464 = vpack.c.b16 %v416, %v392
    %v465 = vpack.c.b16 %v417, %v393
    %v466 = vpack.c.b16 %v418, %v394
    %v467 = vpack.c.b16 %v419, %v395
    %v468 = vpack.c.b16 %v420, %v396
    %v469 = vpack.c.b16 %v421, %v397
    %v470 = vpack.c.b16 %v422, %v398
    %v471 = vpack.c.b16 %v423, %v399
    %v472 = vpack.c.b16 %v424, %v400
    %v473 = vpack.c.b16 %v425, %v401
    %v474 = vpack.c.b16 %v426, %v402
    %v475 = vpack.c.b16 %v427, %v403
    %v476 = vpack.c.b16 %v428, %v404
    %v477 = vpack.c.b16 %v429, %v405
    %vm526 = vcmask 261120
    %v528 = vsel %vm526, %v237, 0
    %530 = vmatprep.subr.bf16.mxu0 %v431
    %531 = vmatpush1.bf16.msra.mxu0 %v430
    %532 = vmatprep.subr.bf16.mxu0 %v455
    %533 = vmatpush1.bf16.msra.mxu0 %v454
    %534 = vmatprep.subr.bf16.mxu0 0
    %535 = vmatpush1.bf16.msra.mxu0 0
    %536 = vmatprep.subr.bf16.mxu0 0
    %537 = vmatpush1.bf16.msra.mxu0 0
    %538 = vmatprep.subr.bf16.mxu0 0
    %539 = vmatpush1.bf16.msra.mxu0 0
    %540 = vmatprep.subr.bf16.mxu0 0
    %541 = vmatpush1.bf16.msra.mxu0 0
    %542 = vmatprep.subr.bf16.mxu0 0
    %543 = vmatpush1.bf16.msra.mxu0 0
    %544 = vmatprep.subr.bf16.mxu0 0
    %545 = vmatpush1.bf16.msra.mxu0 0
    %546 = vmatprep.subr.bf16.mxu0 0
    %547 = vmatpush1.bf16.msra.mxu0 0
    %548 = vmatprep.subr.bf16.mxu0 0
    %549 = vmatpush1.bf16.msra.mxu0 0
    %550 = vmatprep.subr.bf16.mxu0 0
    %551 = vmatpush1.bf16.msra.mxu0 0
    %552 = vmatprep.subr.bf16.mxu0 0
    %553 = vmatpush1.bf16.msra.mxu0 0
    %554 = vmatprep.subr.bf16.mxu0 0
    %555 = vmatpush1.bf16.msra.mxu0 0
    %556 = vmatprep.subr.bf16.mxu0 0
    %557 = vmatpush1.bf16.msra.mxu0 0
    %558 = vmatprep.subr.bf16.mxu0 0
    %559 = vmatpush1.bf16.msra.mxu0 0
    %560 = vmatprep.subr.bf16.mxu0 0
    %561 = vmatpush1.bf16.msra.mxu0 0
    %562 = vmatprep.mubr.bf16.mxu0 0
    %563 = vmatmul.mubr.bf16.gmra.mrb[0].mxu0 %v528
    %v564 = vpop.f32.mrb[0].mxu0
    %v565 = vadd.f32 0.0, %v564
    %v566 = vpop.f32.mrb[0].mxu0
    %v567 = vadd.f32 0.0, %v566
    %v568 = vpop.f32.mrb[0].mxu0
    %v569 = vpop.f32.mrb[0].mxu0
    %570 = vdwg.mxu0
    %571 = vmatprep.subr.bf16.mxu0 %v433
    %572 = vmatpush1.bf16.msra.mxu0 %v432
    %573 = vmatprep.subr.bf16.mxu0 %v457
    %574 = vmatpush1.bf16.msra.mxu0 %v456
    %575 = vmatprep.subr.bf16.mxu0 0
    %576 = vmatpush1.bf16.msra.mxu0 0
    %577 = vmatprep.subr.bf16.mxu0 0
    %578 = vmatpush1.bf16.msra.mxu0 0
    %579 = vmatprep.subr.bf16.mxu0 0
    %580 = vmatpush1.bf16.msra.mxu0 0
    %581 = vmatprep.subr.bf16.mxu0 0
    %582 = vmatpush1.bf16.msra.mxu0 0
    %583 = vmatprep.subr.bf16.mxu0 0
    %584 = vmatpush1.bf16.msra.mxu0 0
    %585 = vmatprep.subr.bf16.mxu0 0
    %586 = vmatpush1.bf16.msra.mxu0 0
    %587 = vmatprep.subr.bf16.mxu0 0
    %588 = vmatpush1.bf16.msra.mxu0 0
    %589 = vmatprep.subr.bf16.mxu0 0
    %590 = vmatpush1.bf16.msra.mxu0 0
    %591 = vmatprep.subr.bf16.mxu0 0
    %592 = vmatpush1.bf16.msra.mxu0 0
    %593 = vmatprep.subr.bf16.mxu0 0
    %594 = vmatpush1.bf16.msra.mxu0 0
    %595 = vmatprep.subr.bf16.mxu0 0
    %596 = vmatpush1.bf16.msra.mxu0 0
    %597 = vmatprep.subr.bf16.mxu0 0
    %598 = vmatpush1.bf16.msra.mxu0 0
    %599 = vmatprep.subr.bf16.mxu0 0
    %600 = vmatpush1.bf16.msra.mxu0 0
    %601 = vmatprep.subr.bf16.mxu0 0
    %602 = vmatpush1.bf16.msra.mxu0 0
    %603 = vmatprep.mubr.bf16.mxu0 0
    %604 = vmatmul.mubr.bf16.gmra.mrb[0].mxu0 %v528
    %v605 = vpop.f32.mrb[0].mxu0
    %v606 = vadd.f32 0.0, %v605
    %v607 = vpop.f32.mrb[0].mxu0
    %v608 = vadd.f32 0.0, %v607
    %v609 = vpop.f32.mrb[0].mxu0
    %v610 = vpop.f32.mrb[0].mxu0
    %611 = vdwg.mxu0
    %612 = vmatprep.subr.bf16.mxu0 %v435
    %613 = vmatpush1.bf16.msra.mxu0 %v434
    %614 = vmatprep.subr.bf16.mxu0 %v459
    %615 = vmatpush1.bf16.msra.mxu0 %v458
    %616 = vmatprep.subr.bf16.mxu0 0
    %617 = vmatpush1.bf16.msra.mxu0 0
    %618 = vmatprep.subr.bf16.mxu0 0
    %619 = vmatpush1.bf16.msra.mxu0 0
    %620 = vmatprep.subr.bf16.mxu0 0
    %621 = vmatpush1.bf16.msra.mxu0 0
    %622 = vmatprep.subr.bf16.mxu0 0
    %623 = vmatpush1.bf16.msra.mxu0 0
    %624 = vmatprep.subr.bf16.mxu0 0
    %625 = vmatpush1.bf16.msra.mxu0 0
    %626 = vmatprep.subr.bf16.mxu0 0
    %627 = vmatpush1.bf16.msra.mxu0 0
    %628 = vmatprep.subr.bf16.mxu0 0
    %629 = vmatpush1.bf16.msra.mxu0 0
    %630 = vmatprep.subr.bf16.mxu0 0
    %631 = vmatpush1.bf16.msra.mxu0 0
    %632 = vmatprep.subr.bf16.mxu0 0
    %633 = vmatpush1.bf16.msra.mxu0 0
    %634 = vmatprep.subr.bf16.mxu0 0
    %635 = vmatpush1.bf16.msra.mxu0 0
    %636 = vmatprep.subr.bf16.mxu0 0
    %637 = vmatpush1.bf16.msra.mxu0 0
    %638 = vmatprep.subr.bf16.mxu0 0
    %639 = vmatpush1.bf16.msra.mxu0 0
    %640 = vmatprep.subr.bf16.mxu0 0
    %641 = vmatpush1.bf16.msra.mxu0 0
    %642 = vmatprep.subr.bf16.mxu0 0
    %643 = vmatpush1.bf16.msra.mxu0 0
    %644 = vmatprep.mubr.bf16.mxu0 0
    %645 = vmatmul.mubr.bf16.gmra.mrb[0].mxu0 %v528
    %v646 = vpop.f32.mrb[0].mxu0
    %v647 = vadd.f32 0.0, %v646
    %v648 = vpop.f32.mrb[0].mxu0
    %v649 = vadd.f32 0.0, %v648
    %v650 = vpop.f32.mrb[0].mxu0
    %v651 = vpop.f32.mrb[0].mxu0
    %652 = vdwg.mxu0
    %653 = vmatprep.subr.bf16.mxu0 %v437
    %654 = vmatpush1.bf16.msra.mxu0 %v436
    %655 = vmatprep.subr.bf16.mxu0 %v461
    %656 = vmatpush1.bf16.msra.mxu0 %v460
    %657 = vmatprep.subr.bf16.mxu0 0
    %658 = vmatpush1.bf16.msra.mxu0 0
    %659 = vmatprep.subr.bf16.mxu0 0
    %660 = vmatpush1.bf16.msra.mxu0 0
    %661 = vmatprep.subr.bf16.mxu0 0
    %662 = vmatpush1.bf16.msra.mxu0 0
    %663 = vmatprep.subr.bf16.mxu0 0
    %664 = vmatpush1.bf16.msra.mxu0 0
    %665 = vmatprep.subr.bf16.mxu0 0
    %666 = vmatpush1.bf16.msra.mxu0 0
    %667 = vmatprep.subr.bf16.mxu0 0
    %668 = vmatpush1.bf16.msra.mxu0 0
    %669 = vmatprep.subr.bf16.mxu0 0
    %670 = vmatpush1.bf16.msra.mxu0 0
    %671 = vmatprep.subr.bf16.mxu0 0
    %672 = vmatpush1.bf16.msra.mxu0 0
    %673 = vmatprep.subr.bf16.mxu0 0
    %674 = vmatpush1.bf16.msra.mxu0 0
    %675 = vmatprep.subr.bf16.mxu0 0
    %676 = vmatpush1.bf16.msra.mxu0 0
    %677 = vmatprep.subr.bf16.mxu0 0
    %678 = vmatpush1.bf16.msra.mxu0 0
    %679 = vmatprep.subr.bf16.mxu0 0
    %680 = vmatpush1.bf16.msra.mxu0 0
    %681 = vmatprep.subr.bf16.mxu0 0
    %682 = vmatpush1.bf16.msra.mxu0 0
    %683 = vmatprep.subr.bf16.mxu0 0
    %684 = vmatpush1.bf16.msra.mxu0 0
    %685 = vmatprep.mubr.bf16.mxu0 0
    %686 = vmatmul.mubr.bf16.gmra.mrb[0].mxu0 %v528
    %v687 = vpop.f32.mrb[0].mxu0
    %v688 = vadd.f32 0.0, %v687
    %v689 = vpop.f32.mrb[0].mxu0
    %v690 = vadd.f32 0.0, %v689
    %v691 = vpop.f32.mrb[0].mxu0
    %v692 = vpop.f32.mrb[0].mxu0
    %693 = vdwg.mxu0
    %694 = vmatprep.subr.bf16.mxu0 %v439
    %695 = vmatpush1.bf16.msra.mxu0 %v438
    %696 = vmatprep.subr.bf16.mxu0 %v463
    %697 = vmatpush1.bf16.msra.mxu0 %v462
    %698 = vmatprep.subr.bf16.mxu0 0
    %699 = vmatpush1.bf16.msra.mxu0 0
    %700 = vmatprep.subr.bf16.mxu0 0
    %701 = vmatpush1.bf16.msra.mxu0 0
    %702 = vmatprep.subr.bf16.mxu0 0
    %703 = vmatpush1.bf16.msra.mxu0 0
    %704 = vmatprep.subr.bf16.mxu0 0
    %705 = vmatpush1.bf16.msra.mxu0 0
    %706 = vmatprep.subr.bf16.mxu0 0
    %707 = vmatpush1.bf16.msra.mxu0 0
    %708 = vmatprep.subr.bf16.mxu0 0
    %709 = vmatpush1.bf16.msra.mxu0 0
    %710 = vmatprep.subr.bf16.mxu0 0
    %711 = vmatpush1.bf16.msra.mxu0 0
    %712 = vmatprep.subr.bf16.mxu0 0
    %713 = vmatpush1.bf16.msra.mxu0 0
    %714 = vmatprep.subr.bf16.mxu0 0
    %715 = vmatpush1.bf16.msra.mxu0 0
    %716 = vmatprep.subr.bf16.mxu0 0
    %717 = vmatpush1.bf16.msra.mxu0 0
    %718 = vmatprep.subr.bf16.mxu0 0
    %719 = vmatpush1.bf16.msra.mxu0 0
    %720 = vmatprep.subr.bf16.mxu0 0
    %721 = vmatpush1.bf16.msra.mxu0 0
    %722 = vmatprep.subr.bf16.mxu0 0
    %723 = vmatpush1.bf16.msra.mxu0 0
    %724 = vmatprep.subr.bf16.mxu0 0
    %725 = vmatpush1.bf16.msra.mxu0 0
    %726 = vmatprep.mubr.bf16.mxu0 0
    %727 = vmatmul.mubr.bf16.gmra.mrb[0].mxu0 %v528
    %v728 = vpop.f32.mrb[0].mxu0
    %v729 = vadd.f32 0.0, %v728
    %v730 = vpop.f32.mrb[0].mxu0
    %v731 = vadd.f32 0.0, %v730
    %v732 = vpop.f32.mrb[0].mxu0
    %v733 = vpop.f32.mrb[0].mxu0
    %734 = vdwg.mxu0
    %735 = vmatprep.subr.bf16.mxu0 %v441
    %736 = vmatpush1.bf16.msra.mxu0 %v440
    %737 = vmatprep.subr.bf16.mxu0 %v465
    %738 = vmatpush1.bf16.msra.mxu0 %v464
    %739 = vmatprep.subr.bf16.mxu0 0
    %740 = vmatpush1.bf16.msra.mxu0 0
    %741 = vmatprep.subr.bf16.mxu0 0
    %742 = vmatpush1.bf16.msra.mxu0 0
    %743 = vmatprep.subr.bf16.mxu0 0
    %744 = vmatpush1.bf16.msra.mxu0 0
    %745 = vmatprep.subr.bf16.mxu0 0
    %746 = vmatpush1.bf16.msra.mxu0 0
    %747 = vmatprep.subr.bf16.mxu0 0
    %748 = vmatpush1.bf16.msra.mxu0 0
    %749 = vmatprep.subr.bf16.mxu0 0
    %750 = vmatpush1.bf16.msra.mxu0 0
    %751 = vmatprep.subr.bf16.mxu0 0
    %752 = vmatpush1.bf16.msra.mxu0 0
    %753 = vmatprep.subr.bf16.mxu0 0
    %754 = vmatpush1.bf16.msra.mxu0 0
    %755 = vmatprep.subr.bf16.mxu0 0
    %756 = vmatpush1.bf16.msra.mxu0 0
    %757 = vmatprep.subr.bf16.mxu0 0
    %758 = vmatpush1.bf16.msra.mxu0 0
    %759 = vmatprep.subr.bf16.mxu0 0
    %760 = vmatpush1.bf16.msra.mxu0 0
    %761 = vmatprep.subr.bf16.mxu0 0
    %762 = vmatpush1.bf16.msra.mxu0 0
    %763 = vmatprep.subr.bf16.mxu0 0
    %764 = vmatpush1.bf16.msra.mxu0 0
    %765 = vmatprep.subr.bf16.mxu0 0
    %766 = vmatpush1.bf16.msra.mxu0 0
    %767 = vmatprep.mubr.bf16.mxu0 0
    %768 = vmatmul.mubr.bf16.gmra.mrb[0].mxu0 %v528
    %v769 = vpop.f32.mrb[0].mxu0
    %v770 = vadd.f32 0.0, %v769
    %v771 = vpop.f32.mrb[0].mxu0
    %v772 = vadd.f32 0.0, %v771
    %v773 = vpop.f32.mrb[0].mxu0
    %v774 = vpop.f32.mrb[0].mxu0
    %775 = vdwg.mxu0
    %776 = vmatprep.subr.bf16.mxu0 %v443
    %777 = vmatpush1.bf16.msra.mxu0 %v442
    %778 = vmatprep.subr.bf16.mxu0 %v467
    %779 = vmatpush1.bf16.msra.mxu0 %v466
    %780 = vmatprep.subr.bf16.mxu0 0
    %781 = vmatpush1.bf16.msra.mxu0 0
    %782 = vmatprep.subr.bf16.mxu0 0
    %783 = vmatpush1.bf16.msra.mxu0 0
    %784 = vmatprep.subr.bf16.mxu0 0
    %785 = vmatpush1.bf16.msra.mxu0 0
    %786 = vmatprep.subr.bf16.mxu0 0
    %787 = vmatpush1.bf16.msra.mxu0 0
    %788 = vmatprep.subr.bf16.mxu0 0
    %789 = vmatpush1.bf16.msra.mxu0 0
    %790 = vmatprep.subr.bf16.mxu0 0
    %791 = vmatpush1.bf16.msra.mxu0 0
    %792 = vmatprep.subr.bf16.mxu0 0
    %793 = vmatpush1.bf16.msra.mxu0 0
    %794 = vmatprep.subr.bf16.mxu0 0
    %795 = vmatpush1.bf16.msra.mxu0 0
    %796 = vmatprep.subr.bf16.mxu0 0
    %797 = vmatpush1.bf16.msra.mxu0 0
    %798 = vmatprep.subr.bf16.mxu0 0
    %799 = vmatpush1.bf16.msra.mxu0 0
    %800 = vmatprep.subr.bf16.mxu0 0
    %801 = vmatpush1.bf16.msra.mxu0 0
    %802 = vmatprep.subr.bf16.mxu0 0
    %803 = vmatpush1.bf16.msra.mxu0 0
    %804 = vmatprep.subr.bf16.mxu0 0
    %805 = vmatpush1.bf16.msra.mxu0 0
    %806 = vmatprep.subr.bf16.mxu0 0
    %807 = vmatpush1.bf16.msra.mxu0 0
    %808 = vmatprep.mubr.bf16.mxu0 0
    %809 = vmatmul.mubr.bf16.gmra.mrb[0].mxu0 %v528
    %v810 = vpop.f32.mrb[0].mxu0
    %v811 = vadd.f32 0.0, %v810
    %v812 = vpop.f32.mrb[0].mxu0
    %v813 = vadd.f32 0.0, %v812
    %v814 = vpop.f32.mrb[0].mxu0
    %v815 = vpop.f32.mrb[0].mxu0
    %816 = vdwg.mxu0
    %817 = vmatprep.subr.bf16.mxu0 %v445
    %818 = vmatpush1.bf16.msra.mxu0 %v444
    %819 = vmatprep.subr.bf16.mxu0 %v469
    %820 = vmatpush1.bf16.msra.mxu0 %v468
    %821 = vmatprep.subr.bf16.mxu0 0
    %822 = vmatpush1.bf16.msra.mxu0 0
    %823 = vmatprep.subr.bf16.mxu0 0
    %824 = vmatpush1.bf16.msra.mxu0 0
    %825 = vmatprep.subr.bf16.mxu0 0
    %826 = vmatpush1.bf16.msra.mxu0 0
    %827 = vmatprep.subr.bf16.mxu0 0
    %828 = vmatpush1.bf16.msra.mxu0 0
    %829 = vmatprep.subr.bf16.mxu0 0
    %830 = vmatpush1.bf16.msra.mxu0 0
    %831 = vmatprep.subr.bf16.mxu0 0
    %832 = vmatpush1.bf16.msra.mxu0 0
    %833 = vmatprep.subr.bf16.mxu0 0
    %834 = vmatpush1.bf16.msra.mxu0 0
    %835 = vmatprep.subr.bf16.mxu0 0
    %836 = vmatpush1.bf16.msra.mxu0 0
    %837 = vmatprep.subr.bf16.mxu0 0
    %838 = vmatpush1.bf16.msra.mxu0 0
    %839 = vmatprep.subr.bf16.mxu0 0
    %840 = vmatpush1.bf16.msra.mxu0 0
    %841 = vmatprep.subr.bf16.mxu0 0
    %842 = vmatpush1.bf16.msra.mxu0 0
    %843 = vmatprep.subr.bf16.mxu0 0
    %844 = vmatpush1.bf16.msra.mxu0 0
    %845 = vmatprep.subr.bf16.mxu0 0
    %846 = vmatpush1.bf16.msra.mxu0 0
    %847 = vmatprep.subr.bf16.mxu0 0
    %848 = vmatpush1.bf16.msra.mxu0 0
    %849 = vmatprep.mubr.bf16.mxu0 0
    %850 = vmatmul.mubr.bf16.gmra.mrb[0].mxu0 %v528
    %v851 = vpop.f32.mrb[0].mxu0
    %v852 = vadd.f32 0.0, %v851
    %v853 = vpop.f32.mrb[0].mxu0
    %v854 = vadd.f32 0.0, %v853
    %v855 = vpop.f32.mrb[0].mxu0
    %v856 = vpop.f32.mrb[0].mxu0
    %857 = vdwg.mxu0
    %858 = vmatprep.subr.bf16.mxu0 %v447
    %859 = vmatpush1.bf16.msra.mxu0 %v446
    %860 = vmatprep.subr.bf16.mxu0 %v471
    %861 = vmatpush1.bf16.msra.mxu0 %v470
    %862 = vmatprep.subr.bf16.mxu0 0
    %863 = vmatpush1.bf16.msra.mxu0 0
    %864 = vmatprep.subr.bf16.mxu0 0
    %865 = vmatpush1.bf16.msra.mxu0 0
    %866 = vmatprep.subr.bf16.mxu0 0
    %867 = vmatpush1.bf16.msra.mxu0 0
    %868 = vmatprep.subr.bf16.mxu0 0
    %869 = vmatpush1.bf16.msra.mxu0 0
    %870 = vmatprep.subr.bf16.mxu0 0
    %871 = vmatpush1.bf16.msra.mxu0 0
    %872 = vmatprep.subr.bf16.mxu0 0
    %873 = vmatpush1.bf16.msra.mxu0 0
    %874 = vmatprep.subr.bf16.mxu0 0
    %875 = vmatpush1.bf16.msra.mxu0 0
    %876 = vmatprep.subr.bf16.mxu0 0
    %877 = vmatpush1.bf16.msra.mxu0 0
    %878 = vmatprep.subr.bf16.mxu0 0
    %879 = vmatpush1.bf16.msra.mxu0 0
    %880 = vmatprep.subr.bf16.mxu0 0
    %881 = vmatpush1.bf16.msra.mxu0 0
    %882 = vmatprep.subr.bf16.mxu0 0
    %883 = vmatpush1.bf16.msra.mxu0 0
    %884 = vmatprep.subr.bf16.mxu0 0
    %885 = vmatpush1.bf16.msra.mxu0 0
    %886 = vmatprep.subr.bf16.mxu0 0
    %887 = vmatpush1.bf16.msra.mxu0 0
    %888 = vmatprep.subr.bf16.mxu0 0
    %889 = vmatpush1.bf16.msra.mxu0 0
    %890 = vmatprep.mubr.bf16.mxu0 0
    %891 = vmatmul.mubr.bf16.gmra.mrb[0].mxu0 %v528
    %v892 = vpop.f32.mrb[0].mxu0
    %v893 = vadd.f32 0.0, %v892
    %v894 = vpop.f32.mrb[0].mxu0
    %v895 = vadd.f32 0.0, %v894
    %v896 = vpop.f32.mrb[0].mxu0
    %v897 = vpop.f32.mrb[0].mxu0
    %898 = vdwg.mxu0
    %899 = vmatprep.subr.bf16.mxu0 %v449
    %900 = vmatpush1.bf16.msra.mxu0 %v448
    %901 = vmatprep.subr.bf16.mxu0 %v473
    %902 = vmatpush1.bf16.msra.mxu0 %v472
    %903 = vmatprep.subr.bf16.mxu0 0
    %904 = vmatpush1.bf16.msra.mxu0 0
    %905 = vmatprep.subr.bf16.mxu0 0
    %906 = vmatpush1.bf16.msra.mxu0 0
    %907 = vmatprep.subr.bf16.mxu0 0
    %908 = vmatpush1.bf16.msra.mxu0 0
    %909 = vmatprep.subr.bf16.mxu0 0
    %910 = vmatpush1.bf16.msra.mxu0 0
    %911 = vmatprep.subr.bf16.mxu0 0
    %912 = vmatpush1.bf16.msra.mxu0 0
    %913 = vmatprep.subr.bf16.mxu0 0
    %914 = vmatpush1.bf16.msra.mxu0 0
    %915 = vmatprep.subr.bf16.mxu0 0
    %916 = vmatpush1.bf16.msra.mxu0 0
    %917 = vmatprep.subr.bf16.mxu0 0
    %918 = vmatpush1.bf16.msra.mxu0 0
    %919 = vmatprep.subr.bf16.mxu0 0
    %920 = vmatpush1.bf16.msra.mxu0 0
    %921 = vmatprep.subr.bf16.mxu0 0
    %922 = vmatpush1.bf16.msra.mxu0 0
    %923 = vmatprep.subr.bf16.mxu0 0
    %924 = vmatpush1.bf16.msra.mxu0 0
    %925 = vmatprep.subr.bf16.mxu0 0
    %926 = vmatpush1.bf16.msra.mxu0 0
    %927 = vmatprep.subr.bf16.mxu0 0
    %928 = vmatpush1.bf16.msra.mxu0 0
    %929 = vmatprep.subr.bf16.mxu0 0
    %930 = vmatpush1.bf16.msra.mxu0 0
    %931 = vmatprep.mubr.bf16.mxu0 0
    %932 = vmatmul.mubr.bf16.gmra.mrb[0].mxu0 %v528
    %v933 = vpop.f32.mrb[0].mxu0
    %v934 = vadd.f32 0.0, %v933
    %v935 = vpop.f32.mrb[0].mxu0
    %v936 = vadd.f32 0.0, %v935
    %v937 = vpop.f32.mrb[0].mxu0
    %v938 = vpop.f32.mrb[0].mxu0
    %939 = vdwg.mxu0
    %940 = vmatprep.subr.bf16.mxu0 %v451
    %941 = vmatpush1.bf16.msra.mxu0 %v450
    %942 = vmatprep.subr.bf16.mxu0 %v475
    %943 = vmatpush1.bf16.msra.mxu0 %v474
    %944 = vmatprep.subr.bf16.mxu0 0
    %945 = vmatpush1.bf16.msra.mxu0 0
    %946 = vmatprep.subr.bf16.mxu0 0
    %947 = vmatpush1.bf16.msra.mxu0 0
    %948 = vmatprep.subr.bf16.mxu0 0
    %949 = vmatpush1.bf16.msra.mxu0 0
    %950 = vmatprep.subr.bf16.mxu0 0
    %951 = vmatpush1.bf16.msra.mxu0 0
    %952 = vmatprep.subr.bf16.mxu0 0
    %953 = vmatpush1.bf16.msra.mxu0 0
    %954 = vmatprep.subr.bf16.mxu0 0
    %955 = vmatpush1.bf16.msra.mxu0 0
    %956 = vmatprep.subr.bf16.mxu0 0
    %957 = vmatpush1.bf16.msra.mxu0 0
    %958 = vmatprep.subr.bf16.mxu0 0
    %959 = vmatpush1.bf16.msra.mxu0 0
    %960 = vmatprep.subr.bf16.mxu0 0
    %961 = vmatpush1.bf16.msra.mxu0 0
    %962 = vmatprep.subr.bf16.mxu0 0
    %963 = vmatpush1.bf16.msra.mxu0 0
    %964 = vmatprep.subr.bf16.mxu0 0
    %965 = vmatpush1.bf16.msra.mxu0 0
    %966 = vmatprep.subr.bf16.mxu0 0
    %967 = vmatpush1.bf16.msra.mxu0 0
    %968 = vmatprep.subr.bf16.mxu0 0
    %969 = vmatpush1.bf16.msra.mxu0 0
    %970 = vmatprep.subr.bf16.mxu0 0
    %971 = vmatpush1.bf16.msra.mxu0 0
    %972 = vmatprep.mubr.bf16.mxu0 0
    %973 = vmatmul.mubr.bf16.gmra.mrb[0].mxu0 %v528
    %v974 = vpop.f32.mrb[0].mxu0
    %v975 = vadd.f32 0.0, %v974
    %v976 = vpop.f32.mrb[0].mxu0
    %v977 = vadd.f32 0.0, %v976
    %v978 = vpop.f32.mrb[0].mxu0
    %v979 = vpop.f32.mrb[0].mxu0
    %980 = vdwg.mxu0
    %981 = vmatprep.subr.bf16.mxu0 %v453
    %982 = vmatpush1.bf16.msra.mxu0 %v452
    %983 = vmatprep.subr.bf16.mxu0 %v477
    %984 = vmatpush1.bf16.msra.mxu0 %v476
    %985 = vmatprep.subr.bf16.mxu0 0
    %986 = vmatpush1.bf16.msra.mxu0 0
    %987 = vmatprep.subr.bf16.mxu0 0
    %988 = vmatpush1.bf16.msra.mxu0 0
    %989 = vmatprep.subr.bf16.mxu0 0
    %990 = vmatpush1.bf16.msra.mxu0 0
    %991 = vmatprep.subr.bf16.mxu0 0
    %992 = vmatpush1.bf16.msra.mxu0 0
    %993 = vmatprep.subr.bf16.mxu0 0
    %994 = vmatpush1.bf16.msra.mxu0 0
    %995 = vmatprep.subr.bf16.mxu0 0
    %996 = vmatpush1.bf16.msra.mxu0 0
    %997 = vmatprep.subr.bf16.mxu0 0
    %998 = vmatpush1.bf16.msra.mxu0 0
    %999 = vmatprep.subr.bf16.mxu0 0
    %1000 = vmatpush1.bf16.msra.mxu0 0
    %1001 = vmatprep.subr.bf16.mxu0 0
    %1002 = vmatpush1.bf16.msra.mxu0 0
    %1003 = vmatprep.subr.bf16.mxu0 0
    %1004 = vmatpush1.bf16.msra.mxu0 0
    %1005 = vmatprep.subr.bf16.mxu0 0
    %1006 = vmatpush1.bf16.msra.mxu0 0
    %1007 = vmatprep.subr.bf16.mxu0 0
    %1008 = vmatpush1.bf16.msra.mxu0 0
    %1009 = vmatprep.subr.bf16.mxu0 0
    %1010 = vmatpush1.bf16.msra.mxu0 0
    %1011 = vmatprep.subr.bf16.mxu0 0
    %1012 = vmatpush1.bf16.msra.mxu0 0
    %1013 = vmatprep.mubr.bf16.mxu0 0
    %1014 = vmatmul.mubr.bf16.gmra.mrb[0].mxu0 %v528
    %v1015 = vpop.f32.mrb[0].mxu0
    %v1016 = vadd.f32 0.0, %v1015
    %v1017 = vpop.f32.mrb[0].mxu0
    %v1018 = vadd.f32 0.0, %v1017
    %v1019 = vpop.f32.mrb[0].mxu0
    %v1020 = vpop.f32.mrb[0].mxu0
    %1021 = vdwg.mxu0
    %v1022 = vld [vmem:[#allocation5] sm:$0xff]
    %v1023 = vld [vmem:[#allocation5 + $0x8] sm:$0xff]
    %v1024 = vld [vmem:[#allocation5 + $0x10] sm:$0xff]
    %v1028 = vlaneseq
    %v1029 = vshrl.u32 %v1028, 7
    %v1030 = vsub.s32 0, %v1029
    %v1031 = vrot.slane %v1022, %v1030
    %v1032 = vlaneseq
    %v1033 = vshrl.u32 %v1032, 7
    %v1034 = vsub.s32 1, %v1033
    %v1035 = vrot.slane %v1022, %v1034
    %v1036 = vlaneseq
    %v1037 = vshrl.u32 %v1036, 7
    %v1038 = vsub.s32 2, %v1037
    %v1039 = vrot.slane %v1022, %v1038
    %v1040 = vlaneseq
    %v1041 = vshrl.u32 %v1040, 7
    %v1042 = vsub.s32 3, %v1041
    %v1043 = vrot.slane %v1022, %v1042
    %v1044 = vlaneseq
    %v1045 = vshrl.u32 %v1044, 7
    %v1046 = vsub.s32 4, %v1045
    %v1047 = vrot.slane %v1022, %v1046
    %v1048 = vlaneseq
    %v1049 = vshrl.u32 %v1048, 7
    %v1050 = vsub.s32 5, %v1049
    %v1051 = vrot.slane %v1022, %v1050
    %v1052 = vlaneseq
    %v1053 = vshrl.u32 %v1052, 7
    %v1054 = vsub.s32 6, %v1053
    %v1055 = vrot.slane %v1022, %v1054
    %v1056 = vlaneseq
    %v1057 = vshrl.u32 %v1056, 7
    %v1058 = vsub.s32 7, %v1057
    %v1059 = vrot.slane %v1022, %v1058
    %v1060 = vlaneseq
    %v1061 = vshrl.u32 %v1060, 7
    %v1062 = vsub.s32 0, %v1061
    %v1063 = vrot.slane %v1023, %v1062
    %v1064 = vlaneseq
    %v1065 = vshrl.u32 %v1064, 7
    %v1066 = vsub.s32 1, %v1065
    %v1067 = vrot.slane %v1023, %v1066
    %v1068 = vlaneseq
    %v1069 = vshrl.u32 %v1068, 7
    %v1070 = vsub.s32 2, %v1069
    %v1071 = vrot.slane %v1023, %v1070
    %v1072 = vlaneseq
    %v1073 = vshrl.u32 %v1072, 7
    %v1074 = vsub.s32 3, %v1073
    %v1075 = vrot.slane %v1023, %v1074
    %v1076 = vlaneseq
    %v1077 = vshrl.u32 %v1076, 7
    %v1078 = vsub.s32 4, %v1077
    %v1079 = vrot.slane %v1023, %v1078
    %v1080 = vlaneseq
    %v1081 = vshrl.u32 %v1080, 7
    %v1082 = vsub.s32 5, %v1081
    %v1083 = vrot.slane %v1023, %v1082
    %v1084 = vlaneseq
    %v1085 = vshrl.u32 %v1084, 7
    %v1086 = vsub.s32 6, %v1085
    %v1087 = vrot.slane %v1023, %v1086
    %v1088 = vlaneseq
    %v1089 = vshrl.u32 %v1088, 7
    %v1090 = vsub.s32 7, %v1089
    %v1091 = vrot.slane %v1023, %v1090
    %v1092 = vlaneseq
    %v1093 = vshrl.u32 %v1092, 7
    %v1094 = vsub.s32 0, %v1093
    %v1095 = vrot.slane %v1024, %v1094
    %v1096 = vlaneseq
    %v1097 = vshrl.u32 %v1096, 7
    %v1098 = vsub.s32 1, %v1097
    %v1099 = vrot.slane %v1024, %v1098
    %v1100 = vlaneseq
    %v1101 = vshrl.u32 %v1100, 7
    %v1102 = vsub.s32 2, %v1101
    %v1103 = vrot.slane %v1024, %v1102
    %v1104 = vlaneseq
    %v1105 = vshrl.u32 %v1104, 7
    %v1106 = vsub.s32 3, %v1105
    %v1107 = vrot.slane %v1024, %v1106
    %v1108 = vlaneseq
    %v1109 = vshrl.u32 %v1108, 7
    %v1110 = vsub.s32 4, %v1109
    %v1111 = vrot.slane %v1024, %v1110
    %v1112 = vlaneseq
    %v1113 = vshrl.u32 %v1112, 7
    %v1114 = vsub.s32 5, %v1113
    %v1115 = vrot.slane %v1024, %v1114
    %v1116 = vlaneseq
    %v1117 = vshrl.u32 %v1116, 7
    %v1118 = vsub.s32 6, %v1117
    %v1119 = vrot.slane %v1024, %v1118
    %v1120 = vlaneseq
    %v1121 = vshrl.u32 %v1120, 7
    %v1122 = vsub.s32 7, %v1121
    %v1123 = vrot.slane %v1024, %v1122
    %v1148 = vmul.f32 %v565, %v1031
    %v1149 = vmul.f32 %v567, %v1035
    %v1150 = vmul.f32 %v606, %v1039
    %v1151 = vmul.f32 %v608, %v1043
    %v1152 = vmul.f32 %v647, %v1047
    %v1153 = vmul.f32 %v649, %v1051
    %v1154 = vmul.f32 %v688, %v1055
    %v1155 = vmul.f32 %v690, %v1059
    %v1156 = vmul.f32 %v729, %v1063
    %v1157 = vmul.f32 %v731, %v1067
    %v1158 = vmul.f32 %v770, %v1071
    %v1159 = vmul.f32 %v772, %v1075
    %v1160 = vmul.f32 %v811, %v1079
    %v1161 = vmul.f32 %v813, %v1083
    %v1162 = vmul.f32 %v852, %v1087
    %v1163 = vmul.f32 %v854, %v1091
    %v1164 = vmul.f32 %v893, %v1095
    %v1165 = vmul.f32 %v895, %v1099
    %v1166 = vmul.f32 %v934, %v1103
    %v1167 = vmul.f32 %v936, %v1107
    %v1168 = vmul.f32 %v975, %v1111
    %v1169 = vmul.f32 %v977, %v1115
    %v1170 = vmul.f32 %v1016, %v1119
    %v1171 = vmul.f32 %v1018, %v1123
    %v1172 = vld [vmem:[#allocation7] sm:$0xff]
    %v1173 = vld [vmem:[#allocation7 + $0x8] sm:$0xff]
    %v1174 = vld [vmem:[#allocation7 + $0x10] sm:$0xff]
    %v1178 = vlaneseq
    %v1179 = vshrl.u32 %v1178, 7
    %v1180 = vsub.s32 0, %v1179
    %v1181 = vrot.slane %v1172, %v1180
    %v1182 = vlaneseq
    %v1183 = vshrl.u32 %v1182, 7
    %v1184 = vsub.s32 1, %v1183
    %v1185 = vrot.slane %v1172, %v1184
    %v1186 = vlaneseq
    %v1187 = vshrl.u32 %v1186, 7
    %v1188 = vsub.s32 2, %v1187
    %v1189 = vrot.slane %v1172, %v1188
    %v1190 = vlaneseq
    %v1191 = vshrl.u32 %v1190, 7
    %v1192 = vsub.s32 3, %v1191
    %v1193 = vrot.slane %v1172, %v1192
    %v1194 = vlaneseq
    %v1195 = vshrl.u32 %v1194, 7
    %v1196 = vsub.s32 4, %v1195
    %v1197 = vrot.slane %v1172, %v1196
    %v1198 = vlaneseq
    %v1199 = vshrl.u32 %v1198, 7
    %v1200 = vsub.s32 5, %v1199
    %v1201 = vrot.slane %v1172, %v1200
    %v1202 = vlaneseq
    %v1203 = vshrl.u32 %v1202, 7
    %v1204 = vsub.s32 6, %v1203
    %v1205 = vrot.slane %v1172, %v1204
    %v1206 = vlaneseq
    %v1207 = vshrl.u32 %v1206, 7
    %v1208 = vsub.s32 7, %v1207
    %v1209 = vrot.slane %v1172, %v1208
    %v1210 = vlaneseq
    %v1211 = vshrl.u32 %v1210, 7
    %v1212 = vsub.s32 0, %v1211
    %v1213 = vrot.slane %v1173, %v1212
    %v1214 = vlaneseq
    %v1215 = vshrl.u32 %v1214, 7
    %v1216 = vsub.s32 1, %v1215
    %v1217 = vrot.slane %v1173, %v1216
    %v1218 = vlaneseq
    %v1219 = vshrl.u32 %v1218, 7
    %v1220 = vsub.s32 2, %v1219
    %v1221 = vrot.slane %v1173, %v1220
    %v1222 = vlaneseq
    %v1223 = vshrl.u32 %v1222, 7
    %v1224 = vsub.s32 3, %v1223
    %v1225 = vrot.slane %v1173, %v1224
    %v1226 = vlaneseq
    %v1227 = vshrl.u32 %v1226, 7
    %v1228 = vsub.s32 4, %v1227
    %v1229 = vrot.slane %v1173, %v1228
    %v1230 = vlaneseq
    %v1231 = vshrl.u32 %v1230, 7
    %v1232 = vsub.s32 5, %v1231
    %v1233 = vrot.slane %v1173, %v1232
    %v1234 = vlaneseq
    %v1235 = vshrl.u32 %v1234, 7
    %v1236 = vsub.s32 6, %v1235
    %v1237 = vrot.slane %v1173, %v1236
    %v1238 = vlaneseq
    %v1239 = vshrl.u32 %v1238, 7
    %v1240 = vsub.s32 7, %v1239
    %v1241 = vrot.slane %v1173, %v1240
    %v1242 = vlaneseq
    %v1243 = vshrl.u32 %v1242, 7
    %v1244 = vsub.s32 0, %v1243
    %v1245 = vrot.slane %v1174, %v1244
    %v1246 = vlaneseq
    %v1247 = vshrl.u32 %v1246, 7
    %v1248 = vsub.s32 1, %v1247
    %v1249 = vrot.slane %v1174, %v1248
    %v1250 = vlaneseq
    %v1251 = vshrl.u32 %v1250, 7
    %v1252 = vsub.s32 2, %v1251
    %v1253 = vrot.slane %v1174, %v1252
    %v1254 = vlaneseq
    %v1255 = vshrl.u32 %v1254, 7
    %v1256 = vsub.s32 3, %v1255
    %v1257 = vrot.slane %v1174, %v1256
    %v1258 = vlaneseq
    %v1259 = vshrl.u32 %v1258, 7
    %v1260 = vsub.s32 4, %v1259
    %v1261 = vrot.slane %v1174, %v1260
    %v1262 = vlaneseq
    %v1263 = vshrl.u32 %v1262, 7
    %v1264 = vsub.s32 5, %v1263
    %v1265 = vrot.slane %v1174, %v1264
    %v1266 = vlaneseq
    %v1267 = vshrl.u32 %v1266, 7
    %v1268 = vsub.s32 6, %v1267
    %v1269 = vrot.slane %v1174, %v1268
    %v1270 = vlaneseq
    %v1271 = vshrl.u32 %v1270, 7
    %v1272 = vsub.s32 7, %v1271
    %v1273 = vrot.slane %v1174, %v1272
    %v1298 = vadd.f32 %v1148, %v1181
    %v1299 = vadd.f32 %v1149, %v1185
    %v1300 = vadd.f32 %v1150, %v1189
    %v1301 = vadd.f32 %v1151, %v1193
    %v1302 = vadd.f32 %v1152, %v1197
    %v1303 = vadd.f32 %v1153, %v1201
    %v1304 = vadd.f32 %v1154, %v1205
    %v1305 = vadd.f32 %v1155, %v1209
    %v1306 = vadd.f32 %v1156, %v1213
    %v1307 = vadd.f32 %v1157, %v1217
    %v1308 = vadd.f32 %v1158, %v1221
    %v1309 = vadd.f32 %v1159, %v1225
    %v1310 = vadd.f32 %v1160, %v1229
    %v1311 = vadd.f32 %v1161, %v1233
    %v1312 = vadd.f32 %v1162, %v1237
    %v1313 = vadd.f32 %v1163, %v1241
    %v1314 = vadd.f32 %v1164, %v1245
    %v1315 = vadd.f32 %v1165, %v1249
    %v1316 = vadd.f32 %v1166, %v1253
    %v1317 = vadd.f32 %v1167, %v1257
    %v1318 = vadd.f32 %v1168, %v1261
    %v1319 = vadd.f32 %v1169, %v1265
    %v1320 = vadd.f32 %v1170, %v1269
    %v1321 = vadd.f32 %v1171, %v1273
    %1322 = vst [vmem:[#allocation2] sm:$0x1] %v1298
    %1323 = vst [vmem:[#allocation2 + $0x1] sm:$0x1] %v1299
    %1324 = vst [vmem:[#allocation2 + $0x2] sm:$0x1] %v1300
    %1325 = vst [vmem:[#allocation2 + $0x3] sm:$0x1] %v1301
    %1326 = vst [vmem:[#allocation2 + $0x4] sm:$0x1] %v1302
    %1327 = vst [vmem:[#allocation2 + $0x5] sm:$0x1] %v1303
    %1328 = vst [vmem:[#allocation2 + $0x6] sm:$0x1] %v1304
    %1329 = vst [vmem:[#allocation2 + $0x7] sm:$0x1] %v1305
    %1330 = vst [vmem:[#allocation2 + $0x8] sm:$0x1] %v1306
    %1331 = vst [vmem:[#allocation2 + $0x9] sm:$0x1] %v1307
    %1332 = vst [vmem:[#allocation2 + $0xa] sm:$0x1] %v1308
    %1333 = vst [vmem:[#allocation2 + $0xb] sm:$0x1] %v1309
    %1334 = vst [vmem:[#allocation2 + $0xc] sm:$0x1] %v1310
    %1335 = vst [vmem:[#allocation2 + $0xd] sm:$0x1] %v1311
    %1336 = vst [vmem:[#allocation2 + $0xe] sm:$0x1] %v1312
    %1337 = vst [vmem:[#allocation2 + $0xf] sm:$0x1] %v1313
    %1338 = vst [vmem:[#allocation2 + $0x10] sm:$0x1] %v1314
    %1339 = vst [vmem:[#allocation2 + $0x11] sm:$0x1] %v1315
    %1340 = vst [vmem:[#allocation2 + $0x12] sm:$0x1] %v1316
    %1341 = vst [vmem:[#allocation2 + $0x13] sm:$0x1] %v1317
    %1342 = vst [vmem:[#allocation2 + $0x14] sm:$0x1] %v1318
    %1343 = vst [vmem:[#allocation2 + $0x15] sm:$0x1] %v1319
    %1344 = vst [vmem:[#allocation2 + $0x16] sm:$0x1] %v1320
    %1345 = vst [vmem:[#allocation2 + $0x17] sm:$0x1] %v1321
    %s1346 = scalar_lea.vmem [#allocation2], 24
    %1347 = vst [vmem:[%s1346 - $0x1] sm:$0x2] %v1298
    %1348 = vst [vmem:[%s1346] sm:$0x2] %v1299
    %1349 = vst [vmem:[%s1346 + $0x1] sm:$0x2] %v1300
    %1350 = vst [vmem:[%s1346 + $0x2] sm:$0x2] %v1301
    %1351 = vst [vmem:[%s1346 + $0x3] sm:$0x2] %v1302
    %1352 = vst [vmem:[%s1346 + $0x4] sm:$0x2] %v1303
    %1353 = vst [vmem:[%s1346 + $0x5] sm:$0x2] %v1304
    %1354 = vst [vmem:[%s1346 + $0x6] sm:$0x2] %v1305
    %1355 = vst [vmem:[%s1346 + $0x7] sm:$0x2] %v1306
    %1356 = vst [vmem:[%s1346 + $0x8] sm:$0x2] %v1307
    %1357 = vst [vmem:[%s1346 + $0x9] sm:$0x2] %v1308
    %1358 = vst [vmem:[%s1346 + $0xa] sm:$0x2] %v1309
    %1359 = vst [vmem:[%s1346 + $0xb] sm:$0x2] %v1310
    %1360 = vst [vmem:[%s1346 + $0xc] sm:$0x2] %v1311
    %1361 = vst [vmem:[%s1346 + $0xd] sm:$0x2] %v1312
    %1362 = vst [vmem:[%s1346 + $0xe] sm:$0x2] %v1313
    %1363 = vst [vmem:[%s1346 + $0xf] sm:$0x2] %v1314
    %1364 = vst [vmem:[%s1346 + $0x10] sm:$0x2] %v1315
    %1365 = vst [vmem:[%s1346 + $0x11] sm:$0x2] %v1316
    %1366 = vst [vmem:[%s1346 + $0x12] sm:$0x2] %v1317
    %1367 = vst [vmem:[%s1346 + $0x13] sm:$0x2] %v1318
    %1368 = vst [vmem:[%s1346 + $0x14] sm:$0x2] %v1319
    %1369 = vst [vmem:[%s1346 + $0x15] sm:$0x2] %v1320
    %1370 = vst [vmem:[%s1346 + $0x16] sm:$0x2] %v1321
    %v1371 = vld [vmem:[#allocation9] sm:$0xff]
    %v1372 = vld [vmem:[#allocation9 + $0x8] sm:$0xff]
    %v1373 = vld [vmem:[#allocation9 + $0x10] sm:$0xff]
    %v1374 = vld [vmem:[#allocation9 + $0x18] sm:$0xff]
    %v1375 = vld [vmem:[#allocation10] sm:$0xff]
    %v1376 = vld [vmem:[#allocation10 + $0x8] sm:$0xff]
    %v1377 = vld [vmem:[#allocation12] sm:$0x1]
    %v1378 = vld [vmem:[#allocation12 + $0x1] sm:$0x1]
    %v1379 = vld [vmem:[#allocation12 + $0x2] sm:$0x1]
    %v1380 = vld [vmem:[#allocation12 + $0x3] sm:$0x1]
    %v1381 = vld [vmem:[#allocation12 + $0x4] sm:$0x1]
    %v1382 = vld [vmem:[#allocation12 + $0x5] sm:$0x1]
    %v1383 = vld [vmem:[#allocation12 + $0x6] sm:$0x1]
    %v1384 = vld [vmem:[#allocation12 + $0x7] sm:$0x1]
    %v1385 = vld [vmem:[#allocation12 + $0x8] sm:$0x1]
    %v1386 = vld [vmem:[#allocation12 + $0x9] sm:$0x1]
    %v1387 = vld [vmem:[#allocation12 + $0xa] sm:$0x1]
    %v1388 = vld [vmem:[#allocation12 + $0xb] sm:$0x1]
    %v1389 = vld [vmem:[#allocation12 + $0xc] sm:$0x1]
    %v1390 = vld [vmem:[#allocation12 + $0xd] sm:$0x1]
    %v1391 = vld [vmem:[#allocation12 + $0xe] sm:$0x1]
    %v1392 = vld [vmem:[#allocation12 + $0xf] sm:$0x1]
    %v1393 = vld [vmem:[#allocation12 + $0x10] sm:$0x1]
    %v1394 = vld [vmem:[#allocation12 + $0x11] sm:$0x1]
    %v1395 = vld [vmem:[#allocation12 + $0x12] sm:$0x1]
    %v1396 = vld [vmem:[#allocation12 + $0x13] sm:$0x1]
    %v1397 = vld [vmem:[#allocation12 + $0x14] sm:$0x1]
    %v1398 = vld [vmem:[#allocation12 + $0x15] sm:$0x1]
    %v1399 = vld [vmem:[#allocation12 + $0x16] sm:$0x1]
    %v1400 = vld [vmem:[#allocation12 + $0x17] sm:$0x1]
    %v1401 = vld [vmem:[#allocation12 + $0x18] sm:$0x1]
    %v1402 = vld [vmem:[#allocation12 + $0x19] sm:$0x1]
    %v1403 = vld [vmem:[#allocation12 + $0x1a] sm:$0x1]
    %v1404 = vld [vmem:[%s9] sm:$0xff]
    %1406 = vrot.lane.b32.xlu0 %v1404, 21
    %v1407 = vpop.permute.xlu0 %1406
    %vm1409 = vcmask 171008
    %v1410 = vsel %vm1409, 0.0, %v1407
    %v1411 = vlaneseq
    %v1412 = vshrl.u32 %v1411, 7
    %v1413 = vsub.s32 0, %v1412
    %v1414 = vrot.slane %v1377, %v1413
    %v1415 = vmul.f32 %v1414, %v1410
    %1416 = vrot.lane.b32.xlu0 %v1404, 20
    %v1417 = vpop.permute.xlu0 %1416
    %vm1419 = vcmask 162816
    %v1420 = vsel %vm1419, 0.0, %v1417
    %v1421 = vlaneseq
    %v1422 = vshrl.u32 %v1421, 7
    %v1423 = vsub.s32 0, %v1422
    %v1424 = vrot.slane %v1378, %v1423
    %v1425 = vmul.f32 %v1424, %v1420
    %1426 = vrot.lane.b32.xlu0 %v1404, 19
    %v1427 = vpop.permute.xlu0 %1426
    %vm1429 = vcmask 154624
    %v1430 = vsel %vm1429, 0.0, %v1427
    %v1431 = vlaneseq
    %v1432 = vshrl.u32 %v1431, 7
    %v1433 = vsub.s32 0, %v1432
    %v1434 = vrot.slane %v1379, %v1433
    %v1435 = vmul.f32 %v1434, %v1430
    %1436 = vrot.lane.b32.xlu0 %v1404, 17
    %v1437 = vpop.permute.xlu0 %1436
    %vm1439 = vcmask 138240
    %v1440 = vsel %vm1439, 0.0, %v1437
    %v1441 = vlaneseq
    %v1442 = vshrl.u32 %v1441, 7
    %v1443 = vsub.s32 0, %v1442
    %v1444 = vrot.slane %v1380, %v1443
    %v1445 = vmul.f32 %v1444, %v1440
    %1446 = vrot.lane.b32.xlu0 %v1404, 16
    %v1447 = vpop.permute.xlu0 %1446
    %vm1449 = vcmask 130048
    %v1450 = vsel %vm1449, 0.0, %v1447
    %v1451 = vlaneseq
    %v1452 = vshrl.u32 %v1451, 7
    %v1453 = vsub.s32 0, %v1452
    %v1454 = vrot.slane %v1381, %v1453
    %v1455 = vmul.f32 %v1454, %v1450
    %1456 = vrot.lane.b32.xlu0 %v1404, 15
    %v1457 = vpop.permute.xlu0 %1456
    %vm1459 = vcmask 121856
    %v1460 = vsel %vm1459, 0.0, %v1457
    %v1461 = vlaneseq
    %v1462 = vshrl.u32 %v1461, 7
    %v1463 = vsub.s32 0, %v1462
    %v1464 = vrot.slane %v1382, %v1463
    %v1465 = vmul.f32 %v1464, %v1460
    %1466 = vrot.lane.b32.xlu0 %v1404, 13
    %v1467 = vpop.permute.xlu0 %1466
    %vm1469 = vcmask 105472
    %v1470 = vsel %vm1469, 0.0, %v1467
    %v1471 = vlaneseq
    %v1472 = vshrl.u32 %v1471, 7
    %v1473 = vsub.s32 0, %v1472
    %v1474 = vrot.slane %v1383, %v1473
    %v1475 = vmul.f32 %v1474, %v1470
    %1476 = vrot.lane.b32.xlu0 %v1404, 12
    %v1477 = vpop.permute.xlu0 %1476
    %vm1479 = vcmask 97280
    %v1480 = vsel %vm1479, 0.0, %v1477
    %v1481 = vlaneseq
    %v1482 = vshrl.u32 %v1481, 7
    %v1483 = vsub.s32 0, %v1482
    %v1484 = vrot.slane %v1384, %v1483
    %v1485 = vmul.f32 %v1484, %v1480
    %1486 = vrot.lane.b32.xlu0 %v1404, 11
    %v1487 = vpop.permute.xlu0 %1486
    %vm1489 = vcmask 89088
    %v1490 = vsel %vm1489, 0.0, %v1487
    %v1491 = vlaneseq
    %v1492 = vshrl.u32 %v1491, 7
    %v1493 = vsub.s32 0, %v1492
    %v1494 = vrot.slane %v1385, %v1493
    %v1495 = vmul.f32 %v1494, %v1490
    %1496 = vrot.lane.b32.xlu0 %v1404, 5
    %v1497 = vpop.permute.xlu0 %1496
    %vm1499 = vcmask 39936
    %v1500 = vsel %vm1499, 0.0, %v1497
    %v1501 = vlaneseq
    %v1502 = vshrl.u32 %v1501, 7
    %v1503 = vsub.s32 0, %v1502
    %v1504 = vrot.slane %v1386, %v1503
    %v1505 = vmul.f32 %v1504, %v1500
    %1506 = vrot.lane.b32.xlu0 %v1404, 4
    %v1507 = vpop.permute.xlu0 %1506
    %vm1509 = vcmask 31744
    %v1510 = vsel %vm1509, 0.0, %v1507
    %v1511 = vlaneseq
    %v1512 = vshrl.u32 %v1511, 7
    %v1513 = vsub.s32 0, %v1512
    %v1514 = vrot.slane %v1387, %v1513
    %v1515 = vmul.f32 %v1514, %v1510
    %1516 = vrot.lane.b32.xlu0 %v1404, 3
    %v1517 = vpop.permute.xlu0 %1516
    %vm1519 = vcmask 23552
    %v1520 = vsel %vm1519, 0.0, %v1517
    %v1521 = vlaneseq
    %v1522 = vshrl.u32 %v1521, 7
    %v1523 = vsub.s32 0, %v1522
    %v1524 = vrot.slane %v1388, %v1523
    %v1525 = vmul.f32 %v1524, %v1520
    %1526 = vrot.lane.b32.xlu0 %v1404, 1
    %v1527 = vpop.permute.xlu0 %1526
    %vm1529 = vcmask 7168
    %v1530 = vsel %vm1529, 0.0, %v1527
    %v1531 = vlaneseq
    %v1532 = vshrl.u32 %v1531, 7
    %v1533 = vsub.s32 0, %v1532
    %v1534 = vrot.slane %v1389, %v1533
    %v1535 = vmul.f32 %v1534, %v1530
    %v1536 = vlaneseq
    %v1537 = vshrl.u32 %v1536, 7
    %v1538 = vsub.s32 0, %v1537
    %v1539 = vrot.slane %v1390, %v1538
    %v1540 = vmul.f32 %v1539, %v1404
    %1541 = vrot.lane.b32.xlu0 %v1404, 127
    %v1542 = vpop.permute.xlu0 %1541
    %vm1544 = vcmask 1039360
    %v1545 = vsel %vm1544, %v1542, 0.0
    %v1546 = vlaneseq
    %v1547 = vshrl.u32 %v1546, 7
    %v1548 = vsub.s32 0, %v1547
    %v1549 = vrot.slane %v1391, %v1548
    %v1550 = vmul.f32 %v1549, %v1545
    %1551 = vrot.lane.b32.xlu0 %v1404, 125
    %v1552 = vpop.permute.xlu0 %1551
    %vm1554 = vcmask 1022976
    %v1555 = vsel %vm1554, %v1552, 0.0
    %v1556 = vlaneseq
    %v1557 = vshrl.u32 %v1556, 7
    %v1558 = vsub.s32 0, %v1557
    %v1559 = vrot.slane %v1392, %v1558
    %v1560 = vmul.f32 %v1559, %v1555
    %1561 = vrot.lane.b32.xlu0 %v1404, 124
    %v1562 = vpop.permute.xlu0 %1561
    %vm1564 = vcmask 1014784
    %v1565 = vsel %vm1564, %v1562, 0.0
    %v1566 = vlaneseq
    %v1567 = vshrl.u32 %v1566, 7
    %v1568 = vsub.s32 0, %v1567
    %v1569 = vrot.slane %v1393, %v1568
    %v1570 = vmul.f32 %v1569, %v1565
    %1571 = vrot.lane.b32.xlu0 %v1404, 123
    %v1572 = vpop.permute.xlu0 %1571
    %vm1574 = vcmask 1006592
    %v1575 = vsel %vm1574, %v1572, 0.0
    %v1576 = vlaneseq
    %v1577 = vshrl.u32 %v1576, 7
    %v1578 = vsub.s32 0, %v1577
    %v1579 = vrot.slane %v1394, %v1578
    %v1580 = vmul.f32 %v1579, %v1575
    %1581 = vrot.lane.b32.xlu0 %v1404, 117
    %v1582 = vpop.permute.xlu0 %1581
    %vm1584 = vcmask 957440
    %v1585 = vsel %vm1584, %v1582, 0.0
    %v1586 = vlaneseq
    %v1587 = vshrl.u32 %v1586, 7
    %v1588 = vsub.s32 0, %v1587
    %v1589 = vrot.slane %v1395, %v1588
    %v1590 = vmul.f32 %v1589, %v1585
    %1591 = vrot.lane.b32.xlu0 %v1404, 116
    %v1592 = vpop.permute.xlu0 %1591
    %vm1594 = vcmask 949248
    %v1595 = vsel %vm1594, %v1592, 0.0
    %v1596 = vlaneseq
    %v1597 = vshrl.u32 %v1596, 7
    %v1598 = vsub.s32 0, %v1597
    %v1599 = vrot.slane %v1396, %v1598
    %v1600 = vmul.f32 %v1599, %v1595
    %1601 = vrot.lane.b32.xlu0 %v1404, 115
    %v1602 = vpop.permute.xlu0 %1601
    %vm1604 = vcmask 941056
    %v1605 = vsel %vm1604, %v1602, 0.0
    %v1606 = vlaneseq
    %v1607 = vshrl.u32 %v1606, 7
    %v1608 = vsub.s32 0, %v1607
    %v1609 = vrot.slane %v1397, %v1608
    %v1610 = vmul.f32 %v1609, %v1605
    %1611 = vrot.lane.b32.xlu0 %v1404, 113
    %v1612 = vpop.permute.xlu0 %1611
    %vm1614 = vcmask 924672
    %v1615 = vsel %vm1614, %v1612, 0.0
    %v1616 = vlaneseq
    %v1617 = vshrl.u32 %v1616, 7
    %v1618 = vsub.s32 0, %v1617
    %v1619 = vrot.slane %v1398, %v1618
    %v1620 = vmul.f32 %v1619, %v1615
    %1621 = vrot.lane.b32.xlu0 %v1404, 112
    %v1622 = vpop.permute.xlu0 %1621
    %vm1624 = vcmask 916480
    %v1625 = vsel %vm1624, %v1622, 0.0
    %v1626 = vlaneseq
    %v1627 = vshrl.u32 %v1626, 7
    %v1628 = vsub.s32 0, %v1627
    %v1629 = vrot.slane %v1399, %v1628
    %v1630 = vmul.f32 %v1629, %v1625
    %1631 = vrot.lane.b32.xlu0 %v1404, 111
    %v1632 = vpop.permute.xlu0 %1631
    %vm1634 = vcmask 908288
    %v1635 = vsel %vm1634, %v1632, 0.0
    %v1636 = vlaneseq
    %v1637 = vshrl.u32 %v1636, 7
    %v1638 = vsub.s32 0, %v1637
    %v1639 = vrot.slane %v1400, %v1638
    %v1640 = vmul.f32 %v1639, %v1635
    %1641 = vrot.lane.b32.xlu0 %v1404, 109
    %v1642 = vpop.permute.xlu0 %1641
    %vm1644 = vcmask 891904
    %v1645 = vsel %vm1644, %v1642, 0.0
    %v1646 = vlaneseq
    %v1647 = vshrl.u32 %v1646, 7
    %v1648 = vsub.s32 0, %v1647
    %v1649 = vrot.slane %v1401, %v1648
    %v1650 = vmul.f32 %v1649, %v1645
    %1651 = vrot.lane.b32.xlu0 %v1404, 108
    %v1652 = vpop.permute.xlu0 %1651
    %vm1654 = vcmask 883712
    %v1655 = vsel %vm1654, %v1652, 0.0
    %v1656 = vlaneseq
    %v1657 = vshrl.u32 %v1656, 7
    %v1658 = vsub.s32 0, %v1657
    %v1659 = vrot.slane %v1402, %v1658
    %v1660 = vmul.f32 %v1659, %v1655
    %1661 = vrot.lane.b32.xlu0 %v1404, 107
    %v1662 = vpop.permute.xlu0 %1661
    %vm1664 = vcmask 875520
    %v1665 = vsel %vm1664, %v1662, 0.0
    %v1666 = vlaneseq
    %v1667 = vshrl.u32 %v1666, 7
    %v1668 = vsub.s32 0, %v1667
    %v1669 = vrot.slane %v1403, %v1668
    %v1670 = vmul.f32 %v1669, %v1665
    %vm1671 = vcmask 719872
    %v1673 = vsel %vm1671, %v1372, 0
    %v1676 = vsel %vm1671, %v1374, 0
    %1678 = vmatprep.subr.mxu0 0.0
    %1679 = vmatpush1.msra.mxu0 %v1415
    %1680 = vmatprep.subr.mxu0 0.0
    %1681 = vmatpush1.msra.mxu0 %v1425
    %1682 = vmatprep.subr.mxu0 0.0
    %1683 = vmatpush1.msra.mxu0 %v1435
    %1684 = vmatprep.subr.mxu0 0.0
    %1685 = vmatpush1.msra.mxu0 %v1445
    %1686 = vmatprep.subr.mxu0 0.0
    %1687 = vmatpush1.msra.mxu0 %v1455
    %1688 = vmatprep.subr.mxu0 0.0
    %1689 = vmatpush1.msra.mxu0 %v1465
    %1690 = vmatprep.subr.mxu0 0.0
    %1691 = vmatpush1.msra.mxu0 %v1475
    %1692 = vmatprep.subr.mxu0 0.0
    %1693 = vmatpush1.msra.mxu0 %v1485
    %1694 = vmatprep.subr.mxu0 0.0
    %1695 = vmatpush1.msra.mxu0 %v1495
    %1696 = vmatprep.subr.mxu0 0.0
    %1697 = vmatpush1.msra.mxu0 %v1505
    %1698 = vmatprep.subr.mxu0 0.0
    %1699 = vmatpush1.msra.mxu0 %v1515
    %1700 = vmatprep.subr.mxu0 0.0
    %1701 = vmatpush1.msra.mxu0 %v1525
    %1702 = vmatprep.subr.mxu0 0.0
    %1703 = vmatpush1.msra.mxu0 %v1535
    %1704 = vmatprep.subr.mxu0 0.0
    %1705 = vmatpush1.msra.mxu0 %v1540
    %1706 = vmatprep.subr.mxu0 0.0
    %1707 = vmatpush1.msra.mxu0 %v1550
    %1708 = vmatprep.subr.mxu0 0.0
    %1709 = vmatpush1.msra.mxu0 %v1560
    %1710 = vmatprep.subr.mxu0 0.0
    %1711 = vmatpush1.msra.mxu0 %v1570
    %1712 = vmatprep.subr.mxu0 0.0
    %1713 = vmatpush1.msra.mxu0 %v1580
    %1714 = vmatprep.subr.mxu0 0.0
    %1715 = vmatpush1.msra.mxu0 %v1590
    %1716 = vmatprep.subr.mxu0 0.0
    %1717 = vmatpush1.msra.mxu0 %v1600
    %1718 = vmatprep.subr.mxu0 0.0
    %1719 = vmatpush1.msra.mxu0 %v1610
    %1720 = vmatprep.subr.mxu0 0.0
    %1721 = vmatpush1.msra.mxu0 %v1620
    %1722 = vmatprep.subr.mxu0 0.0
    %1723 = vmatpush1.msra.mxu0 %v1630
    %1724 = vmatprep.subr.mxu0 0.0
    %1725 = vmatpush1.msra.mxu0 %v1640
    %1726 = vmatprep.subr.mxu0 0.0
    %1727 = vmatpush1.msra.mxu0 %v1650
    %1728 = vmatprep.subr.mxu0 0.0
    %1729 = vmatpush1.msra.mxu0 %v1660
    %1730 = vmatprep.subr.mxu0 0.0
    %1731 = vmatpush1.msra.mxu0 %v1670
    %1732 = vmatprep.subr.mxu0 0.0
    %1733 = vmatpush1.msra.mxu0 0.0
    %1734 = vmatprep.subr.mxu0 0.0
    %1735 = vmatpush1.msra.mxu0 0.0
    %1736 = vmatprep.subr.mxu0 0.0
    %1737 = vmatpush1.msra.mxu0 0.0
    %1738 = vmatprep.subr.mxu0 0.0
    %1739 = vmatpush1.msra.mxu0 0.0
    %1740 = vmatprep.subr.mxu0 0.0
    %1741 = vmatpush1.msra.mxu0 0.0
    %1742 = vmatprep.mubr.f32.mxu0 %v1673
    %1743 = vmatmul.mubr.f32.gmra.mrb[0].mxu0 %v1371
    %v1744 = vpop.f32.mrb[0].mxu0
    %v1745 = vadd.f32 0.0, %v1744
    %v1746 = vpop.f32.mrb[0].mxu0
    %1747 = vmatprep.mubr.f32.mxu0 %v1676
    %1748 = vmatmul.mubr.f32.gmra.mrb[0].mxu0 %v1373
    %v1749 = vpop.f32.mrb[0].mxu0
    %v1750 = vadd.f32 0.0, %v1749
    %v1751 = vpop.f32.mrb[0].mxu0
    %1752 = vdwg.mxu0
    %v1753 = vld [vmem:[#allocation2] sm:$0xff]
    %v1754 = vld [vmem:[#allocation2 + $0x8] sm:$0xff]
    %v1755 = vld [vmem:[#allocation2 + $0x10] sm:$0xff]
    %v1756 = vadd.f32 %v1753, %v1745
    %v1757 = vsub.f32 0.0, %v1756
    %v1758 = vmul.f32 %v1757, 1.442695
    %v1759 = vpow.pop %v1758
    %v1760 = vadd.f32 %v1759, 1.0
    %v1761 = vrcp.pop %v1760
    %v1762 = vadd.f32 %v1754, %v1750
    %v1763 = vsub.f32 0.0, %v1762
    %v1764 = vmul.f32 %v1763, 1.442695
    %v1765 = vpow.pop %v1764
    %v1766 = vadd.f32 %v1765, 1.0
    %v1767 = vrcp.pop %v1766
    %v1768 = vmul.f32 %v1767, %v1404
    %1770 = vrot.lane.b32.xlu0 %v1768, 21
    %v1771 = vpop.permute.xlu0 %1770
    %v1773 = vsel %vm1409, 0.0, %v1771
    %v1774 = vmul.f32 %v1414, %v1773
    %1775 = vrot.lane.b32.xlu0 %v1768, 20
    %v1776 = vpop.permute.xlu0 %1775
    %v1778 = vsel %vm1419, 0.0, %v1776
    %v1779 = vmul.f32 %v1424, %v1778
    %1780 = vrot.lane.b32.xlu0 %v1768, 19
    %v1781 = vpop.permute.xlu0 %1780
    %v1783 = vsel %vm1429, 0.0, %v1781
    %v1784 = vmul.f32 %v1434, %v1783
    %1785 = vrot.lane.b32.xlu0 %v1768, 17
    %v1786 = vpop.permute.xlu0 %1785
    %v1788 = vsel %vm1439, 0.0, %v1786
    %v1789 = vmul.f32 %v1444, %v1788
    %1790 = vrot.lane.b32.xlu0 %v1768, 16
    %v1791 = vpop.permute.xlu0 %1790
    %v1793 = vsel %vm1449, 0.0, %v1791
    %v1794 = vmul.f32 %v1454, %v1793
    %1795 = vrot.lane.b32.xlu0 %v1768, 15
    %v1796 = vpop.permute.xlu0 %1795
    %v1798 = vsel %vm1459, 0.0, %v1796
    %v1799 = vmul.f32 %v1464, %v1798
    %1800 = vrot.lane.b32.xlu0 %v1768, 13
    %v1801 = vpop.permute.xlu0 %1800
    %v1803 = vsel %vm1469, 0.0, %v1801
    %v1804 = vmul.f32 %v1474, %v1803
    %1805 = vrot.lane.b32.xlu0 %v1768, 12
    %v1806 = vpop.permute.xlu0 %1805
    %v1808 = vsel %vm1479, 0.0, %v1806
    %v1809 = vmul.f32 %v1484, %v1808
    %1810 = vrot.lane.b32.xlu0 %v1768, 11
    %v1811 = vpop.permute.xlu0 %1810
    %v1813 = vsel %vm1489, 0.0, %v1811
    %v1814 = vmul.f32 %v1494, %v1813
    %1815 = vrot.lane.b32.xlu0 %v1768, 5
    %v1816 = vpop.permute.xlu0 %1815
    %v1818 = vsel %vm1499, 0.0, %v1816
    %v1819 = vmul.f32 %v1504, %v1818
    %1820 = vrot.lane.b32.xlu0 %v1768, 4
    %v1821 = vpop.permute.xlu0 %1820
    %v1823 = vsel %vm1509, 0.0, %v1821
    %v1824 = vmul.f32 %v1514, %v1823
    %1825 = vrot.lane.b32.xlu0 %v1768, 3
    %v1826 = vpop.permute.xlu0 %1825
    %v1828 = vsel %vm1519, 0.0, %v1826
    %v1829 = vmul.f32 %v1524, %v1828
    %1830 = vrot.lane.b32.xlu0 %v1768, 1
    %v1831 = vpop.permute.xlu0 %1830
    %v1833 = vsel %vm1529, 0.0, %v1831
    %v1834 = vmul.f32 %v1534, %v1833
    %v1835 = vmul.f32 %v1539, %v1768
    %1836 = vrot.lane.b32.xlu0 %v1768, 127
    %v1837 = vpop.permute.xlu0 %1836
    %v1839 = vsel %vm1544, %v1837, 0.0
    %v1840 = vmul.f32 %v1549, %v1839
    %1841 = vrot.lane.b32.xlu0 %v1768, 125
    %v1842 = vpop.permute.xlu0 %1841
    %v1844 = vsel %vm1554, %v1842, 0.0
    %v1845 = vmul.f32 %v1559, %v1844
    %1846 = vrot.lane.b32.xlu0 %v1768, 124
    %v1847 = vpop.permute.xlu0 %1846
    %v1849 = vsel %vm1564, %v1847, 0.0
    %v1850 = vmul.f32 %v1569, %v1849
    %1851 = vrot.lane.b32.xlu0 %v1768, 123
    %v1852 = vpop.permute.xlu0 %1851
    %v1854 = vsel %vm1574, %v1852, 0.0
    %v1855 = vmul.f32 %v1579, %v1854
    %1856 = vrot.lane.b32.xlu0 %v1768, 117
    %v1857 = vpop.permute.xlu0 %1856
    %v1859 = vsel %vm1584, %v1857, 0.0
    %v1860 = vmul.f32 %v1589, %v1859
    %1861 = vrot.lane.b32.xlu0 %v1768, 116
    %v1862 = vpop.permute.xlu0 %1861
    %v1864 = vsel %vm1594, %v1862, 0.0
    %v1865 = vmul.f32 %v1599, %v1864
    %1866 = vrot.lane.b32.xlu0 %v1768, 115
    %v1867 = vpop.permute.xlu0 %1866
    %v1869 = vsel %vm1604, %v1867, 0.0
    %v1870 = vmul.f32 %v1609, %v1869
    %1871 = vrot.lane.b32.xlu0 %v1768, 113
    %v1872 = vpop.permute.xlu0 %1871
    %v1874 = vsel %vm1614, %v1872, 0.0
    %v1875 = vmul.f32 %v1619, %v1874
    %1876 = vrot.lane.b32.xlu0 %v1768, 112
    %v1877 = vpop.permute.xlu0 %1876
    %v1879 = vsel %vm1624, %v1877, 0.0
    %v1880 = vmul.f32 %v1629, %v1879
    %1881 = vrot.lane.b32.xlu0 %v1768, 111
    %v1882 = vpop.permute.xlu0 %1881
    %v1884 = vsel %vm1634, %v1882, 0.0
    %v1885 = vmul.f32 %v1639, %v1884
    %1886 = vrot.lane.b32.xlu0 %v1768, 109
    %v1887 = vpop.permute.xlu0 %1886
    %v1889 = vsel %vm1644, %v1887, 0.0
    %v1890 = vmul.f32 %v1649, %v1889
    %1891 = vrot.lane.b32.xlu0 %v1768, 108
    %v1892 = vpop.permute.xlu0 %1891
    %v1894 = vsel %vm1654, %v1892, 0.0
    %v1895 = vmul.f32 %v1659, %v1894
    %1896 = vrot.lane.b32.xlu0 %v1768, 107
    %v1897 = vpop.permute.xlu0 %1896
    %v1899 = vsel %vm1664, %v1897, 0.0
    %v1900 = vmul.f32 %v1669, %v1899
    %v1902 = vsel %vm1671, %v1376, 0
    %1904 = vmatprep.subr.mxu0 0.0
    %1905 = vmatpush1.msra.mxu0 %v1774
    %1906 = vmatprep.subr.mxu0 0.0
    %1907 = vmatpush1.msra.mxu0 %v1779
    %1908 = vmatprep.subr.mxu0 0.0
    %1909 = vmatpush1.msra.mxu0 %v1784
    %1910 = vmatprep.subr.mxu0 0.0
    %1911 = vmatpush1.msra.mxu0 %v1789
    %1912 = vmatprep.subr.mxu0 0.0
    %1913 = vmatpush1.msra.mxu0 %v1794
    %1914 = vmatprep.subr.mxu0 0.0
    %1915 = vmatpush1.msra.mxu0 %v1799
    %1916 = vmatprep.subr.mxu0 0.0
    %1917 = vmatpush1.msra.mxu0 %v1804
    %1918 = vmatprep.subr.mxu0 0.0
    %1919 = vmatpush1.msra.mxu0 %v1809
    %1920 = vmatprep.subr.mxu0 0.0
    %1921 = vmatpush1.msra.mxu0 %v1814
    %1922 = vmatprep.subr.mxu0 0.0
    %1923 = vmatpush1.msra.mxu0 %v1819
    %1924 = vmatprep.subr.mxu0 0.0
    %1925 = vmatpush1.msra.mxu0 %v1824
    %1926 = vmatprep.subr.mxu0 0.0
    %1927 = vmatpush1.msra.mxu0 %v1829
    %1928 = vmatprep.subr.mxu0 0.0
    %1929 = vmatpush1.msra.mxu0 %v1834
    %1930 = vmatprep.subr.mxu0 0.0
    %1931 = vmatpush1.msra.mxu0 %v1835
    %1932 = vmatprep.subr.mxu0 0.0
    %1933 = vmatpush1.msra.mxu0 %v1840
    %1934 = vmatprep.subr.mxu0 0.0
    %1935 = vmatpush1.msra.mxu0 %v1845
    %1936 = vmatprep.subr.mxu0 0.0
    %1937 = vmatpush1.msra.mxu0 %v1850
    %1938 = vmatprep.subr.mxu0 0.0
    %1939 = vmatpush1.msra.mxu0 %v1855
    %1940 = vmatprep.subr.mxu0 0.0
    %1941 = vmatpush1.msra.mxu0 %v1860
    %1942 = vmatprep.subr.mxu0 0.0
    %1943 = vmatpush1.msra.mxu0 %v1865
    %1944 = vmatprep.subr.mxu0 0.0
    %1945 = vmatpush1.msra.mxu0 %v1870
    %1946 = vmatprep.subr.mxu0 0.0
    %1947 = vmatpush1.msra.mxu0 %v1875
    %1948 = vmatprep.subr.mxu0 0.0
    %1949 = vmatpush1.msra.mxu0 %v1880
    %1950 = vmatprep.subr.mxu0 0.0
    %1951 = vmatpush1.msra.mxu0 %v1885
    %1952 = vmatprep.subr.mxu0 0.0
    %1953 = vmatpush1.msra.mxu0 %v1890
    %1954 = vmatprep.subr.mxu0 0.0
    %1955 = vmatpush1.msra.mxu0 %v1895
    %1956 = vmatprep.subr.mxu0 0.0
    %1957 = vmatpush1.msra.mxu0 %v1900
    %1958 = vmatprep.subr.mxu0 0.0
    %1959 = vmatpush1.msra.mxu0 0.0
    %1960 = vmatprep.subr.mxu0 0.0
    %1961 = vmatpush1.msra.mxu0 0.0
    %1962 = vmatprep.subr.mxu0 0.0
    %1963 = vmatpush1.msra.mxu0 0.0
    %1964 = vmatprep.subr.mxu0 0.0
    %1965 = vmatpush1.msra.mxu0 0.0
    %1966 = vmatprep.subr.mxu0 0.0
    %1967 = vmatpush1.msra.mxu0 0.0
    %1968 = vmatprep.mubr.f32.mxu0 %v1902
    %1969 = vmatmul.mubr.f32.gmra.mrb[0].mxu0 %v1375
    %v1970 = vpop.f32.mrb[0].mxu0
    %v1971 = vadd.f32 0.0, %v1970
    %v1972 = vpop.f32.mrb[0].mxu0
    %1973 = vdwg.mxu0
    %v1974 = vadd.f32 %v1755, %v1971
    %v1975 = vtanh.pop %v1974
    %v1976 = vmul.f32 %v1761, %v1404
    %v1977 = vsub.f32 1.0, %v1761
    %v1978 = vmul.f32 %v1977, %v1975
    %v1979 = vadd.f32 %v1976, %v1978
    %1980 = vst [vmem:[%s11] sm:$0xff] %v1979
    %1981 = vst [vmem:[%s12] sm:$0xff] %v1761
    %s1982 = scalar_lea.vmem %s9, 8
    %v1983 = vld [vmem:[%s1982] sm:$0xff]
    %1985 = vrot.lane.b32.xlu0 %v1983, 21
    %v1986 = vpop.permute.xlu0 %1985
    %v1988 = vsel %vm1409, 0.0, %v1986
    %v1989 = vmul.f32 %v1414, %v1988
    %1990 = vrot.lane.b32.xlu0 %v1983, 20
    %v1991 = vpop.permute.xlu0 %1990
    %v1993 = vsel %vm1419, 0.0, %v1991
    %v1994 = vmul.f32 %v1424, %v1993
    %1995 = vrot.lane.b32.xlu0 %v1983, 19
    %v1996 = vpop.permute.xlu0 %1995
    %v1998 = vsel %vm1429, 0.0, %v1996
    %v1999 = vmul.f32 %v1434, %v1998
    %2000 = vrot.lane.b32.xlu0 %v1983, 17
    %v2001 = vpop.permute.xlu0 %2000
    %v2003 = vsel %vm1439, 0.0, %v2001
    %v2004 = vmul.f32 %v1444, %v2003
    %2005 = vrot.lane.b32.xlu0 %v1983, 16
    %v2006 = vpop.permute.xlu0 %2005
    %v2008 = vsel %vm1449, 0.0, %v2006
    %v2009 = vmul.f32 %v1454, %v2008
    %2010 = vrot.lane.b32.xlu0 %v1983, 15
    %v2011 = vpop.permute.xlu0 %2010
    %v2013 = vsel %vm1459, 0.0, %v2011
    %v2014 = vmul.f32 %v1464, %v2013
    %2015 = vrot.lane.b32.xlu0 %v1983, 13
    %v2016 = vpop.permute.xlu0 %2015
    %v2018 = vsel %vm1469, 0.0, %v2016
    %v2019 = vmul.f32 %v1474, %v2018
    %2020 = vrot.lane.b32.xlu0 %v1983, 12
    %v2021 = vpop.permute.xlu0 %2020
    %v2023 = vsel %vm1479, 0.0, %v2021
    %v2024 = vmul.f32 %v1484, %v2023
    %2025 = vrot.lane.b32.xlu0 %v1983, 11
    %v2026 = vpop.permute.xlu0 %2025
    %v2028 = vsel %vm1489, 0.0, %v2026
    %v2029 = vmul.f32 %v1494, %v2028
    %2030 = vrot.lane.b32.xlu0 %v1983, 5
    %v2031 = vpop.permute.xlu0 %2030
    %v2033 = vsel %vm1499, 0.0, %v2031
    %v2034 = vmul.f32 %v1504, %v2033
    %2035 = vrot.lane.b32.xlu0 %v1983, 4
    %v2036 = vpop.permute.xlu0 %2035
    %v2038 = vsel %vm1509, 0.0, %v2036
    %v2039 = vmul.f32 %v1514, %v2038
    %2040 = vrot.lane.b32.xlu0 %v1983, 3
    %v2041 = vpop.permute.xlu0 %2040
    %v2043 = vsel %vm1519, 0.0, %v2041
    %v2044 = vmul.f32 %v1524, %v2043
    %2045 = vrot.lane.b32.xlu0 %v1983, 1
    %v2046 = vpop.permute.xlu0 %2045
    %v2048 = vsel %vm1529, 0.0, %v2046
    %v2049 = vmul.f32 %v1534, %v2048
    %v2050 = vmul.f32 %v1539, %v1983
    %2051 = vrot.lane.b32.xlu0 %v1983, 127
    %v2052 = vpop.permute.xlu0 %2051
    %v2054 = vsel %vm1544, %v2052, 0.0
    %v2055 = vmul.f32 %v1549, %v2054
    %2056 = vrot.lane.b32.xlu0 %v1983, 125
    %v2057 = vpop.permute.xlu0 %2056
    %v2059 = vsel %vm1554, %v2057, 0.0
    %v2060 = vmul.f32 %v1559, %v2059
    %2061 = vrot.lane.b32.xlu0 %v1983, 124
    %v2062 = vpop.permute.xlu0 %2061
    %v2064 = vsel %vm1564, %v2062, 0.0
    %v2065 = vmul.f32 %v1569, %v2064
    %2066 = vrot.lane.b32.xlu0 %v1983, 123
    %v2067 = vpop.permute.xlu0 %2066
    %v2069 = vsel %vm1574, %v2067, 0.0
    %v2070 = vmul.f32 %v1579, %v2069
    %2071 = vrot.lane.b32.xlu0 %v1983, 117
    %v2072 = vpop.permute.xlu0 %2071
    %v2074 = vsel %vm1584, %v2072, 0.0
    %v2075 = vmul.f32 %v1589, %v2074
    %2076 = vrot.lane.b32.xlu0 %v1983, 116
    %v2077 = vpop.permute.xlu0 %2076
    %v2079 = vsel %vm1594, %v2077, 0.0
    %v2080 = vmul.f32 %v1599, %v2079
    %2081 = vrot.lane.b32.xlu0 %v1983, 115
    %v2082 = vpop.permute.xlu0 %2081
    %v2084 = vsel %vm1604, %v2082, 0.0
    %v2085 = vmul.f32 %v1609, %v2084
    %2086 = vrot.lane.b32.xlu0 %v1983, 113
    %v2087 = vpop.permute.xlu0 %2086
    %v2089 = vsel %vm1614, %v2087, 0.0
    %v2090 = vmul.f32 %v1619, %v2089
    %2091 = vrot.lane.b32.xlu0 %v1983, 112
    %v2092 = vpop.permute.xlu0 %2091
    %v2094 = vsel %vm1624, %v2092, 0.0
    %v2095 = vmul.f32 %v1629, %v2094
    %2096 = vrot.lane.b32.xlu0 %v1983, 111
    %v2097 = vpop.permute.xlu0 %2096
    %v2099 = vsel %vm1634, %v2097, 0.0
    %v2100 = vmul.f32 %v1639, %v2099
    %2101 = vrot.lane.b32.xlu0 %v1983, 109
    %v2102 = vpop.permute.xlu0 %2101
    %v2104 = vsel %vm1644, %v2102, 0.0
    %v2105 = vmul.f32 %v1649, %v2104
    %2106 = vrot.lane.b32.xlu0 %v1983, 108
    %v2107 = vpop.permute.xlu0 %2106
    %v2109 = vsel %vm1654, %v2107, 0.0
    %v2110 = vmul.f32 %v1659, %v2109
    %2111 = vrot.lane.b32.xlu0 %v1983, 107
    %v2112 = vpop.permute.xlu0 %2111
    %v2114 = vsel %vm1664, %v2112, 0.0
    %v2115 = vmul.f32 %v1669, %v2114
    %2116 = vmatprep.subr.mxu0 0.0
    %2117 = vmatpush1.msra.mxu0 %v1989
    %2118 = vmatprep.subr.mxu0 0.0
    %2119 = vmatpush1.msra.mxu0 %v1994
    %2120 = vmatprep.subr.mxu0 0.0
    %2121 = vmatpush1.msra.mxu0 %v1999
    %2122 = vmatprep.subr.mxu0 0.0
    %2123 = vmatpush1.msra.mxu0 %v2004
    %2124 = vmatprep.subr.mxu0 0.0
    %2125 = vmatpush1.msra.mxu0 %v2009
    %2126 = vmatprep.subr.mxu0 0.0
    %2127 = vmatpush1.msra.mxu0 %v2014
    %2128 = vmatprep.subr.mxu0 0.0
    %2129 = vmatpush1.msra.mxu0 %v2019
    %2130 = vmatprep.subr.mxu0 0.0
    %2131 = vmatpush1.msra.mxu0 %v2024
    %2132 = vmatprep.subr.mxu0 0.0
    %2133 = vmatpush1.msra.mxu0 %v2029
    %2134 = vmatprep.subr.mxu0 0.0
    %2135 = vmatpush1.msra.mxu0 %v2034
    %2136 = vmatprep.subr.mxu0 0.0
    %2137 = vmatpush1.msra.mxu0 %v2039
    %2138 = vmatprep.subr.mxu0 0.0
    %2139 = vmatpush1.msra.mxu0 %v2044
    %2140 = vmatprep.subr.mxu0 0.0
    %2141 = vmatpush1.msra.mxu0 %v2049
    %2142 = vmatprep.subr.mxu0 0.0
    %2143 = vmatpush1.msra.mxu0 %v2050
    %2144 = vmatprep.subr.mxu0 0.0
    %2145 = vmatpush1.msra.mxu0 %v2055
    %2146 = vmatprep.subr.mxu0 0.0
    %2147 = vmatpush1.msra.mxu0 %v2060
    %2148 = vmatprep.subr.mxu0 0.0
    %2149 = vmatpush1.msra.mxu0 %v2065
    %2150 = vmatprep.subr.mxu0 0.0
    %2151 = vmatpush1.msra.mxu0 %v2070
    %2152 = vmatprep.subr.mxu0 0.0
    %2153 = vmatpush1.msra.mxu0 %v2075
    %2154 = vmatprep.subr.mxu0 0.0
    %2155 = vmatpush1.msra.mxu0 %v2080
    %2156 = vmatprep.subr.mxu0 0.0
    %2157 = vmatpush1.msra.mxu0 %v2085
    %2158 = vmatprep.subr.mxu0 0.0
    %2159 = vmatpush1.msra.mxu0 %v2090
    %2160 = vmatprep.subr.mxu0 0.0
    %2161 = vmatpush1.msra.mxu0 %v2095
    %2162 = vmatprep.subr.mxu0 0.0
    %2163 = vmatpush1.msra.mxu0 %v2100
    %2164 = vmatprep.subr.mxu0 0.0
    %2165 = vmatpush1.msra.mxu0 %v2105
    %2166 = vmatprep.subr.mxu0 0.0
    %2167 = vmatpush1.msra.mxu0 %v2110
    %2168 = vmatprep.subr.mxu0 0.0
    %2169 = vmatpush1.msra.mxu0 %v2115
    %2170 = vmatprep.subr.mxu0 0.0
    %2171 = vmatpush1.msra.mxu0 0.0
    %2172 = vmatprep.subr.mxu0 0.0
    %2173 = vmatpush1.msra.mxu0 0.0
    %2174 = vmatprep.subr.mxu0 0.0
    %2175 = vmatpush1.msra.mxu0 0.0
    %2176 = vmatprep.subr.mxu0 0.0
    %2177 = vmatpush1.msra.mxu0 0.0
    %2178 = vmatprep.subr.mxu0 0.0
    %2179 = vmatpush1.msra.mxu0 0.0
    %2180 = vmatprep.mubr.f32.mxu0 %v1673
    %2181 = vmatmul.mubr.f32.gmra.mrb[0].mxu0 %v1371
    %v2182 = vpop.f32.mrb[0].mxu0
    %v2183 = vadd.f32 0.0, %v2182
    %v2184 = vpop.f32.mrb[0].mxu0
    %2185 = vmatprep.mubr.f32.mxu0 %v1676
    %2186 = vmatmul.mubr.f32.gmra.mrb[0].mxu0 %v1373
    %v2187 = vpop.f32.mrb[0].mxu0
    %v2188 = vadd.f32 0.0, %v2187
    %v2189 = vpop.f32.mrb[0].mxu0
    %2190 = vdwg.mxu0
    %v2191 = vld [vmem:[%s1346] sm:$0xff]
    %v2192 = vld [vmem:[%s1346 + $0x8] sm:$0xff]
    %v2193 = vld [vmem:[%s1346 + $0x10] sm:$0xff]
    %v2194 = vadd.f32 %v2191, %v2183
    %v2195 = vsub.f32 0.0, %v2194
    %v2196 = vmul.f32 %v2195, 1.442695
    %v2197 = vpow.pop %v2196
    %v2198 = vadd.f32 %v2197, 1.0
    %v2199 = vrcp.pop %v2198
    %v2200 = vadd.f32 %v2192, %v2188
    %v2201 = vsub.f32 0.0, %v2200
    %v2202 = vmul.f32 %v2201, 1.442695
    %v2203 = vpow.pop %v2202
    %v2204 = vadd.f32 %v2203, 1.0
    %v2205 = vrcp.pop %v2204
    %v2206 = vmul.f32 %v2205, %v1983
    %2208 = vrot.lane.b32.xlu0 %v2206, 21
    %v2209 = vpop.permute.xlu0 %2208
    %v2211 = vsel %vm1409, 0.0, %v2209
    %v2212 = vmul.f32 %v1414, %v2211
    %2213 = vrot.lane.b32.xlu0 %v2206, 20
    %v2214 = vpop.permute.xlu0 %2213
    %v2216 = vsel %vm1419, 0.0, %v2214
    %v2217 = vmul.f32 %v1424, %v2216
    %2218 = vrot.lane.b32.xlu0 %v2206, 19
    %v2219 = vpop.permute.xlu0 %2218
    %v2221 = vsel %vm1429, 0.0, %v2219
    %v2222 = vmul.f32 %v1434, %v2221
    %2223 = vrot.lane.b32.xlu0 %v2206, 17
    %v2224 = vpop.permute.xlu0 %2223
    %v2226 = vsel %vm1439, 0.0, %v2224
    %v2227 = vmul.f32 %v1444, %v2226
    %2228 = vrot.lane.b32.xlu0 %v2206, 16
    %v2229 = vpop.permute.xlu0 %2228
    %v2231 = vsel %vm1449, 0.0, %v2229
    %v2232 = vmul.f32 %v1454, %v2231
    %2233 = vrot.lane.b32.xlu0 %v2206, 15
    %v2234 = vpop.permute.xlu0 %2233
    %v2236 = vsel %vm1459, 0.0, %v2234
    %v2237 = vmul.f32 %v1464, %v2236
    %2238 = vrot.lane.b32.xlu0 %v2206, 13
    %v2239 = vpop.permute.xlu0 %2238
    %v2241 = vsel %vm1469, 0.0, %v2239
    %v2242 = vmul.f32 %v1474, %v2241
    %2243 = vrot.lane.b32.xlu0 %v2206, 12
    %v2244 = vpop.permute.xlu0 %2243
    %v2246 = vsel %vm1479, 0.0, %v2244
    %v2247 = vmul.f32 %v1484, %v2246
    %2248 = vrot.lane.b32.xlu0 %v2206, 11
    %v2249 = vpop.permute.xlu0 %2248
    %v2251 = vsel %vm1489, 0.0, %v2249
    %v2252 = vmul.f32 %v1494, %v2251
    %2253 = vrot.lane.b32.xlu0 %v2206, 5
    %v2254 = vpop.permute.xlu0 %2253
    %v2256 = vsel %vm1499, 0.0, %v2254
    %v2257 = vmul.f32 %v1504, %v2256
    %2258 = vrot.lane.b32.xlu0 %v2206, 4
    %v2259 = vpop.permute.xlu0 %2258
    %v2261 = vsel %vm1509, 0.0, %v2259
    %v2262 = vmul.f32 %v1514, %v2261
    %2263 = vrot.lane.b32.xlu0 %v2206, 3
    %v2264 = vpop.permute.xlu0 %2263
    %v2266 = vsel %vm1519, 0.0, %v2264
    %v2267 = vmul.f32 %v1524, %v2266
    %2268 = vrot.lane.b32.xlu0 %v2206, 1
    %v2269 = vpop.permute.xlu0 %2268
    %v2271 = vsel %vm1529, 0.0, %v2269
    %v2272 = vmul.f32 %v1534, %v2271
    %v2273 = vmul.f32 %v1539, %v2206
    %2274 = vrot.lane.b32.xlu0 %v2206, 127
    %v2275 = vpop.permute.xlu0 %2274
    %v2277 = vsel %vm1544, %v2275, 0.0
    %v2278 = vmul.f32 %v1549, %v2277
    %2279 = vrot.lane.b32.xlu0 %v2206, 125
    %v2280 = vpop.permute.xlu0 %2279
    %v2282 = vsel %vm1554, %v2280, 0.0
    %v2283 = vmul.f32 %v1559, %v2282
    %2284 = vrot.lane.b32.xlu0 %v2206, 124
    %v2285 = vpop.permute.xlu0 %2284
    %v2287 = vsel %vm1564, %v2285, 0.0
    %v2288 = vmul.f32 %v1569, %v2287
    %2289 = vrot.lane.b32.xlu0 %v2206, 123
    %v2290 = vpop.permute.xlu0 %2289
    %v2292 = vsel %vm1574, %v2290, 0.0
    %v2293 = vmul.f32 %v1579, %v2292
    %2294 = vrot.lane.b32.xlu0 %v2206, 117
    %v2295 = vpop.permute.xlu0 %2294
    %v2297 = vsel %vm1584, %v2295, 0.0
    %v2298 = vmul.f32 %v1589, %v2297
    %2299 = vrot.lane.b32.xlu0 %v2206, 116
    %v2300 = vpop.permute.xlu0 %2299
    %v2302 = vsel %vm1594, %v2300, 0.0
    %v2303 = vmul.f32 %v1599, %v2302
    %2304 = vrot.lane.b32.xlu0 %v2206, 115
    %v2305 = vpop.permute.xlu0 %2304
    %v2307 = vsel %vm1604, %v2305, 0.0
    %v2308 = vmul.f32 %v1609, %v2307
    %2309 = vrot.lane.b32.xlu0 %v2206, 113
    %v2310 = vpop.permute.xlu0 %2309
    %v2312 = vsel %vm1614, %v2310, 0.0
    %v2313 = vmul.f32 %v1619, %v2312
    %2314 = vrot.lane.b32.xlu0 %v2206, 112
    %v2315 = vpop.permute.xlu0 %2314
    %v2317 = vsel %vm1624, %v2315, 0.0
    %v2318 = vmul.f32 %v1629, %v2317
    %2319 = vrot.lane.b32.xlu0 %v2206, 111
    %v2320 = vpop.permute.xlu0 %2319
    %v2322 = vsel %vm1634, %v2320, 0.0
    %v2323 = vmul.f32 %v1639, %v2322
    %2324 = vrot.lane.b32.xlu0 %v2206, 109
    %v2325 = vpop.permute.xlu0 %2324
    %v2327 = vsel %vm1644, %v2325, 0.0
    %v2328 = vmul.f32 %v1649, %v2327
    %2329 = vrot.lane.b32.xlu0 %v2206, 108
    %v2330 = vpop.permute.xlu0 %2329
    %v2332 = vsel %vm1654, %v2330, 0.0
    %v2333 = vmul.f32 %v1659, %v2332
    %2334 = vrot.lane.b32.xlu0 %v2206, 107
    %v2335 = vpop.permute.xlu0 %2334
    %v2337 = vsel %vm1664, %v2335, 0.0
    %v2338 = vmul.f32 %v1669, %v2337
    %2339 = vmatprep.subr.mxu0 0.0
    %2340 = vmatpush1.msra.mxu0 %v2212
    %2341 = vmatprep.subr.mxu0 0.0
    %2342 = vmatpush1.msra.mxu0 %v2217
    %2343 = vmatprep.subr.mxu0 0.0
    %2344 = vmatpush1.msra.mxu0 %v2222
    %2345 = vmatprep.subr.mxu0 0.0
    %2346 = vmatpush1.msra.mxu0 %v2227
    %2347 = vmatprep.subr.mxu0 0.0
    %2348 = vmatpush1.msra.mxu0 %v2232
    %2349 = vmatprep.subr.mxu0 0.0
    %2350 = vmatpush1.msra.mxu0 %v2237
    %2351 = vmatprep.subr.mxu0 0.0
    %2352 = vmatpush1.msra.mxu0 %v2242
    %2353 = vmatprep.subr.mxu0 0.0
    %2354 = vmatpush1.msra.mxu0 %v2247
    %2355 = vmatprep.subr.mxu0 0.0
    %2356 = vmatpush1.msra.mxu0 %v2252
    %2357 = vmatprep.subr.mxu0 0.0
    %2358 = vmatpush1.msra.mxu0 %v2257
    %2359 = vmatprep.subr.mxu0 0.0
    %2360 = vmatpush1.msra.mxu0 %v2262
    %2361 = vmatprep.subr.mxu0 0.0
    %2362 = vmatpush1.msra.mxu0 %v2267
    %2363 = vmatprep.subr.mxu0 0.0
    %2364 = vmatpush1.msra.mxu0 %v2272
    %2365 = vmatprep.subr.mxu0 0.0
    %2366 = vmatpush1.msra.mxu0 %v2273
    %2367 = vmatprep.subr.mxu0 0.0
    %2368 = vmatpush1.msra.mxu0 %v2278
    %2369 = vmatprep.subr.mxu0 0.0
    %2370 = vmatpush1.msra.mxu0 %v2283
    %2371 = vmatprep.subr.mxu0 0.0
    %2372 = vmatpush1.msra.mxu0 %v2288
    %2373 = vmatprep.subr.mxu0 0.0
    %2374 = vmatpush1.msra.mxu0 %v2293
    %2375 = vmatprep.subr.mxu0 0.0
    %2376 = vmatpush1.msra.mxu0 %v2298
    %2377 = vmatprep.subr.mxu0 0.0
    %2378 = vmatpush1.msra.mxu0 %v2303
    %2379 = vmatprep.subr.mxu0 0.0
    %2380 = vmatpush1.msra.mxu0 %v2308
    %2381 = vmatprep.subr.mxu0 0.0
    %2382 = vmatpush1.msra.mxu0 %v2313
    %2383 = vmatprep.subr.mxu0 0.0
    %2384 = vmatpush1.msra.mxu0 %v2318
    %2385 = vmatprep.subr.mxu0 0.0
    %2386 = vmatpush1.msra.mxu0 %v2323
    %2387 = vmatprep.subr.mxu0 0.0
    %2388 = vmatpush1.msra.mxu0 %v2328
    %2389 = vmatprep.subr.mxu0 0.0
    %2390 = vmatpush1.msra.mxu0 %v2333
    %2391 = vmatprep.subr.mxu0 0.0
    %2392 = vmatpush1.msra.mxu0 %v2338
    %2393 = vmatprep.subr.mxu0 0.0
    %2394 = vmatpush1.msra.mxu0 0.0
    %2395 = vmatprep.subr.mxu0 0.0
    %2396 = vmatpush1.msra.mxu0 0.0
    %2397 = vmatprep.subr.mxu0 0.0
    %2398 = vmatpush1.msra.mxu0 0.0
    %2399 = vmatprep.subr.mxu0 0.0
    %2400 = vmatpush1.msra.mxu0 0.0
    %2401 = vmatprep.subr.mxu0 0.0
    %2402 = vmatpush1.msra.mxu0 0.0
    %2403 = vmatprep.mubr.f32.mxu0 %v1902
    %2404 = vmatmul.mubr.f32.gmra.mrb[0].mxu0 %v1375
    %v2405 = vpop.f32.mrb[0].mxu0
    %v2406 = vadd.f32 0.0, %v2405
    %v2407 = vpop.f32.mrb[0].mxu0
    %2408 = vdwg.mxu0
    %v2409 = vadd.f32 %v2193, %v2406
    %v2410 = vtanh.pop %v2409
    %v2411 = vmul.f32 %v2199, %v1983
    %v2412 = vsub.f32 1.0, %v2199
    %v2413 = vmul.f32 %v2412, %v2410
    %v2414 = vadd.f32 %v2411, %v2413
    %s2415 = scalar_lea.vmem %s11, 8
    %2416 = vst [vmem:[%s2415] sm:$0xff] %v2414
    %s2417 = scalar_lea.vmem %s12, 8
    %2418 = vst [vmem:[%s2417] sm:$0xff] %v2199
    // Predicated region
    $region62: #{recurrent_layer_forward.1} parent=1 // pred_check
      _
    $region63: #{recurrent_layer_forward.1} parent=1 // pred_check_branch
      %2420 = sbr.rel (0) target = $region65
    $region64: #{recurrent_layer_forward.1} parent=1 // pred_region
      _
    $region65: #{recurrent_layer_forward.1} parent=1 // pred_fallthru
      _
    // Predicated region
    $region66: #{recurrent_layer_forward.1} parent=1 // pred_check
      _
    $region67: #{recurrent_layer_forward.1} parent=1 // pred_check_branch
      %2422 = sbr.rel (0) target = $region69
    $region68: #{recurrent_layer_forward.1} parent=1 // pred_region
      _
    $region69: #{recurrent_layer_forward.1} parent=1 // pred_fallthru
      _
    // Predicated region
    $region70: #{recurrent_layer_forward.1} parent=1 // pred_check
      _
    $region71: #{recurrent_layer_forward.1} parent=1 // pred_check_branch
      %2424 = sbr.rel (0) target = $region73
    $region72: #{recurrent_layer_forward.1} parent=1 // pred_region
      _
    $region73: #{recurrent_layer_forward.1} parent=1 // pred_fallthru
      _
    // Predicated region
    $region74: #{recurrent_layer_forward.1} parent=1 // pred_check
      _
    $region75: #{recurrent_layer_forward.1} parent=1 // pred_check_branch
      %2426 = sbr.rel (0) target = $region77
    $region76: #{recurrent_layer_forward.1} parent=1 // pred_region
      _
    $region77: #{recurrent_layer_forward.1} parent=1 // pred_fallthru
      _
    %2427 = vsyncpa [#allocation6], 1
    %2428 = vsyncpa [#allocation8], 1
    %2429 = vsyncpa [#allocation11], 1

</llo_original>
